<compile_context>
chip_gen: v7x
topology: tpu7x:2x2x1
jax: 0.10.0
libtpu: 0.0.40
codegen_flags: <defaults>
</compile_context>

<pallas_src>
import math

import jax
import jax.numpy as jnp
import numpy as np
from jax.experimental import pallas as pl
from jax.experimental.pallas import tpu as pltpu


# ----------------------------------------------------------------------------
# The single fused kernel: everything in VMEM, ~40 small MXU matmuls, no DMA
# beyond the automatic operand/result copies.
# ----------------------------------------------------------------------------
def _encoder_kernel(x_ref,
                    r1_ref, m1_ref, b1_ref,
                    r2_ref, m2_ref, b2_ref,
                    r3_ref, m3_ref, b3_ref,
                    s4_ref, p4_ref, b4_ref,
                    wmu_ref, bmu_ref, wlv_ref, blv_ref,
                    eps_ref,
                    mu_ref, logvar_ref, z_ref, std_ref):
    def gathered_matmul(h_bf16, r_ref, m_ref, b_ref):
        """relu( sum_k (R_k @ H) @ M_k + b ), f32 accumulation and epilogue."""
        taps = r_ref.shape[0]
        acc = None
        for k in range(taps):                      # static unroll (taps = 5 or 4)
            g = jnp.dot(r_ref[k], h_bf16,
                        preferred_element_type=jnp.float32)   # exact 0/1 gather
            t = jnp.dot(g.astype(jnp.bfloat16), m_ref[k],
                        preferred_element_type=jnp.float32)
            acc = t if acc is None else acc + t
        return jnp.maximum(acc + b_ref[...], 0.0)

    h = x_ref[...].astype(jnp.bfloat16)                                   # (B*32, 32)
    h = gathered_matmul(h, r1_ref, m1_ref, b1_ref).astype(jnp.bfloat16)   # (B*16, 16*16)
    h = gathered_matmul(h, r2_ref, m2_ref, b2_ref).astype(jnp.bfloat16)   # (B*8,  8*32)
    h = gathered_matmul(h, r3_ref, m3_ref, b3_ref).astype(jnp.bfloat16)   # (B*4,  4*32)
    h = gathered_matmul(h, s4_ref, p4_ref, b4_ref).astype(jnp.bfloat16)   # (B, 256)

    # Two independent heads -> no sub-lane slicing of a (B, 2L) result.
    mu = jnp.dot(h, wmu_ref[...], preferred_element_type=jnp.float32) + bmu_ref[...]
    log_var = jnp.dot(h, wlv_ref[...], preferred_element_type=jnp.float32) + blv_ref[...]
    std = jnp.exp(0.5 * log_var)                   # EUP; f32 epilogue

    mu_ref[...] = mu
    logvar_ref[...] = log_var
    std_ref[...] = std
    # Normal(mu, std).rsample([K]) with externally supplied standard-normal eps.
    z_ref[...] = mu[None] + std[None] * eps_ref[...]


# ----------------------------------------------------------------------------
# Public wrapper: one pallas_call, the only JAX glue is a free reshape of x.
# ----------------------------------------------------------------------------
def encoder_forward(prep, x, eps):
    """x: (B, 1, 32, 32) NCHW f32;  eps: (K, B, L) standard-normal noise."""
    B = x.shape[0]
    K = eps.shape[0]
    L = prep["wmu"].shape[1]
    x2d = x.reshape(B * 32, 32)   # (B*H, W*Cin) with Cin = 1; pure reshape

    vmem = pl.BlockSpec(memory_space=pltpu.MemorySpace.VMEM)
    out_shape = (jax.ShapeDtypeStruct((B, L), jnp.float32),     # mu
                 jax.ShapeDtypeStruct((B, L), jnp.float32),     # log_var
                 jax.ShapeDtypeStruct((K, B, L), jnp.float32),  # z
                 jax.ShapeDtypeStruct((B, L), jnp.float32))     # std
    mu, log_var, z, std = pl.pallas_call(
        _encoder_kernel,
        out_shape=out_shape,
        in_specs=[vmem] * 18,
        out_specs=(vmem, vmem, vmem, vmem),
    )(x2d,
      prep["r1"], prep["m1"], prep["b1"],
      prep["r2"], prep["m2"], prep["b2"],
      prep["r3"], prep["m3"], prep["b3"],
      prep["s4"], prep["p4"], prep["b4"],
      prep["wmu"], prep["bmu"], prep["wlv"], prep["blv"],
      eps)
    dist_params = (mu, std)   # parameters of torch.distributions.Normal(mu, std)
    return mu, log_var, z, dist_params


# ----------------------------------------------------------------------------
# One-time host-side folding of torch-layout weights into kernel operands.
# ----------------------------------------------------------------------------
def _conv_stage_operands(w, b, H, W, batch):
    """Fold a 5x5 / stride-2 / pad-2 conv into row-gather + dense-matmul operands."""
    w = np.asarray(w, np.float32)           # (Cout, Cin, 5, 5) torch layout
    b = np.asarray(b, np.float32)
    Cout, Cin, KH, KW = w.shape
    OH = (H + 4 - KH) // 2 + 1
    OW = (W + 4 - KW) // 2 + 1
    R = np.zeros((KH, batch * OH, batch * H), np.float32)
    for kh in range(KH):
        for bb in range(batch):
            for oh in range(OH):
                h = 2 * oh + kh - 2          # input row; padding rows are just omitted
                if 0 <= h < H:
                    R[kh, bb * OH + oh, bb * H + h] = 1.0
    M = np.zeros((KH, W * Cin, OW * Cout), np.float32)
    for kh in range(KH):
        for ow in range(OW):
            for kw in range(KW):
                wi = 2 * ow + kw - 2         # input col; padding cols omitted
                if 0 <= wi < W:
                    M[kh, wi * Cin:(wi + 1) * Cin,
                      ow * Cout:(ow + 1) * Cout] = w[:, :, kh, kw].T
    bias = np.tile(b, OW)[None, :]           # bias[0, ow*Cout + co] = b[co]
    return R, M, bias


def _fc1_operands(w, b, batch, C=32, Hf=4, Wf=4):
    """Fold NCHW .view(-1, 512) + Linear(512, 256) into a 4-tap gathered matmul."""
    w = np.asarray(w, np.float32)            # torch layout (256, 512)
    b = np.asarray(b, np.float32)
    N = w.shape[0]
    wt = w.T                                 # (512, N), row index = c*Hf*Wf + h*Wf + w
    S = np.zeros((Hf, batch, batch * Hf), np.float32)
    for j in range(Hf):
        for bb in range(batch):
            S[j, bb, bb * Hf + j] = 1.0
    P = np.zeros((Hf, Wf * C, N), np.float32)
    for j in range(Hf):
        for ww in range(Wf):
            for cc in range(C):
                P[j, ww * C + cc, :] = wt[cc * Hf * Wf + j * Wf + ww, :]
    return S, P, b[None, :]


def prepare_params(params, batch):
    r1, m1, b1 = _conv_stage_operands(params["c1_w"], params["c1_b"], 32, 32, batch)
    r2, m2, b2 = _conv_stage_operands(params["c2_w"], params["c2_b"], 16, 16, batch)
    r3, m3, b3 = _conv_stage_operands(params["c3_w"], params["c3_b"], 8, 8, batch)
    s4, p4, b4 = _fc1_operands(params["l1_w"], params["l1_b"], batch)
    w2 = np.asarray(params["l2_w"], np.float32)      # (2L, 256)
    b2v = np.asarray(params["l2_b"], np.float32)
    L = w2.shape[0] // 2
    bf16 = lambda a: jnp.asarray(a, jnp.bfloat16)
    f32 = lambda a: jnp.asarray(a, jnp.float32)
    return {
        "r1": bf16(r1), "m1": bf16(m1), "b1": f32(b1),
        "r2": bf16(r2), "m2": bf16(m2), "b2": f32(b2),
        "r3": bf16(r3), "m3": bf16(m3), "b3": f32(b3),
        "s4": bf16(s4), "p4": bf16(p4), "b4": f32(b4),
        "wmu": bf16(w2[:L].T), "bmu": f32(b2v[:L][None, :]),
        "wlv": bf16(w2[L:].T), "blv": f32(b2v[L:][None, :]),
    }


# ----------------------------------------------------------------------------
# Torch-layout parameter init and a pure-JAX reference for validation.
# ----------------------------------------------------------------------------
def init_params(key, latent_dim):
    ks = jax.random.split(key, 10)

    def conv_w(k, cout, cin, ksz):
        fan_in = cin * ksz * ksz
        return jax.random.normal(k, (cout, cin, ksz, ksz), jnp.float32) / math.sqrt(fan_in)

    def lin_w(k, dout, din):
        return jax.random.normal(k, (dout, din), jnp.float32) / math.sqrt(din)

    return {
        "c1_w": conv_w(ks[0], 16, 1, 5),  "c1_b": 0.01 * jax.random.normal(ks[1], (16,)),
        "c2_w": conv_w(ks[2], 32, 16, 5), "c2_b": 0.01 * jax.random.normal(ks[3], (32,)),
        "c3_w": conv_w(ks[4], 32, 32, 5), "c3_b": 0.01 * jax.random.normal(ks[5], (32,)),
        "l1_w": lin_w(ks[6], 256, 512),   "l1_b": 0.01 * jax.random.normal(ks[7], (256,)),
        "l2_w": lin_w(ks[8], 2 * latent_dim, 256),
        "l2_b": 0.01 * jax.random.normal(ks[9], (2 * latent_dim,)),
    }


def reference_forward(params, x, eps, latent_dim):
    """Plain-JAX/XLA reference mirroring the PyTorch module."""
    dn = ("NCHW", "OIHW", "NCHW")
    h = x
    for wk, bk in (("c1_w", "c1_b"), ("c2_w", "c2_b"), ("c3_w", "c3_b")):
        h = jax.lax.conv_general_dilated(h, params[wk], window_strides=(2, 2),
                                         padding=((2, 2), (2, 2)),
                                         dimension_numbers=dn)
        h = jax.nn.relu(h + params[bk][None, :, None, None])
    h = h.reshape(h.shape[0], -1)                      # NCHW flatten == torch .view
    h = jax.nn.relu(h @ params["l1_w"].T + params["l1_b"])
    out = h @ params["l2_w"].T + params["l2_b"]
    mu = out[:, :latent_dim]
    log_var = out[:, latent_dim:]
    std = jnp.exp(0.5 * log_var)
    z = mu[None] + std[None] * eps
    return mu, log_var, z, std


# ----------------------------------------------------------------------------
# Demo
# ----------------------------------------------------------------------------
if __name__ == "__main__":
    B, latent_dim, K = 2, 8, 20

    key = jax.random.PRNGKey(0)
    k_param, k_x, k_eps = jax.random.split(key, 3)

    params = init_params(k_param, latent_dim)
    prep = prepare_params(params, batch=B)

    x = jax.random.normal(k_x, (B, 1, 32, 32), jnp.float32)        # NCHW, 1 channel
    eps = jax.random.normal(k_eps, (K, B, latent_dim), jnp.float32)

    fwd = jax.jit(encoder_forward)
    mu, log_var, z, dist_params = fwd(prep, x, eps)
    jax.block_until_ready((mu, log_var, z, dist_params))

    assert mu.shape == (B, latent_dim)
    assert log_var.shape == (B, latent_dim)
    assert z.shape == (K, B, latent_dim)

    # Cross-check against the XLA reference (bf16 matmuls -> loose tolerance).
    ref_mu, ref_lv, ref_z, _ = reference_forward(params, x, eps, latent_dim)
    np.testing.assert_allclose(np.asarray(mu), np.asarray(ref_mu), rtol=1e-1, atol=1e-1)
    np.testing.assert_allclose(np.asarray(log_var), np.asarray(ref_lv), rtol=1e-1, atol=1e-1)
    np.testing.assert_allclose(np.asarray(z), np.asarray(ref_z), rtol=1e-1, atol=1e-1)

    print("KERNEL_OK")
</pallas_src>

<mosaic_0001>
module attributes {stable_mosaic.version = 11 : i64} {
  func.func @_encoder_kernel(%arg0: memref<64x32xf32, #tpu.memory_space<vmem>>, %arg1: memref<5x32x64xbf16, #tpu.memory_space<vmem>>, %arg2: memref<5x32x256xbf16, #tpu.memory_space<vmem>>, %arg3: memref<1x256xf32, #tpu.memory_space<vmem>>, %arg4: memref<5x16x32xbf16, #tpu.memory_space<vmem>>, %arg5: memref<5x256x256xbf16, #tpu.memory_space<vmem>>, %arg6: memref<1x256xf32, #tpu.memory_space<vmem>>, %arg7: memref<5x8x16xbf16, #tpu.memory_space<vmem>>, %arg8: memref<5x256x128xbf16, #tpu.memory_space<vmem>>, %arg9: memref<1x128xf32, #tpu.memory_space<vmem>>, %arg10: memref<4x2x8xbf16, #tpu.memory_space<vmem>>, %arg11: memref<4x128x256xbf16, #tpu.memory_space<vmem>>, %arg12: memref<1x256xf32, #tpu.memory_space<vmem>>, %arg13: memref<256x8xbf16, #tpu.memory_space<vmem>>, %arg14: memref<1x8xf32, #tpu.memory_space<vmem>>, %arg15: memref<256x8xbf16, #tpu.memory_space<vmem>>, %arg16: memref<1x8xf32, #tpu.memory_space<vmem>>, %arg17: memref<20x2x8xf32, #tpu.memory_space<vmem>>, %arg18: memref<2x8xf32, #tpu.memory_space<vmem>>, %arg19: memref<2x8xf32, #tpu.memory_space<vmem>>, %arg20: memref<20x2x8xf32, #tpu.memory_space<vmem>>, %arg21: memref<2x8xf32, #tpu.memory_space<vmem>>) attributes {dimension_semantics = [], scalar_prefetch = 0 : i64, scratch_operands = 0 : i64, tpu.core_type = #tpu.core_type<tc>} {
    %c0 = arith.constant 0 : index
    %c0_0 = arith.constant 0 : index
    %0 = vector.load %arg0[%c0, %c0_0] : memref<64x32xf32, #tpu.memory_space<vmem>>, vector<64x32xf32>
    %1 = arith.truncf %0 : vector<64x32xf32> to vector<64x32xbf16>
    %c0_1 = arith.constant 0 : index
    %c0_2 = arith.constant 0 : index
    %c0_3 = arith.constant 0 : index
    %2 = vector.load %arg1[%c0_1, %c0_2, %c0_3] : memref<5x32x64xbf16, #tpu.memory_space<vmem>>, vector<1x32x64xbf16>
    %3 = vector.shape_cast %2 : vector<1x32x64xbf16> to vector<32x64xbf16>
    %cst = arith.constant dense<0.000000e+00> : vector<32x32xf32>
    %4 = tpu.matmul %3, %1, %cst {dimension_numbers = #tpu.dot_dimension_numbers<[1], [0], [0], [1], [0, 0, 1, 1], [], []>} : vector<32x64xbf16>, vector<64x32xbf16>, vector<32x32xf32> -> vector<32x32xf32>
    %5 = arith.truncf %4 : vector<32x32xf32> to vector<32x32xbf16>
    %c0_4 = arith.constant 0 : index
    %c0_5 = arith.constant 0 : index
    %c0_6 = arith.constant 0 : index
    %6 = vector.load %arg2[%c0_4, %c0_5, %c0_6] : memref<5x32x256xbf16, #tpu.memory_space<vmem>>, vector<1x32x256xbf16>
    %7 = vector.shape_cast %6 : vector<1x32x256xbf16> to vector<32x256xbf16>
    %cst_7 = arith.constant dense<0.000000e+00> : vector<32x256xf32>
    %8 = tpu.matmul %5, %7, %cst_7 {dimension_numbers = #tpu.dot_dimension_numbers<[1], [0], [0], [1], [0, 0, 1, 1], [], []>} : vector<32x32xbf16>, vector<32x256xbf16>, vector<32x256xf32> -> vector<32x256xf32>
    %c1 = arith.constant 1 : index
    %c0_8 = arith.constant 0 : index
    %c0_9 = arith.constant 0 : index
    %9 = vector.load %arg1[%c1, %c0_8, %c0_9] : memref<5x32x64xbf16, #tpu.memory_space<vmem>>, vector<1x32x64xbf16>
    %10 = vector.shape_cast %9 : vector<1x32x64xbf16> to vector<32x64xbf16>
    %cst_10 = arith.constant dense<0.000000e+00> : vector<32x32xf32>
    %11 = tpu.matmul %10, %1, %cst_10 {dimension_numbers = #tpu.dot_dimension_numbers<[1], [0], [0], [1], [0, 0, 1, 1], [], []>} : vector<32x64xbf16>, vector<64x32xbf16>, vector<32x32xf32> -> vector<32x32xf32>
    %12 = arith.truncf %11 : vector<32x32xf32> to vector<32x32xbf16>
    %c1_11 = arith.constant 1 : index
    %c0_12 = arith.constant 0 : index
    %c0_13 = arith.constant 0 : index
    %13 = vector.load %arg2[%c1_11, %c0_12, %c0_13] : memref<5x32x256xbf16, #tpu.memory_space<vmem>>, vector<1x32x256xbf16>
    %14 = vector.shape_cast %13 : vector<1x32x256xbf16> to vector<32x256xbf16>
    %cst_14 = arith.constant dense<0.000000e+00> : vector<32x256xf32>
    %15 = tpu.matmul %12, %14, %cst_14 {dimension_numbers = #tpu.dot_dimension_numbers<[1], [0], [0], [1], [0, 0, 1, 1], [], []>} : vector<32x32xbf16>, vector<32x256xbf16>, vector<32x256xf32> -> vector<32x256xf32>
    %16 = arith.addf %8, %15 : vector<32x256xf32>
    %c2 = arith.constant 2 : index
    %c0_15 = arith.constant 0 : index
    %c0_16 = arith.constant 0 : index
    %17 = vector.load %arg1[%c2, %c0_15, %c0_16] : memref<5x32x64xbf16, #tpu.memory_space<vmem>>, vector<1x32x64xbf16>
    %18 = vector.shape_cast %17 : vector<1x32x64xbf16> to vector<32x64xbf16>
    %cst_17 = arith.constant dense<0.000000e+00> : vector<32x32xf32>
    %19 = tpu.matmul %18, %1, %cst_17 {dimension_numbers = #tpu.dot_dimension_numbers<[1], [0], [0], [1], [0, 0, 1, 1], [], []>} : vector<32x64xbf16>, vector<64x32xbf16>, vector<32x32xf32> -> vector<32x32xf32>
    %20 = arith.truncf %19 : vector<32x32xf32> to vector<32x32xbf16>
    %c2_18 = arith.constant 2 : index
    %c0_19 = arith.constant 0 : index
    %c0_20 = arith.constant 0 : index
    %21 = vector.load %arg2[%c2_18, %c0_19, %c0_20] : memref<5x32x256xbf16, #tpu.memory_space<vmem>>, vector<1x32x256xbf16>
    %22 = vector.shape_cast %21 : vector<1x32x256xbf16> to vector<32x256xbf16>
    %cst_21 = arith.constant dense<0.000000e+00> : vector<32x256xf32>
    %23 = tpu.matmul %20, %22, %cst_21 {dimension_numbers = #tpu.dot_dimension_numbers<[1], [0], [0], [1], [0, 0, 1, 1], [], []>} : vector<32x32xbf16>, vector<32x256xbf16>, vector<32x256xf32> -> vector<32x256xf32>
    %24 = arith.addf %16, %23 : vector<32x256xf32>
    %c3 = arith.constant 3 : index
    %c0_22 = arith.constant 0 : index
    %c0_23 = arith.constant 0 : index
    %25 = vector.load %arg1[%c3, %c0_22, %c0_23] : memref<5x32x64xbf16, #tpu.memory_space<vmem>>, vector<1x32x64xbf16>
    %26 = vector.shape_cast %25 : vector<1x32x64xbf16> to vector<32x64xbf16>
    %cst_24 = arith.constant dense<0.000000e+00> : vector<32x32xf32>
    %27 = tpu.matmul %26, %1, %cst_24 {dimension_numbers = #tpu.dot_dimension_numbers<[1], [0], [0], [1], [0, 0, 1, 1], [], []>} : vector<32x64xbf16>, vector<64x32xbf16>, vector<32x32xf32> -> vector<32x32xf32>
    %28 = arith.truncf %27 : vector<32x32xf32> to vector<32x32xbf16>
    %c3_25 = arith.constant 3 : index
    %c0_26 = arith.constant 0 : index
    %c0_27 = arith.constant 0 : index
    %29 = vector.load %arg2[%c3_25, %c0_26, %c0_27] : memref<5x32x256xbf16, #tpu.memory_space<vmem>>, vector<1x32x256xbf16>
    %30 = vector.shape_cast %29 : vector<1x32x256xbf16> to vector<32x256xbf16>
    %cst_28 = arith.constant dense<0.000000e+00> : vector<32x256xf32>
    %31 = tpu.matmul %28, %30, %cst_28 {dimension_numbers = #tpu.dot_dimension_numbers<[1], [0], [0], [1], [0, 0, 1, 1], [], []>} : vector<32x32xbf16>, vector<32x256xbf16>, vector<32x256xf32> -> vector<32x256xf32>
    %32 = arith.addf %24, %31 : vector<32x256xf32>
    %c4 = arith.constant 4 : index
    %c0_29 = arith.constant 0 : index
    %c0_30 = arith.constant 0 : index
    %33 = vector.load %arg1[%c4, %c0_29, %c0_30] : memref<5x32x64xbf16, #tpu.memory_space<vmem>>, vector<1x32x64xbf16>
    %34 = vector.shape_cast %33 : vector<1x32x64xbf16> to vector<32x64xbf16>
    %cst_31 = arith.constant dense<0.000000e+00> : vector<32x32xf32>
    %35 = tpu.matmul %34, %1, %cst_31 {dimension_numbers = #tpu.dot_dimension_numbers<[1], [0], [0], [1], [0, 0, 1, 1], [], []>} : vector<32x64xbf16>, vector<64x32xbf16>, vector<32x32xf32> -> vector<32x32xf32>
    %36 = arith.truncf %35 : vector<32x32xf32> to vector<32x32xbf16>
    %c4_32 = arith.constant 4 : index
    %c0_33 = arith.constant 0 : index
    %c0_34 = arith.constant 0 : index
    %37 = vector.load %arg2[%c4_32, %c0_33, %c0_34] : memref<5x32x256xbf16, #tpu.memory_space<vmem>>, vector<1x32x256xbf16>
    %38 = vector.shape_cast %37 : vector<1x32x256xbf16> to vector<32x256xbf16>
    %cst_35 = arith.constant dense<0.000000e+00> : vector<32x256xf32>
    %39 = tpu.matmul %36, %38, %cst_35 {dimension_numbers = #tpu.dot_dimension_numbers<[1], [0], [0], [1], [0, 0, 1, 1], [], []>} : vector<32x32xbf16>, vector<32x256xbf16>, vector<32x256xf32> -> vector<32x256xf32>
    %40 = arith.addf %32, %39 : vector<32x256xf32>
    %c0_36 = arith.constant 0 : index
    %c0_37 = arith.constant 0 : index
    %41 = vector.load %arg3[%c0_36, %c0_37] : memref<1x256xf32, #tpu.memory_space<vmem>>, vector<1x256xf32>
    %42 = vector.broadcast %41 : vector<1x256xf32> to vector<32x256xf32>
    %43 = arith.addf %40, %42 : vector<32x256xf32>
    %cst_38 = arith.constant 0.000000e+00 : f32
    %44 = vector.broadcast %cst_38 : f32 to vector<32x256xf32>
    %45 = arith.maximumf %43, %44 : vector<32x256xf32>
    %46 = arith.truncf %45 : vector<32x256xf32> to vector<32x256xbf16>
    %c0_39 = arith.constant 0 : index
    %c0_40 = arith.constant 0 : index
    %c0_41 = arith.constant 0 : index
    %47 = vector.load %arg4[%c0_39, %c0_40, %c0_41] : memref<5x16x32xbf16, #tpu.memory_space<vmem>>, vector<1x16x32xbf16>
    %48 = vector.shape_cast %47 : vector<1x16x32xbf16> to vector<16x32xbf16>
    %cst_42 = arith.constant dense<0.000000e+00> : vector<16x256xf32>
    %49 = tpu.matmul %48, %46, %cst_42 {dimension_numbers = #tpu.dot_dimension_numbers<[1], [0], [0], [1], [0, 0, 1, 1], [], []>} : vector<16x32xbf16>, vector<32x256xbf16>, vector<16x256xf32> -> vector<16x256xf32>
    %50 = arith.truncf %49 : vector<16x256xf32> to vector<16x256xbf16>
    %c0_43 = arith.constant 0 : index
    %c0_44 = arith.constant 0 : index
    %c0_45 = arith.constant 0 : index
    %51 = vector.load %arg5[%c0_43, %c0_44, %c0_45] : memref<5x256x256xbf16, #tpu.memory_space<vmem>>, vector<1x256x256xbf16>
    %52 = vector.shape_cast %51 : vector<1x256x256xbf16> to vector<256x256xbf16>
    %cst_46 = arith.constant dense<0.000000e+00> : vector<16x256xf32>
    %53 = tpu.matmul %50, %52, %cst_46 {dimension_numbers = #tpu.dot_dimension_numbers<[1], [0], [0], [1], [0, 0, 1, 1], [], []>} : vector<16x256xbf16>, vector<256x256xbf16>, vector<16x256xf32> -> vector<16x256xf32>
    %c1_47 = arith.constant 1 : index
    %c0_48 = arith.constant 0 : index
    %c0_49 = arith.constant 0 : index
    %54 = vector.load %arg4[%c1_47, %c0_48, %c0_49] : memref<5x16x32xbf16, #tpu.memory_space<vmem>>, vector<1x16x32xbf16>
    %55 = vector.shape_cast %54 : vector<1x16x32xbf16> to vector<16x32xbf16>
    %cst_50 = arith.constant dense<0.000000e+00> : vector<16x256xf32>
    %56 = tpu.matmul %55, %46, %cst_50 {dimension_numbers = #tpu.dot_dimension_numbers<[1], [0], [0], [1], [0, 0, 1, 1], [], []>} : vector<16x32xbf16>, vector<32x256xbf16>, vector<16x256xf32> -> vector<16x256xf32>
    %57 = arith.truncf %56 : vector<16x256xf32> to vector<16x256xbf16>
    %c1_51 = arith.constant 1 : index
    %c0_52 = arith.constant 0 : index
    %c0_53 = arith.constant 0 : index
    %58 = vector.load %arg5[%c1_51, %c0_52, %c0_53] : memref<5x256x256xbf16, #tpu.memory_space<vmem>>, vector<1x256x256xbf16>
    %59 = vector.shape_cast %58 : vector<1x256x256xbf16> to vector<256x256xbf16>
    %cst_54 = arith.constant dense<0.000000e+00> : vector<16x256xf32>
    %60 = tpu.matmul %57, %59, %cst_54 {dimension_numbers = #tpu.dot_dimension_numbers<[1], [0], [0], [1], [0, 0, 1, 1], [], []>} : vector<16x256xbf16>, vector<256x256xbf16>, vector<16x256xf32> -> vector<16x256xf32>
    %61 = arith.addf %53, %60 : vector<16x256xf32>
    %c2_55 = arith.constant 2 : index
    %c0_56 = arith.constant 0 : index
    %c0_57 = arith.constant 0 : index
    %62 = vector.load %arg4[%c2_55, %c0_56, %c0_57] : memref<5x16x32xbf16, #tpu.memory_space<vmem>>, vector<1x16x32xbf16>
    %63 = vector.shape_cast %62 : vector<1x16x32xbf16> to vector<16x32xbf16>
    %cst_58 = arith.constant dense<0.000000e+00> : vector<16x256xf32>
    %64 = tpu.matmul %63, %46, %cst_58 {dimension_numbers = #tpu.dot_dimension_numbers<[1], [0], [0], [1], [0, 0, 1, 1], [], []>} : vector<16x32xbf16>, vector<32x256xbf16>, vector<16x256xf32> -> vector<16x256xf32>
    %65 = arith.truncf %64 : vector<16x256xf32> to vector<16x256xbf16>
    %c2_59 = arith.constant 2 : index
    %c0_60 = arith.constant 0 : index
    %c0_61 = arith.constant 0 : index
    %66 = vector.load %arg5[%c2_59, %c0_60, %c0_61] : memref<5x256x256xbf16, #tpu.memory_space<vmem>>, vector<1x256x256xbf16>
    %67 = vector.shape_cast %66 : vector<1x256x256xbf16> to vector<256x256xbf16>
    %cst_62 = arith.constant dense<0.000000e+00> : vector<16x256xf32>
    %68 = tpu.matmul %65, %67, %cst_62 {dimension_numbers = #tpu.dot_dimension_numbers<[1], [0], [0], [1], [0, 0, 1, 1], [], []>} : vector<16x256xbf16>, vector<256x256xbf16>, vector<16x256xf32> -> vector<16x256xf32>
    %69 = arith.addf %61, %68 : vector<16x256xf32>
    %c3_63 = arith.constant 3 : index
    %c0_64 = arith.constant 0 : index
    %c0_65 = arith.constant 0 : index
    %70 = vector.load %arg4[%c3_63, %c0_64, %c0_65] : memref<5x16x32xbf16, #tpu.memory_space<vmem>>, vector<1x16x32xbf16>
    %71 = vector.shape_cast %70 : vector<1x16x32xbf16> to vector<16x32xbf16>
    %cst_66 = arith.constant dense<0.000000e+00> : vector<16x256xf32>
    %72 = tpu.matmul %71, %46, %cst_66 {dimension_numbers = #tpu.dot_dimension_numbers<[1], [0], [0], [1], [0, 0, 1, 1], [], []>} : vector<16x32xbf16>, vector<32x256xbf16>, vector<16x256xf32> -> vector<16x256xf32>
    %73 = arith.truncf %72 : vector<16x256xf32> to vector<16x256xbf16>
    %c3_67 = arith.constant 3 : index
    %c0_68 = arith.constant 0 : index
    %c0_69 = arith.constant 0 : index
    %74 = vector.load %arg5[%c3_67, %c0_68, %c0_69] : memref<5x256x256xbf16, #tpu.memory_space<vmem>>, vector<1x256x256xbf16>
    %75 = vector.shape_cast %74 : vector<1x256x256xbf16> to vector<256x256xbf16>
    %cst_70 = arith.constant dense<0.000000e+00> : vector<16x256xf32>
    %76 = tpu.matmul %73, %75, %cst_70 {dimension_numbers = #tpu.dot_dimension_numbers<[1], [0], [0], [1], [0, 0, 1, 1], [], []>} : vector<16x256xbf16>, vector<256x256xbf16>, vector<16x256xf32> -> vector<16x256xf32>
    %77 = arith.addf %69, %76 : vector<16x256xf32>
    %c4_71 = arith.constant 4 : index
    %c0_72 = arith.constant 0 : index
    %c0_73 = arith.constant 0 : index
    %78 = vector.load %arg4[%c4_71, %c0_72, %c0_73] : memref<5x16x32xbf16, #tpu.memory_space<vmem>>, vector<1x16x32xbf16>
    %79 = vector.shape_cast %78 : vector<1x16x32xbf16> to vector<16x32xbf16>
    %cst_74 = arith.constant dense<0.000000e+00> : vector<16x256xf32>
    %80 = tpu.matmul %79, %46, %cst_74 {dimension_numbers = #tpu.dot_dimension_numbers<[1], [0], [0], [1], [0, 0, 1, 1], [], []>} : vector<16x32xbf16>, vector<32x256xbf16>, vector<16x256xf32> -> vector<16x256xf32>
    %81 = arith.truncf %80 : vector<16x256xf32> to vector<16x256xbf16>
    %c4_75 = arith.constant 4 : index
    %c0_76 = arith.constant 0 : index
    %c0_77 = arith.constant 0 : index
    %82 = vector.load %arg5[%c4_75, %c0_76, %c0_77] : memref<5x256x256xbf16, #tpu.memory_space<vmem>>, vector<1x256x256xbf16>
    %83 = vector.shape_cast %82 : vector<1x256x256xbf16> to vector<256x256xbf16>
    %cst_78 = arith.constant dense<0.000000e+00> : vector<16x256xf32>
    %84 = tpu.matmul %81, %83, %cst_78 {dimension_numbers = #tpu.dot_dimension_numbers<[1], [0], [0], [1], [0, 0, 1, 1], [], []>} : vector<16x256xbf16>, vector<256x256xbf16>, vector<16x256xf32> -> vector<16x256xf32>
    %85 = arith.addf %77, %84 : vector<16x256xf32>
    %c0_79 = arith.constant 0 : index
    %c0_80 = arith.constant 0 : index
    %86 = vector.load %arg6[%c0_79, %c0_80] : memref<1x256xf32, #tpu.memory_space<vmem>>, vector<1x256xf32>
    %87 = vector.broadcast %86 : vector<1x256xf32> to vector<16x256xf32>
    %88 = arith.addf %85, %87 : vector<16x256xf32>
    %cst_81 = arith.constant 0.000000e+00 : f32
    %89 = vector.broadcast %cst_81 : f32 to vector<16x256xf32>
    %90 = arith.maximumf %88, %89 : vector<16x256xf32>
    %91 = arith.truncf %90 : vector<16x256xf32> to vector<16x256xbf16>
    %c0_82 = arith.constant 0 : index
    %c0_83 = arith.constant 0 : index
    %c0_84 = arith.constant 0 : index
    %92 = vector.load %arg7[%c0_82, %c0_83, %c0_84] : memref<5x8x16xbf16, #tpu.memory_space<vmem>>, vector<1x8x16xbf16>
    %93 = vector.shape_cast %92 : vector<1x8x16xbf16> to vector<8x16xbf16>
    %cst_85 = arith.constant dense<0.000000e+00> : vector<8x256xf32>
    %94 = tpu.matmul %93, %91, %cst_85 {dimension_numbers = #tpu.dot_dimension_numbers<[1], [0], [0], [1], [0, 0, 1, 1], [], []>} : vector<8x16xbf16>, vector<16x256xbf16>, vector<8x256xf32> -> vector<8x256xf32>
    %95 = arith.truncf %94 : vector<8x256xf32> to vector<8x256xbf16>
    %c0_86 = arith.constant 0 : index
    %c0_87 = arith.constant 0 : index
    %c0_88 = arith.constant 0 : index
    %96 = vector.load %arg8[%c0_86, %c0_87, %c0_88] : memref<5x256x128xbf16, #tpu.memory_space<vmem>>, vector<1x256x128xbf16>
    %97 = vector.shape_cast %96 : vector<1x256x128xbf16> to vector<256x128xbf16>
    %cst_89 = arith.constant dense<0.000000e+00> : vector<8x128xf32>
    %98 = tpu.matmul %95, %97, %cst_89 {dimension_numbers = #tpu.dot_dimension_numbers<[1], [0], [0], [1], [0, 0, 1, 1], [], []>} : vector<8x256xbf16>, vector<256x128xbf16>, vector<8x128xf32> -> vector<8x128xf32>
    %c1_90 = arith.constant 1 : index
    %c0_91 = arith.constant 0 : index
    %c0_92 = arith.constant 0 : index
    %99 = vector.load %arg7[%c1_90, %c0_91, %c0_92] : memref<5x8x16xbf16, #tpu.memory_space<vmem>>, vector<1x8x16xbf16>
    %100 = vector.shape_cast %99 : vector<1x8x16xbf16> to vector<8x16xbf16>
    %cst_93 = arith.constant dense<0.000000e+00> : vector<8x256xf32>
    %101 = tpu.matmul %100, %91, %cst_93 {dimension_numbers = #tpu.dot_dimension_numbers<[1], [0], [0], [1], [0, 0, 1, 1], [], []>} : vector<8x16xbf16>, vector<16x256xbf16>, vector<8x256xf32> -> vector<8x256xf32>
    %102 = arith.truncf %101 : vector<8x256xf32> to vector<8x256xbf16>
    %c1_94 = arith.constant 1 : index
    %c0_95 = arith.constant 0 : index
    %c0_96 = arith.constant 0 : index
    %103 = vector.load %arg8[%c1_94, %c0_95, %c0_96] : memref<5x256x128xbf16, #tpu.memory_space<vmem>>, vector<1x256x128xbf16>
    %104 = vector.shape_cast %103 : vector<1x256x128xbf16> to vector<256x128xbf16>
    %cst_97 = arith.constant dense<0.000000e+00> : vector<8x128xf32>
    %105 = tpu.matmul %102, %104, %cst_97 {dimension_numbers = #tpu.dot_dimension_numbers<[1], [0], [0], [1], [0, 0, 1, 1], [], []>} : vector<8x256xbf16>, vector<256x128xbf16>, vector<8x128xf32> -> vector<8x128xf32>
    %106 = arith.addf %98, %105 : vector<8x128xf32>
    %c2_98 = arith.constant 2 : index
    %c0_99 = arith.constant 0 : index
    %c0_100 = arith.constant 0 : index
    %107 = vector.load %arg7[%c2_98, %c0_99, %c0_100] : memref<5x8x16xbf16, #tpu.memory_space<vmem>>, vector<1x8x16xbf16>
    %108 = vector.shape_cast %107 : vector<1x8x16xbf16> to vector<8x16xbf16>
    %cst_101 = arith.constant dense<0.000000e+00> : vector<8x256xf32>
    %109 = tpu.matmul %108, %91, %cst_101 {dimension_numbers = #tpu.dot_dimension_numbers<[1], [0], [0], [1], [0, 0, 1, 1], [], []>} : vector<8x16xbf16>, vector<16x256xbf16>, vector<8x256xf32> -> vector<8x256xf32>
    %110 = arith.truncf %109 : vector<8x256xf32> to vector<8x256xbf16>
    %c2_102 = arith.constant 2 : index
    %c0_103 = arith.constant 0 : index
    %c0_104 = arith.constant 0 : index
    %111 = vector.load %arg8[%c2_102, %c0_103, %c0_104] : memref<5x256x128xbf16, #tpu.memory_space<vmem>>, vector<1x256x128xbf16>
    %112 = vector.shape_cast %111 : vector<1x256x128xbf16> to vector<256x128xbf16>
    %cst_105 = arith.constant dense<0.000000e+00> : vector<8x128xf32>
    %113 = tpu.matmul %110, %112, %cst_105 {dimension_numbers = #tpu.dot_dimension_numbers<[1], [0], [0], [1], [0, 0, 1, 1], [], []>} : vector<8x256xbf16>, vector<256x128xbf16>, vector<8x128xf32> -> vector<8x128xf32>
    %114 = arith.addf %106, %113 : vector<8x128xf32>
    %c3_106 = arith.constant 3 : index
    %c0_107 = arith.constant 0 : index
    %c0_108 = arith.constant 0 : index
    %115 = vector.load %arg7[%c3_106, %c0_107, %c0_108] : memref<5x8x16xbf16, #tpu.memory_space<vmem>>, vector<1x8x16xbf16>
    %116 = vector.shape_cast %115 : vector<1x8x16xbf16> to vector<8x16xbf16>
    %cst_109 = arith.constant dense<0.000000e+00> : vector<8x256xf32>
    %117 = tpu.matmul %116, %91, %cst_109 {dimension_numbers = #tpu.dot_dimension_numbers<[1], [0], [0], [1], [0, 0, 1, 1], [], []>} : vector<8x16xbf16>, vector<16x256xbf16>, vector<8x256xf32> -> vector<8x256xf32>
    %118 = arith.truncf %117 : vector<8x256xf32> to vector<8x256xbf16>
    %c3_110 = arith.constant 3 : index
    %c0_111 = arith.constant 0 : index
    %c0_112 = arith.constant 0 : index
    %119 = vector.load %arg8[%c3_110, %c0_111, %c0_112] : memref<5x256x128xbf16, #tpu.memory_space<vmem>>, vector<1x256x128xbf16>
    %120 = vector.shape_cast %119 : vector<1x256x128xbf16> to vector<256x128xbf16>
    %cst_113 = arith.constant dense<0.000000e+00> : vector<8x128xf32>
    %121 = tpu.matmul %118, %120, %cst_113 {dimension_numbers = #tpu.dot_dimension_numbers<[1], [0], [0], [1], [0, 0, 1, 1], [], []>} : vector<8x256xbf16>, vector<256x128xbf16>, vector<8x128xf32> -> vector<8x128xf32>
    %122 = arith.addf %114, %121 : vector<8x128xf32>
    %c4_114 = arith.constant 4 : index
    %c0_115 = arith.constant 0 : index
    %c0_116 = arith.constant 0 : index
    %123 = vector.load %arg7[%c4_114, %c0_115, %c0_116] : memref<5x8x16xbf16, #tpu.memory_space<vmem>>, vector<1x8x16xbf16>
    %124 = vector.shape_cast %123 : vector<1x8x16xbf16> to vector<8x16xbf16>
    %cst_117 = arith.constant dense<0.000000e+00> : vector<8x256xf32>
    %125 = tpu.matmul %124, %91, %cst_117 {dimension_numbers = #tpu.dot_dimension_numbers<[1], [0], [0], [1], [0, 0, 1, 1], [], []>} : vector<8x16xbf16>, vector<16x256xbf16>, vector<8x256xf32> -> vector<8x256xf32>
    %126 = arith.truncf %125 : vector<8x256xf32> to vector<8x256xbf16>
    %c4_118 = arith.constant 4 : index
    %c0_119 = arith.constant 0 : index
    %c0_120 = arith.constant 0 : index
    %127 = vector.load %arg8[%c4_118, %c0_119, %c0_120] : memref<5x256x128xbf16, #tpu.memory_space<vmem>>, vector<1x256x128xbf16>
    %128 = vector.shape_cast %127 : vector<1x256x128xbf16> to vector<256x128xbf16>
    %cst_121 = arith.constant dense<0.000000e+00> : vector<8x128xf32>
    %129 = tpu.matmul %126, %128, %cst_121 {dimension_numbers = #tpu.dot_dimension_numbers<[1], [0], [0], [1], [0, 0, 1, 1], [], []>} : vector<8x256xbf16>, vector<256x128xbf16>, vector<8x128xf32> -> vector<8x128xf32>
    %130 = arith.addf %122, %129 : vector<8x128xf32>
    %c0_122 = arith.constant 0 : index
    %c0_123 = arith.constant 0 : index
    %131 = vector.load %arg9[%c0_122, %c0_123] : memref<1x128xf32, #tpu.memory_space<vmem>>, vector<1x128xf32>
    %132 = vector.broadcast %131 : vector<1x128xf32> to vector<8x128xf32>
    %133 = arith.addf %130, %132 : vector<8x128xf32>
    %cst_124 = arith.constant 0.000000e+00 : f32
    %134 = vector.broadcast %cst_124 : f32 to vector<8x128xf32>
    %135 = arith.maximumf %133, %134 : vector<8x128xf32>
    %136 = arith.truncf %135 : vector<8x128xf32> to vector<8x128xbf16>
    %c0_125 = arith.constant 0 : index
    %c0_126 = arith.constant 0 : index
    %c0_127 = arith.constant 0 : index
    %137 = vector.load %arg10[%c0_125, %c0_126, %c0_127] : memref<4x2x8xbf16, #tpu.memory_space<vmem>>, vector<1x2x8xbf16>
    %138 = vector.shape_cast %137 : vector<1x2x8xbf16> to vector<2x8xbf16>
    %cst_128 = arith.constant dense<0.000000e+00> : vector<2x128xf32>
    %139 = tpu.matmul %138, %136, %cst_128 {dimension_numbers = #tpu.dot_dimension_numbers<[1], [0], [0], [1], [0, 0, 1, 1], [], []>} : vector<2x8xbf16>, vector<8x128xbf16>, vector<2x128xf32> -> vector<2x128xf32>
    %140 = arith.truncf %139 : vector<2x128xf32> to vector<2x128xbf16>
    %c0_129 = arith.constant 0 : index
    %c0_130 = arith.constant 0 : index
    %c0_131 = arith.constant 0 : index
    %141 = vector.load %arg11[%c0_129, %c0_130, %c0_131] : memref<4x128x256xbf16, #tpu.memory_space<vmem>>, vector<1x128x256xbf16>
    %142 = vector.shape_cast %141 : vector<1x128x256xbf16> to vector<128x256xbf16>
    %cst_132 = arith.constant dense<0.000000e+00> : vector<2x256xf32>
    %143 = tpu.matmul %140, %142, %cst_132 {dimension_numbers = #tpu.dot_dimension_numbers<[1], [0], [0], [1], [0, 0, 1, 1], [], []>} : vector<2x128xbf16>, vector<128x256xbf16>, vector<2x256xf32> -> vector<2x256xf32>
    %c1_133 = arith.constant 1 : index
    %c0_134 = arith.constant 0 : index
    %c0_135 = arith.constant 0 : index
    %144 = vector.load %arg10[%c1_133, %c0_134, %c0_135] : memref<4x2x8xbf16, #tpu.memory_space<vmem>>, vector<1x2x8xbf16>
    %145 = vector.shape_cast %144 : vector<1x2x8xbf16> to vector<2x8xbf16>
    %cst_136 = arith.constant dense<0.000000e+00> : vector<2x128xf32>
    %146 = tpu.matmul %145, %136, %cst_136 {dimension_numbers = #tpu.dot_dimension_numbers<[1], [0], [0], [1], [0, 0, 1, 1], [], []>} : vector<2x8xbf16>, vector<8x128xbf16>, vector<2x128xf32> -> vector<2x128xf32>
    %147 = arith.truncf %146 : vector<2x128xf32> to vector<2x128xbf16>
    %c1_137 = arith.constant 1 : index
    %c0_138 = arith.constant 0 : index
    %c0_139 = arith.constant 0 : index
    %148 = vector.load %arg11[%c1_137, %c0_138, %c0_139] : memref<4x128x256xbf16, #tpu.memory_space<vmem>>, vector<1x128x256xbf16>
    %149 = vector.shape_cast %148 : vector<1x128x256xbf16> to vector<128x256xbf16>
    %cst_140 = arith.constant dense<0.000000e+00> : vector<2x256xf32>
    %150 = tpu.matmul %147, %149, %cst_140 {dimension_numbers = #tpu.dot_dimension_numbers<[1], [0], [0], [1], [0, 0, 1, 1], [], []>} : vector<2x128xbf16>, vector<128x256xbf16>, vector<2x256xf32> -> vector<2x256xf32>
    %151 = arith.addf %143, %150 : vector<2x256xf32>
    %c2_141 = arith.constant 2 : index
    %c0_142 = arith.constant 0 : index
    %c0_143 = arith.constant 0 : index
    %152 = vector.load %arg10[%c2_141, %c0_142, %c0_143] : memref<4x2x8xbf16, #tpu.memory_space<vmem>>, vector<1x2x8xbf16>
    %153 = vector.shape_cast %152 : vector<1x2x8xbf16> to vector<2x8xbf16>
    %cst_144 = arith.constant dense<0.000000e+00> : vector<2x128xf32>
    %154 = tpu.matmul %153, %136, %cst_144 {dimension_numbers = #tpu.dot_dimension_numbers<[1], [0], [0], [1], [0, 0, 1, 1], [], []>} : vector<2x8xbf16>, vector<8x128xbf16>, vector<2x128xf32> -> vector<2x128xf32>
    %155 = arith.truncf %154 : vector<2x128xf32> to vector<2x128xbf16>
    %c2_145 = arith.constant 2 : index
    %c0_146 = arith.constant 0 : index
    %c0_147 = arith.constant 0 : index
    %156 = vector.load %arg11[%c2_145, %c0_146, %c0_147] : memref<4x128x256xbf16, #tpu.memory_space<vmem>>, vector<1x128x256xbf16>
    %157 = vector.shape_cast %156 : vector<1x128x256xbf16> to vector<128x256xbf16>
    %cst_148 = arith.constant dense<0.000000e+00> : vector<2x256xf32>
    %158 = tpu.matmul %155, %157, %cst_148 {dimension_numbers = #tpu.dot_dimension_numbers<[1], [0], [0], [1], [0, 0, 1, 1], [], []>} : vector<2x128xbf16>, vector<128x256xbf16>, vector<2x256xf32> -> vector<2x256xf32>
    %159 = arith.addf %151, %158 : vector<2x256xf32>
    %c3_149 = arith.constant 3 : index
    %c0_150 = arith.constant 0 : index
    %c0_151 = arith.constant 0 : index
    %160 = vector.load %arg10[%c3_149, %c0_150, %c0_151] : memref<4x2x8xbf16, #tpu.memory_space<vmem>>, vector<1x2x8xbf16>
    %161 = vector.shape_cast %160 : vector<1x2x8xbf16> to vector<2x8xbf16>
    %cst_152 = arith.constant dense<0.000000e+00> : vector<2x128xf32>
    %162 = tpu.matmul %161, %136, %cst_152 {dimension_numbers = #tpu.dot_dimension_numbers<[1], [0], [0], [1], [0, 0, 1, 1], [], []>} : vector<2x8xbf16>, vector<8x128xbf16>, vector<2x128xf32> -> vector<2x128xf32>
    %163 = arith.truncf %162 : vector<2x128xf32> to vector<2x128xbf16>
    %c3_153 = arith.constant 3 : index
    %c0_154 = arith.constant 0 : index
    %c0_155 = arith.constant 0 : index
    %164 = vector.load %arg11[%c3_153, %c0_154, %c0_155] : memref<4x128x256xbf16, #tpu.memory_space<vmem>>, vector<1x128x256xbf16>
    %165 = vector.shape_cast %164 : vector<1x128x256xbf16> to vector<128x256xbf16>
    %cst_156 = arith.constant dense<0.000000e+00> : vector<2x256xf32>
    %166 = tpu.matmul %163, %165, %cst_156 {dimension_numbers = #tpu.dot_dimension_numbers<[1], [0], [0], [1], [0, 0, 1, 1], [], []>} : vector<2x128xbf16>, vector<128x256xbf16>, vector<2x256xf32> -> vector<2x256xf32>
    %167 = arith.addf %159, %166 : vector<2x256xf32>
    %c0_157 = arith.constant 0 : index
    %c0_158 = arith.constant 0 : index
    %168 = vector.load %arg12[%c0_157, %c0_158] : memref<1x256xf32, #tpu.memory_space<vmem>>, vector<1x256xf32>
    %169 = vector.broadcast %168 : vector<1x256xf32> to vector<2x256xf32>
    %170 = arith.addf %167, %169 : vector<2x256xf32>
    %cst_159 = arith.constant 0.000000e+00 : f32
    %171 = vector.broadcast %cst_159 : f32 to vector<2x256xf32>
    %172 = arith.maximumf %170, %171 : vector<2x256xf32>
    %173 = arith.truncf %172 : vector<2x256xf32> to vector<2x256xbf16>
    %c0_160 = arith.constant 0 : index
    %c0_161 = arith.constant 0 : index
    %174 = vector.load %arg13[%c0_160, %c0_161] : memref<256x8xbf16, #tpu.memory_space<vmem>>, vector<256x8xbf16>
    %cst_162 = arith.constant dense<0.000000e+00> : vector<2x8xf32>
    %175 = tpu.matmul %173, %174, %cst_162 {dimension_numbers = #tpu.dot_dimension_numbers<[1], [0], [0], [1], [0, 0, 1, 1], [], []>} : vector<2x256xbf16>, vector<256x8xbf16>, vector<2x8xf32> -> vector<2x8xf32>
    %c0_163 = arith.constant 0 : index
    %c0_164 = arith.constant 0 : index
    %176 = vector.load %arg14[%c0_163, %c0_164] : memref<1x8xf32, #tpu.memory_space<vmem>>, vector<1x8xf32>
    %177 = vector.broadcast %176 : vector<1x8xf32> to vector<2x8xf32>
    %178 = arith.addf %175, %177 : vector<2x8xf32>
    %c0_165 = arith.constant 0 : index
    %c0_166 = arith.constant 0 : index
    %179 = vector.load %arg15[%c0_165, %c0_166] : memref<256x8xbf16, #tpu.memory_space<vmem>>, vector<256x8xbf16>
    %cst_167 = arith.constant dense<0.000000e+00> : vector<2x8xf32>
    %180 = tpu.matmul %173, %179, %cst_167 {dimension_numbers = #tpu.dot_dimension_numbers<[1], [0], [0], [1], [0, 0, 1, 1], [], []>} : vector<2x256xbf16>, vector<256x8xbf16>, vector<2x8xf32> -> vector<2x8xf32>
    %c0_168 = arith.constant 0 : index
    %c0_169 = arith.constant 0 : index
    %181 = vector.load %arg16[%c0_168, %c0_169] : memref<1x8xf32, #tpu.memory_space<vmem>>, vector<1x8xf32>
    %182 = vector.broadcast %181 : vector<1x8xf32> to vector<2x8xf32>
    %183 = arith.addf %180, %182 : vector<2x8xf32>
    %cst_170 = arith.constant 5.000000e-01 : f32
    %184 = vector.broadcast %cst_170 : f32 to vector<2x8xf32>
    %185 = arith.mulf %184, %183 : vector<2x8xf32>
    %186 = math.exp %185 : vector<2x8xf32>
    %c0_171 = arith.constant 0 : index
    %c0_172 = arith.constant 0 : index
    %187 = vector.load %arg18[%c0_171, %c0_172] : memref<2x8xf32, #tpu.memory_space<vmem>>, vector<2x8xf32>
    tpu.vector_store %arg18[%c0_171, %c0_172], %178 {strides = array<i32>} : memref<2x8xf32, #tpu.memory_space<vmem>>, vector<2x8xf32>,
    %c0_173 = arith.constant 0 : index
    %c0_174 = arith.constant 0 : index
    %188 = vector.load %arg19[%c0_173, %c0_174] : memref<2x8xf32, #tpu.memory_space<vmem>>, vector<2x8xf32>
    tpu.vector_store %arg19[%c0_173, %c0_174], %183 {strides = array<i32>} : memref<2x8xf32, #tpu.memory_space<vmem>>, vector<2x8xf32>,
    %c0_175 = arith.constant 0 : index
    %c0_176 = arith.constant 0 : index
    %189 = vector.load %arg21[%c0_175, %c0_176] : memref<2x8xf32, #tpu.memory_space<vmem>>, vector<2x8xf32>
    tpu.vector_store %arg21[%c0_175, %c0_176], %186 {strides = array<i32>} : memref<2x8xf32, #tpu.memory_space<vmem>>, vector<2x8xf32>,
    %190 = vector.shape_cast %178 : vector<2x8xf32> to vector<1x2x8xf32>
    %191 = vector.shape_cast %186 : vector<2x8xf32> to vector<1x2x8xf32>
    %c0_177 = arith.constant 0 : index
    %c0_178 = arith.constant 0 : index
    %c0_179 = arith.constant 0 : index
    %192 = vector.load %arg17[%c0_177, %c0_178, %c0_179] : memref<20x2x8xf32, #tpu.memory_space<vmem>>, vector<20x2x8xf32>
    %193 = vector.broadcast %191 : vector<1x2x8xf32> to vector<20x2x8xf32>
    %194 = arith.mulf %193, %192 : vector<20x2x8xf32>
    %195 = vector.broadcast %190 : vector<1x2x8xf32> to vector<20x2x8xf32>
    %196 = arith.addf %195, %194 : vector<20x2x8xf32>
    %c0_180 = arith.constant 0 : index
    %c0_181 = arith.constant 0 : index
    %c0_182 = arith.constant 0 : index
    %197 = vector.load %arg20[%c0_180, %c0_181, %c0_182] : memref<20x2x8xf32, #tpu.memory_space<vmem>>, vector<20x2x8xf32>
    tpu.vector_store %arg20[%c0_180, %c0_181, %c0_182], %196 {strides = array<i32>} : memref<20x2x8xf32, #tpu.memory_space<vmem>>, vector<20x2x8xf32>,
    return
  }
}

</mosaic_0001>

<llo_original>
// kernel: encoder_forward.1
$region0: #{encoder_forward.1}
  #allocation0 [shape = 'u32[]', space=smem, size = 0x4, offset = 0x4, fixed_abs, tag = 'smem constant byte address 0x4 - core index']
  #allocation1 [shape = 'u32[144,128]{1,0:T(1,128)}', space=vmem, size = 0x12000, scoped, tag = 'internal scratch']
  %s0 = inlined_call_operand.vmem [shape: f32[64,32], index: 0, kind: input, shape index: {}]
  %s1 = inlined_call_operand.vmem [shape: bf16[5,32,64], index: 1, kind: input, shape index: {}]
  %s2 = inlined_call_operand.vmem [shape: bf16[5,32,256], index: 2, kind: input, shape index: {}]
  %s3 = inlined_call_operand.hbm [shape: f32[1,256], index: 3, kind: input, shape index: {}]
  %s4 = inlined_call_operand.vmem [shape: bf16[5,16,32], index: 4, kind: input, shape index: {}]
  %s5 = inlined_call_operand.hbm [shape: bf16[5,256,256], index: 5, kind: input, shape index: {}]
  %s6 = inlined_call_operand.hbm [shape: f32[1,256], index: 6, kind: input, shape index: {}]
  %s7 = inlined_call_operand.vmem [shape: bf16[5,8,16], index: 7, kind: input, shape index: {}]
  %s8 = inlined_call_operand.hbm [shape: bf16[5,256,128], index: 8, kind: input, shape index: {}]
  %s9 = inlined_call_operand.hbm [shape: f32[1,128], index: 9, kind: input, shape index: {}]
  %s10 = inlined_call_operand.hbm [shape: bf16[4,2,8], index: 10, kind: input, shape index: {}]
  %s11 = inlined_call_operand.hbm [shape: bf16[4,128,256], index: 11, kind: input, shape index: {}]
  %s12 = inlined_call_operand.hbm [shape: f32[1,256], index: 12, kind: input, shape index: {}]
  %s13 = inlined_call_operand.vmem [shape: bf16[256,8], index: 13, kind: input, shape index: {}]
  %s14 = inlined_call_operand.hbm [shape: f32[1,8], index: 14, kind: input, shape index: {}]
  %s15 = inlined_call_operand.vmem [shape: bf16[256,8], index: 15, kind: input, shape index: {}]
  %s16 = inlined_call_operand.hbm [shape: f32[1,8], index: 16, kind: input, shape index: {}]
  %s17 = inlined_call_operand.vmem [shape: f32[20,2,8], index: 17, kind: input, shape index: {}]
  %s18 = inlined_call_operand.vmem [shape: f32[2,8], index: 18, kind: output, shape index: {0}]
  %s19 = inlined_call_operand.hbm [shape: f32[2,8], index: 19, kind: output, shape index: {1}]
  %s20 = inlined_call_operand.vmem [shape: f32[20,2,8], index: 20, kind: output, shape index: {2}]
  %s21 = inlined_call_operand.hbm [shape: f32[2,8], index: 21, kind: output, shape index: {3}]
  %22 = xla_tuple %s18, %s19, %s20, %s21
  %s23 = sld [smem:[#allocation0]]
  $region146: #{encoder_forward.1} parent=0
    _
  %s25 = ssub.s32 1, %s23
  %s26 = scalar_select 0, %s25, %s23
  $region1: #{encoder_forward.1} parent=0
    #allocation2 [shape = 'u8[1024]{0}', space=vmem, size = 0x400, scoped, tag = 'input window, operand 3, single buffered']
    #allocation3 [shape = 's32[1]{0}', space=sflag, size = 0x4, scoped, tag = 'scoped memory for encoder_forward.1']
    #allocation4 [shape = 's32[1]{0}', space=sflag, size = 0x4, scoped, tag = 'scoped memory for encoder_forward.1']
    #allocation5 [shape = 'u8[655360]{0}', space=vmem, size = 0xa0000, scoped, tag = 'input window, operand 5, single buffered']
    #allocation6 [shape = 's32[1]{0}', space=sflag, size = 0x4, scoped, tag = 'scoped memory for encoder_forward.1']
    #allocation7 [shape = 'u8[1024]{0}', space=vmem, size = 0x400, scoped, tag = 'input window, operand 6, single buffered']
    #allocation8 [shape = 'u8[327680]{0}', space=vmem, size = 0x50000, scoped, tag = 'input window, operand 8, single buffered']
    #allocation9 [shape = 's32[1]{0}', space=sflag, size = 0x4, scoped, tag = 'scoped memory for encoder_forward.1']
    #allocation10 [shape = 'u8[512]{0}', space=vmem, size = 0x400, scoped, tag = 'input window, operand 9, single buffered']
    #allocation11 [shape = 'u8[2048]{0}', space=vmem, size = 0x800, scoped, tag = 'input window, operand 10, single buffered']
    #allocation12 [shape = 's32[1]{0}', space=sflag, size = 0x4, scoped, tag = 'scoped memory for encoder_forward.1']
    #allocation13 [shape = 'u8[262144]{0}', space=vmem, size = 0x40000, scoped, tag = 'input window, operand 11, single buffered']
    #allocation14 [shape = 'u8[1024]{0}', space=vmem, size = 0x400, scoped, tag = 'input window, operand 12, single buffered']
    #allocation15 [shape = 's32[1]{0}', space=sflag, size = 0x4, scoped, tag = 'scoped memory for encoder_forward.1']
    #allocation16 [shape = 'u8[512]{0}', space=vmem, size = 0x400, scoped, tag = 'input window, operand 14, single buffered']
    #allocation17 [shape = 'u8[512]{0}', space=vmem, size = 0x400, scoped, tag = 'input window, operand 16, single buffered']
    #allocation18 [shape = 's32[1]{0}', space=sflag, size = 0x4, scoped, tag = 'scoped memory for encoder_forward.1']
    #allocation19 [shape = 'u8[1024]{0}', space=vmem, size = 0x400, scoped, tag = 'output window, operand 1, single buffered']
    #allocation20 [shape = 'u8[1024]{0}', space=vmem, size = 0x400, scoped, tag = 'output window, operand 3, single buffered']
    #allocation21 [shape = 's32[1]{0}', space=sflag, size = 0x4, scoped, tag = 'scoped memory for encoder_forward.1']
    %27 = vsyncpa [#allocation3], 0
    %28 = vsyncpa [#allocation6], 0
    %29 = vsyncpa [#allocation9], 0
    %30 = vsyncpa [#allocation12], 0
    %31 = vsyncpa [#allocation15], 0
    %32 = vsyncpa [#allocation18], 0
    %33 = vsyncpa [#allocation4], 0
    %34 = vsyncpa [#allocation21], 0
    // Predicated region
    $region2: #{encoder_forward.1} parent=1 // pred_check
      _
    $region3: #{encoder_forward.1} parent=1 // pred_check_branch
      %36 = sbr.rel (0) target = $region5
    $region4: #{encoder_forward.1} parent=1 // pred_region
      _
    $region5: #{encoder_forward.1} parent=1 // pred_fallthru
      _
    // Predicated region
    $region6: #{encoder_forward.1} parent=1 // pred_check
      _
    $region7: #{encoder_forward.1} parent=1 // pred_check_branch
      %38 = sbr.rel (0) target = $region9
    $region8: #{encoder_forward.1} parent=1 // pred_region
      _
    $region9: #{encoder_forward.1} parent=1 // pred_fallthru
      _
    // Predicated region
    $region10: #{encoder_forward.1} parent=1 // pred_check
      _
    $region11: #{encoder_forward.1} parent=1 // pred_check_branch
      %40 = sbr.rel (0) target = $region13
    $region12: #{encoder_forward.1} parent=1 // pred_region
      _
    $region13: #{encoder_forward.1} parent=1 // pred_fallthru
      _
    // Predicated region
    $region14: #{encoder_forward.1} parent=1 // pred_check
      _
    $region15: #{encoder_forward.1} parent=1 // pred_check_branch
      %42 = sbr.rel (0) target = $region17
    $region16: #{encoder_forward.1} parent=1 // pred_region
      %s44 = ssub.s32 32, 32
      %45 = vsyncadd [#allocation3], %s44
      %s47 = sshll.u32 [#allocation2], 4
      %s48 = int_to_ptr.vmem [resolvable:$true] %s47
      %50 = dma.hbm_to_vmem [thread:$0]  %s3, 32, %s48, [#allocation3]
    $region17: #{encoder_forward.1} parent=1 // pred_fallthru
      _
    // Predicated region
    $region18: #{encoder_forward.1} parent=1 // pred_check
      _
    $region19: #{encoder_forward.1} parent=1 // pred_check_branch
      %52 = sbr.rel (0) target = $region21
    $region20: #{encoder_forward.1} parent=1 // pred_region
      _
    $region21: #{encoder_forward.1} parent=1 // pred_fallthru
      _
    // Predicated region
    $region22: #{encoder_forward.1} parent=1 // pred_check
      _
    $region23: #{encoder_forward.1} parent=1 // pred_check_branch
      %54 = sbr.rel (0) target = $region25
    $region24: #{encoder_forward.1} parent=1 // pred_region
      %s56 = ssub.s32 20480, 20480
      %57 = vsyncadd [#allocation6], %s56
      %s58 = sshll.u32 [#allocation5], 4
      %s59 = int_to_ptr.vmem [resolvable:$true] %s58
      %64 = dma.hbm_to_vmem [thread:$0]  %s5, 20480, %s59, [#allocation6], 128, 128, 8
    $region25: #{encoder_forward.1} parent=1 // pred_fallthru
      _
    // Predicated region
    $region26: #{encoder_forward.1} parent=1 // pred_check
      _
    $region27: #{encoder_forward.1} parent=1 // pred_check_branch
      %66 = sbr.rel (0) target = $region29
    $region28: #{encoder_forward.1} parent=1 // pred_region
      %s68 = ssub.s32 32, 32
      %69 = vsyncadd [#allocation6], %s68
      %s71 = sshll.u32 [#allocation7], 4
      %s72 = int_to_ptr.vmem [resolvable:$true] %s71
      %74 = dma.hbm_to_vmem [thread:$0]  %s6, 32, %s72, [#allocation6]
    $region29: #{encoder_forward.1} parent=1 // pred_fallthru
      _
    // Predicated region
    $region30: #{encoder_forward.1} parent=1 // pred_check
      _
    $region31: #{encoder_forward.1} parent=1 // pred_check_branch
      %76 = sbr.rel (0) target = $region33
    $region32: #{encoder_forward.1} parent=1 // pred_region
      _
    $region33: #{encoder_forward.1} parent=1 // pred_fallthru
      _
    // Predicated region
    $region34: #{encoder_forward.1} parent=1 // pred_check
      _
    $region35: #{encoder_forward.1} parent=1 // pred_check_branch
      %78 = sbr.rel (0) target = $region37
    $region36: #{encoder_forward.1} parent=1 // pred_region
      %s80 = ssub.s32 10240, 10240
      %81 = vsyncadd [#allocation9], %s80
      %s82 = sshll.u32 [#allocation8], 4
      %s83 = int_to_ptr.vmem [resolvable:$true] %s82
      %88 = dma.hbm_to_vmem [thread:$0]  %s8, 10240, %s83, [#allocation9], 64, 64, 4
    $region37: #{encoder_forward.1} parent=1 // pred_fallthru
      _
    // Predicated region
    $region38: #{encoder_forward.1} parent=1 // pred_check
      _
    $region39: #{encoder_forward.1} parent=1 // pred_check_branch
      %90 = sbr.rel (0) target = $region41
    $region40: #{encoder_forward.1} parent=1 // pred_region
      %s92 = ssub.s32 16, 16
      %93 = vsyncadd [#allocation9], %s92
      %s95 = sshll.u32 [#allocation10], 4
      %s96 = int_to_ptr.vmem [resolvable:$true] %s95
      %98 = dma.hbm_to_vmem [thread:$0]  %s9, 16, %s96, [#allocation9]
    $region41: #{encoder_forward.1} parent=1 // pred_fallthru
      _
    // Predicated region
    $region42: #{encoder_forward.1} parent=1 // pred_check
      _
    $region43: #{encoder_forward.1} parent=1 // pred_check_branch
      %100 = sbr.rel (0) target = $region45
    $region44: #{encoder_forward.1} parent=1 // pred_region
      %s102 = ssub.s32 64, 64
      %103 = vsyncadd [#allocation12], %s102
      %s104 = sshll.u32 [#allocation11], 4
      %s105 = int_to_ptr.vmem [resolvable:$true] %s104
      %110 = dma.hbm_to_vmem [thread:$0]  %s10, 64, %s105, [#allocation12], 16, 16, 1
    $region45: #{encoder_forward.1} parent=1 // pred_fallthru
      _
    // Predicated region
    $region46: #{encoder_forward.1} parent=1 // pred_check
      _
    $region47: #{encoder_forward.1} parent=1 // pred_check_branch
      %112 = sbr.rel (0) target = $region49
    $region48: #{encoder_forward.1} parent=1 // pred_region
      %s114 = ssub.s32 8192, 8192
      %115 = vsyncadd [#allocation12], %s114
      %s116 = sshll.u32 [#allocation13], 4
      %s117 = int_to_ptr.vmem [resolvable:$true] %s116
      %122 = dma.hbm_to_vmem [thread:$0]  %s11, 8192, %s117, [#allocation12], 128, 128, 8
    $region49: #{encoder_forward.1} parent=1 // pred_fallthru
      _
    // Predicated region
    $region50: #{encoder_forward.1} parent=1 // pred_check
      _
    $region51: #{encoder_forward.1} parent=1 // pred_check_branch
      %124 = sbr.rel (0) target = $region53
    $region52: #{encoder_forward.1} parent=1 // pred_region
      %s126 = ssub.s32 32, 32
      %127 = vsyncadd [#allocation15], %s126
      %s129 = sshll.u32 [#allocation14], 4
      %s130 = int_to_ptr.vmem [resolvable:$true] %s129
      %132 = dma.hbm_to_vmem [thread:$0]  %s12, 32, %s130, [#allocation15]
    $region53: #{encoder_forward.1} parent=1 // pred_fallthru
      _
    // Predicated region
    $region54: #{encoder_forward.1} parent=1 // pred_check
      _
    $region55: #{encoder_forward.1} parent=1 // pred_check_branch
      %134 = sbr.rel (0) target = $region57
    $region56: #{encoder_forward.1} parent=1 // pred_region
      _
    $region57: #{encoder_forward.1} parent=1 // pred_fallthru
      _
    // Predicated region
    $region58: #{encoder_forward.1} parent=1 // pred_check
      _
    $region59: #{encoder_forward.1} parent=1 // pred_check_branch
      %136 = sbr.rel (0) target = $region61
    $region60: #{encoder_forward.1} parent=1 // pred_region
      %s138 = ssub.s32 16, 16
      %139 = vsyncadd [#allocation15], %s138
      %s141 = sshll.u32 [#allocation16], 4
      %s142 = int_to_ptr.vmem [resolvable:$true] %s141
      %144 = dma.hbm_to_vmem [thread:$0]  %s14, 16, %s142, [#allocation15]
    $region61: #{encoder_forward.1} parent=1 // pred_fallthru
      _
    // Predicated region
    $region62: #{encoder_forward.1} parent=1 // pred_check
      _
    $region63: #{encoder_forward.1} parent=1 // pred_check_branch
      %146 = sbr.rel (0) target = $region65
    $region64: #{encoder_forward.1} parent=1 // pred_region
      _
    $region65: #{encoder_forward.1} parent=1 // pred_fallthru
      _
    // Predicated region
    $region66: #{encoder_forward.1} parent=1 // pred_check
      _
    $region67: #{encoder_forward.1} parent=1 // pred_check_branch
      %148 = sbr.rel (0) target = $region69
    $region68: #{encoder_forward.1} parent=1 // pred_region
      %s150 = ssub.s32 16, 16
      %151 = vsyncadd [#allocation18], %s150
      %s153 = sshll.u32 [#allocation17], 4
      %s154 = int_to_ptr.vmem [resolvable:$true] %s153
      %156 = dma.hbm_to_vmem [thread:$0]  %s16, 16, %s154, [#allocation18]
    $region69: #{encoder_forward.1} parent=1 // pred_fallthru
      _
    // Predicated region
    $region70: #{encoder_forward.1} parent=1 // pred_check
      _
    $region71: #{encoder_forward.1} parent=1 // pred_check_branch
      %158 = sbr.rel (0) target = $region73
    $region72: #{encoder_forward.1} parent=1 // pred_region
      _
    $region73: #{encoder_forward.1} parent=1 // pred_fallthru
      _
    // Predicated region
    $region74: #{encoder_forward.1} parent=1 // pred_check
      _
    $region75: #{encoder_forward.1} parent=1 // pred_check_branch
      %160 = sbr.rel (0) target = $region77
    $region76: #{encoder_forward.1} parent=1 // pred_region
      %161 = dma.done [#allocation3], 32
    $region77: #{encoder_forward.1} parent=1 // pred_fallthru
      _
    // Predicated region
    $region78: #{encoder_forward.1} parent=1 // pred_check
      _
    $region79: #{encoder_forward.1} parent=1 // pred_check_branch
      %163 = sbr.rel (0) target = $region81
    $region80: #{encoder_forward.1} parent=1 // pred_region
      %164 = dma.done [#allocation6], 20480
    $region81: #{encoder_forward.1} parent=1 // pred_fallthru
      _
    // Predicated region
    $region82: #{encoder_forward.1} parent=1 // pred_check
      _
    $region83: #{encoder_forward.1} parent=1 // pred_check_branch
      %166 = sbr.rel (0) target = $region85
    $region84: #{encoder_forward.1} parent=1 // pred_region
      %167 = dma.done [#allocation6], 32
    $region85: #{encoder_forward.1} parent=1 // pred_fallthru
      _
    // Predicated region
    $region86: #{encoder_forward.1} parent=1 // pred_check
      _
    $region87: #{encoder_forward.1} parent=1 // pred_check_branch
      %169 = sbr.rel (0) target = $region89
    $region88: #{encoder_forward.1} parent=1 // pred_region
      %170 = dma.done [#allocation9], 10240
    $region89: #{encoder_forward.1} parent=1 // pred_fallthru
      _
    // Predicated region
    $region90: #{encoder_forward.1} parent=1 // pred_check
      _
    $region91: #{encoder_forward.1} parent=1 // pred_check_branch
      %172 = sbr.rel (0) target = $region93
    $region92: #{encoder_forward.1} parent=1 // pred_region
      %173 = dma.done [#allocation9], 16
    $region93: #{encoder_forward.1} parent=1 // pred_fallthru
      _
    // Predicated region
    $region94: #{encoder_forward.1} parent=1 // pred_check
      _
    $region95: #{encoder_forward.1} parent=1 // pred_check_branch
      %175 = sbr.rel (0) target = $region97
    $region96: #{encoder_forward.1} parent=1 // pred_region
      %176 = dma.done [#allocation12], 64
    $region97: #{encoder_forward.1} parent=1 // pred_fallthru
      _
    // Predicated region
    $region98: #{encoder_forward.1} parent=1 // pred_check
      _
    $region99: #{encoder_forward.1} parent=1 // pred_check_branch
      %178 = sbr.rel (0) target = $region101
    $region100: #{encoder_forward.1} parent=1 // pred_region
      %179 = dma.done [#allocation12], 8192
    $region101: #{encoder_forward.1} parent=1 // pred_fallthru
      _
    // Predicated region
    $region102: #{encoder_forward.1} parent=1 // pred_check
      _
    $region103: #{encoder_forward.1} parent=1 // pred_check_branch
      %181 = sbr.rel (0) target = $region105
    $region104: #{encoder_forward.1} parent=1 // pred_region
      %182 = dma.done [#allocation15], 32
    $region105: #{encoder_forward.1} parent=1 // pred_fallthru
      _
    // Predicated region
    $region106: #{encoder_forward.1} parent=1 // pred_check
      _
    $region107: #{encoder_forward.1} parent=1 // pred_check_branch
      %184 = sbr.rel (0) target = $region109
    $region108: #{encoder_forward.1} parent=1 // pred_region
      %185 = dma.done [#allocation15], 16
    $region109: #{encoder_forward.1} parent=1 // pred_fallthru
      _
    // Predicated region
    $region110: #{encoder_forward.1} parent=1 // pred_check
      _
    $region111: #{encoder_forward.1} parent=1 // pred_check_branch
      %187 = sbr.rel (0) target = $region113
    $region112: #{encoder_forward.1} parent=1 // pred_region
      %188 = dma.done [#allocation18], 16
    $region113: #{encoder_forward.1} parent=1 // pred_fallthru
      _
    %v190 = vld [vmem:[%s0] sm:$0xff]
    %v191 = vld [vmem:[%s0 + $0x8] sm:$0xff]
    %v192 = vld [vmem:[%s0 + $0x10] sm:$0xff]
    %v193 = vld [vmem:[%s0 + $0x18] sm:$0xff]
    %v194 = vld [vmem:[%s0 + $0x20] sm:$0xff]
    %v195 = vld [vmem:[%s0 + $0x28] sm:$0xff]
    %v196 = vld [vmem:[%s0 + $0x30] sm:$0xff]
    %v197 = vld [vmem:[%s0 + $0x38] sm:$0xff]
    %v198 = vpack.c.bf16 %v191, %v190
    %v199 = vpack.c.bf16 %v193, %v192
    %v200 = vpack.c.bf16 %v195, %v194
    %v201 = vpack.c.bf16 %v197, %v196
    %v202 = vld [vmem:[%s1] sm:$0xf]
    %v203 = vld [vmem:[%s1 + $0x4] sm:$0xf]
    %v204 = vld [vmem:[%s1 + $0x8] sm:$0xf]
    %v205 = vld [vmem:[%s1 + $0xc] sm:$0xf]
    %v210 = vunpack.c.l.b16 %v202
    %v211 = vunpack.c.l.b16 %v203
    %v212 = vunpack.c.l.b16 %v204
    %v213 = vunpack.c.l.b16 %v205
    %v214 = vpack.c.b16 %v211, %v210
    %v215 = vpack.c.b16 %v213, %v212
    %vm216 = vcmask 523264
    %v218 = vsel %vm216, %v214, 0
    %v221 = vsel %vm216, %v215, 0
    %223 = vmatprep.subr.bf16.mxu0 0
    %224 = vmatpush1.bf16.msra.mxu0 %v198
    %225 = vmatprep.subr.bf16.mxu0 0
    %226 = vmatpush1.bf16.msra.mxu0 %v199
    %227 = vmatprep.subr.bf16.mxu0 0
    %228 = vmatpush1.bf16.msra.mxu0 %v200
    %229 = vmatprep.subr.bf16.mxu0 0
    %230 = vmatpush1.bf16.msra.mxu0 %v201
    %231 = vmatprep.subr.bf16.mxu0 0
    %232 = vmatpush1.bf16.msra.mxu0 0
    %233 = vmatprep.subr.bf16.mxu0 0
    %234 = vmatpush1.bf16.msra.mxu0 0
    %235 = vmatprep.subr.bf16.mxu0 0
    %236 = vmatpush1.bf16.msra.mxu0 0
    %237 = vmatprep.subr.bf16.mxu0 0
    %238 = vmatpush1.bf16.msra.mxu0 0
    %239 = vmatprep.subr.bf16.mxu0 0
    %240 = vmatpush1.bf16.msra.mxu0 0
    %241 = vmatprep.subr.bf16.mxu0 0
    %242 = vmatpush1.bf16.msra.mxu0 0
    %243 = vmatprep.subr.bf16.mxu0 0
    %244 = vmatpush1.bf16.msra.mxu0 0
    %245 = vmatprep.subr.bf16.mxu0 0
    %246 = vmatpush1.bf16.msra.mxu0 0
    %247 = vmatprep.subr.bf16.mxu0 0
    %248 = vmatpush1.bf16.msra.mxu0 0
    %249 = vmatprep.subr.bf16.mxu0 0
    %250 = vmatpush1.bf16.msra.mxu0 0
    %251 = vmatprep.subr.bf16.mxu0 0
    %252 = vmatpush1.bf16.msra.mxu0 0
    %253 = vmatprep.subr.bf16.mxu0 0
    %254 = vmatpush1.bf16.msra.mxu0 0
    %255 = vmatprep.mubr.bf16.mxu0 0
    %256 = vmatmul.mubr.bf16.gmra.mrb[0].mxu0 %v218
    %v257 = vpop.f32.mrb[0].mxu0
    %v258 = vadd.f32 0.0, %v257
    %v259 = vpop.f32.mrb[0].mxu0
    %v260 = vpop.f32.mrb[0].mxu0
    %v261 = vadd.f32 0.0, %v260
    %v262 = vpop.f32.mrb[0].mxu0
    %263 = vmatprep.mubr.bf16.mxu0 0
    %264 = vmatmul.mubr.bf16.gmra.mrb[0].mxu0 %v221
    %v265 = vpop.f32.mrb[0].mxu0
    %v266 = vadd.f32 0.0, %v265
    %v267 = vpop.f32.mrb[0].mxu0
    %v268 = vpop.f32.mrb[0].mxu0
    %v269 = vadd.f32 0.0, %v268
    %v270 = vpop.f32.mrb[0].mxu0
    %271 = vdwg.mxu0
    %v272 = vpack.c.bf16 %v261, %v258
    %v273 = vpack.c.bf16 %v269, %v266
    %v274 = vld [vmem:[%s2] sm:$0xff]
    %v275 = vld [vmem:[%s2 + $0x8] sm:$0xff]
    %v276 = vld [vmem:[%s2 + $0x10] sm:$0xff]
    %v277 = vld [vmem:[%s2 + $0x18] sm:$0xff]
    %s278 = scalar_lea.vmem %s1, 16
    %v279 = vld [vmem:[%s278] sm:$0xf]
    %v280 = vld [vmem:[%s278 + $0x4] sm:$0xf]
    %v281 = vld [vmem:[%s278 + $0x8] sm:$0xf]
    %v282 = vld [vmem:[%s278 + $0xc] sm:$0xf]
    %v287 = vunpack.c.l.b16 %v279
    %v288 = vunpack.c.l.b16 %v280
    %v289 = vunpack.c.l.b16 %v281
    %v290 = vunpack.c.l.b16 %v282
    %v291 = vpack.c.b16 %v288, %v287
    %v292 = vpack.c.b16 %v290, %v289
    %v294 = vsel %vm216, %v291, 0
    %v297 = vsel %vm216, %v292, 0
    %299 = vmatprep.subr.bf16.mxu0 0
    %300 = vmatpush1.bf16.msra.mxu0 %v198
    %301 = vmatprep.subr.bf16.mxu0 0
    %302 = vmatpush1.bf16.msra.mxu0 %v199
    %303 = vmatprep.subr.bf16.mxu0 0
    %304 = vmatpush1.bf16.msra.mxu0 %v200
    %305 = vmatprep.subr.bf16.mxu0 0
    %306 = vmatpush1.bf16.msra.mxu0 %v201
    %307 = vmatprep.subr.bf16.mxu0 0
    %308 = vmatpush1.bf16.msra.mxu0 0
    %309 = vmatprep.subr.bf16.mxu0 0
    %310 = vmatpush1.bf16.msra.mxu0 0
    %311 = vmatprep.subr.bf16.mxu0 0
    %312 = vmatpush1.bf16.msra.mxu0 0
    %313 = vmatprep.subr.bf16.mxu0 0
    %314 = vmatpush1.bf16.msra.mxu0 0
    %315 = vmatprep.subr.bf16.mxu0 0
    %316 = vmatpush1.bf16.msra.mxu0 0
    %317 = vmatprep.subr.bf16.mxu0 0
    %318 = vmatpush1.bf16.msra.mxu0 0
    %319 = vmatprep.subr.bf16.mxu0 0
    %320 = vmatpush1.bf16.msra.mxu0 0
    %321 = vmatprep.subr.bf16.mxu0 0
    %322 = vmatpush1.bf16.msra.mxu0 0
    %323 = vmatprep.subr.bf16.mxu0 0
    %324 = vmatpush1.bf16.msra.mxu0 0
    %325 = vmatprep.subr.bf16.mxu0 0
    %326 = vmatpush1.bf16.msra.mxu0 0
    %327 = vmatprep.subr.bf16.mxu0 0
    %328 = vmatpush1.bf16.msra.mxu0 0
    %329 = vmatprep.subr.bf16.mxu0 0
    %330 = vmatpush1.bf16.msra.mxu0 0
    %331 = vmatprep.mubr.bf16.mxu0 0
    %332 = vmatmul.mubr.bf16.gmra.mrb[0].mxu0 %v294
    %v333 = vpop.f32.mrb[0].mxu0
    %v334 = vadd.f32 0.0, %v333
    %v335 = vpop.f32.mrb[0].mxu0
    %v336 = vpop.f32.mrb[0].mxu0
    %v337 = vadd.f32 0.0, %v336
    %v338 = vpop.f32.mrb[0].mxu0
    %339 = vmatprep.mubr.bf16.mxu0 0
    %340 = vmatmul.mubr.bf16.gmra.mrb[0].mxu0 %v297
    %v341 = vpop.f32.mrb[0].mxu0
    %v342 = vadd.f32 0.0, %v341
    %v343 = vpop.f32.mrb[0].mxu0
    %v344 = vpop.f32.mrb[0].mxu0
    %v345 = vadd.f32 0.0, %v344
    %v346 = vpop.f32.mrb[0].mxu0
    %347 = vdwg.mxu0
    %v348 = vpack.c.bf16 %v337, %v334
    %v349 = vpack.c.bf16 %v345, %v342
    %s350 = scalar_lea.vmem %s2, 32
    %v351 = vld [vmem:[%s350] sm:$0xff]
    %v352 = vld [vmem:[%s350 + $0x8] sm:$0xff]
    %v353 = vld [vmem:[%s350 + $0x10] sm:$0xff]
    %v354 = vld [vmem:[%s350 + $0x18] sm:$0xff]
    %v359 = vunpack.c.l.b16 %v351
    %v360 = vunpack.c.h.b16 %v351
    %v361 = vunpack.c.l.b16 %v352
    %v362 = vunpack.c.h.b16 %v352
    %v363 = vunpack.c.l.b16 %v353
    %v364 = vunpack.c.h.b16 %v353
    %v365 = vunpack.c.l.b16 %v354
    %v366 = vunpack.c.h.b16 %v354
    %v367 = vpack.c.b16 %v361, %v359
    %v368 = vpack.c.b16 %v362, %v360
    %v369 = vpack.c.b16 %v365, %v363
    %v370 = vpack.c.b16 %v366, %v364
    %vm375 = vcmask 261120
    %v377 = vsel %vm375, %v348, 0
    %v380 = vsel %vm375, %v349, 0
    %382 = vmatprep.subr.bf16.mxu0 %v368
    %383 = vmatpush1.bf16.msra.mxu0 %v367
    %384 = vmatprep.subr.bf16.mxu0 %v370
    %385 = vmatpush1.bf16.msra.mxu0 %v369
    %386 = vmatprep.subr.bf16.mxu0 0
    %387 = vmatpush1.bf16.msra.mxu0 0
    %388 = vmatprep.subr.bf16.mxu0 0
    %389 = vmatpush1.bf16.msra.mxu0 0
    %390 = vmatprep.subr.bf16.mxu0 0
    %391 = vmatpush1.bf16.msra.mxu0 0
    %392 = vmatprep.subr.bf16.mxu0 0
    %393 = vmatpush1.bf16.msra.mxu0 0
    %394 = vmatprep.subr.bf16.mxu0 0
    %395 = vmatpush1.bf16.msra.mxu0 0
    %396 = vmatprep.subr.bf16.mxu0 0
    %397 = vmatpush1.bf16.msra.mxu0 0
    %398 = vmatprep.subr.bf16.mxu0 0
    %399 = vmatpush1.bf16.msra.mxu0 0
    %400 = vmatprep.subr.bf16.mxu0 0
    %401 = vmatpush1.bf16.msra.mxu0 0
    %402 = vmatprep.subr.bf16.mxu0 0
    %403 = vmatpush1.bf16.msra.mxu0 0
    %404 = vmatprep.subr.bf16.mxu0 0
    %405 = vmatpush1.bf16.msra.mxu0 0
    %406 = vmatprep.subr.bf16.mxu0 0
    %407 = vmatpush1.bf16.msra.mxu0 0
    %408 = vmatprep.subr.bf16.mxu0 0
    %409 = vmatpush1.bf16.msra.mxu0 0
    %410 = vmatprep.subr.bf16.mxu0 0
    %411 = vmatpush1.bf16.msra.mxu0 0
    %412 = vmatprep.subr.bf16.mxu0 0
    %413 = vmatpush1.bf16.msra.mxu0 0
    %414 = vmatprep.mubr.bf16.mxu0 0
    %415 = vmatmul.mubr.bf16.gmra.mrb[0].mxu0 %v377
    %v416 = vpop.f32.mrb[0].mxu0
    %v417 = vadd.f32 0.0, %v416
    %v418 = vpop.f32.mrb[0].mxu0
    %v419 = vadd.f32 0.0, %v418
    %v420 = vpop.f32.mrb[0].mxu0
    %v421 = vadd.f32 0.0, %v420
    %v422 = vpop.f32.mrb[0].mxu0
    %v423 = vadd.f32 0.0, %v422
    %424 = vmatprep.mubr.bf16.mxu0 0
    %425 = vmatmul.mubr.bf16.gmra.mrb[0].mxu0 %v380
    %v426 = vpop.f32.mrb[0].mxu0
    %v427 = vadd.f32 0.0, %v426
    %v428 = vpop.f32.mrb[0].mxu0
    %v429 = vadd.f32 0.0, %v428
    %v430 = vpop.f32.mrb[0].mxu0
    %v431 = vadd.f32 0.0, %v430
    %v432 = vpop.f32.mrb[0].mxu0
    %v433 = vadd.f32 0.0, %v432
    %434 = vdwg.mxu0
    %v439 = vunpack.c.l.b16 %v274
    %v440 = vunpack.c.h.b16 %v274
    %v441 = vunpack.c.l.b16 %v275
    %v442 = vunpack.c.h.b16 %v275
    %v443 = vunpack.c.l.b16 %v276
    %v444 = vunpack.c.h.b16 %v276
    %v445 = vunpack.c.l.b16 %v277
    %v446 = vunpack.c.h.b16 %v277
    %v447 = vpack.c.b16 %v441, %v439
    %v448 = vpack.c.b16 %v442, %v440
    %v449 = vpack.c.b16 %v445, %v443
    %v450 = vpack.c.b16 %v446, %v444
    %v456 = vsel %vm375, %v272, 0
    %v459 = vsel %vm375, %v273, 0
    %461 = vmatprep.subr.bf16.mxu0 %v448
    %462 = vmatpush1.bf16.msra.mxu0 %v447
    %463 = vmatprep.subr.bf16.mxu0 %v450
    %464 = vmatpush1.bf16.msra.mxu0 %v449
    %465 = vmatprep.subr.bf16.mxu0 0
    %466 = vmatpush1.bf16.msra.mxu0 0
    %467 = vmatprep.subr.bf16.mxu0 0
    %468 = vmatpush1.bf16.msra.mxu0 0
    %469 = vmatprep.subr.bf16.mxu0 0
    %470 = vmatpush1.bf16.msra.mxu0 0
    %471 = vmatprep.subr.bf16.mxu0 0
    %472 = vmatpush1.bf16.msra.mxu0 0
    %473 = vmatprep.subr.bf16.mxu0 0
    %474 = vmatpush1.bf16.msra.mxu0 0
    %475 = vmatprep.subr.bf16.mxu0 0
    %476 = vmatpush1.bf16.msra.mxu0 0
    %477 = vmatprep.subr.bf16.mxu0 0
    %478 = vmatpush1.bf16.msra.mxu0 0
    %479 = vmatprep.subr.bf16.mxu0 0
    %480 = vmatpush1.bf16.msra.mxu0 0
    %481 = vmatprep.subr.bf16.mxu0 0
    %482 = vmatpush1.bf16.msra.mxu0 0
    %483 = vmatprep.subr.bf16.mxu0 0
    %484 = vmatpush1.bf16.msra.mxu0 0
    %485 = vmatprep.subr.bf16.mxu0 0
    %486 = vmatpush1.bf16.msra.mxu0 0
    %487 = vmatprep.subr.bf16.mxu0 0
    %488 = vmatpush1.bf16.msra.mxu0 0
    %489 = vmatprep.subr.bf16.mxu0 0
    %490 = vmatpush1.bf16.msra.mxu0 0
    %491 = vmatprep.subr.bf16.mxu0 0
    %492 = vmatpush1.bf16.msra.mxu0 0
    %493 = vmatprep.mubr.bf16.mxu0 0
    %494 = vmatmul.mubr.bf16.gmra.mrb[0].mxu0 %v456
    %v495 = vpop.f32.mrb[0].mxu0
    %v496 = vadd.f32 %v417, %v495
    %v497 = vpop.f32.mrb[0].mxu0
    %v498 = vadd.f32 %v419, %v497
    %v499 = vpop.f32.mrb[0].mxu0
    %v500 = vadd.f32 %v421, %v499
    %v501 = vpop.f32.mrb[0].mxu0
    %v502 = vadd.f32 %v423, %v501
    %503 = vmatprep.mubr.bf16.mxu0 0
    %504 = vmatmul.mubr.bf16.gmra.mrb[0].mxu0 %v459
    %v505 = vpop.f32.mrb[0].mxu0
    %v506 = vadd.f32 %v427, %v505
    %v507 = vpop.f32.mrb[0].mxu0
    %v508 = vadd.f32 %v429, %v507
    %v509 = vpop.f32.mrb[0].mxu0
    %v510 = vadd.f32 %v431, %v509
    %v511 = vpop.f32.mrb[0].mxu0
    %v512 = vadd.f32 %v433, %v511
    %513 = vdwg.mxu0
    %s514 = scalar_lea.vmem %s1, 32
    %v515 = vld [vmem:[%s514] sm:$0xf]
    %v516 = vld [vmem:[%s514 + $0x4] sm:$0xf]
    %v517 = vld [vmem:[%s514 + $0x8] sm:$0xf]
    %v518 = vld [vmem:[%s514 + $0xc] sm:$0xf]
    %v523 = vunpack.c.l.b16 %v515
    %v524 = vunpack.c.l.b16 %v516
    %v525 = vunpack.c.l.b16 %v517
    %v526 = vunpack.c.l.b16 %v518
    %v527 = vpack.c.b16 %v524, %v523
    %v528 = vpack.c.b16 %v526, %v525
    %v530 = vsel %vm216, %v527, 0
    %v533 = vsel %vm216, %v528, 0
    %535 = vmatprep.subr.bf16.mxu0 0
    %536 = vmatpush1.bf16.msra.mxu0 %v198
    %537 = vmatprep.subr.bf16.mxu0 0
    %538 = vmatpush1.bf16.msra.mxu0 %v199
    %539 = vmatprep.subr.bf16.mxu0 0
    %540 = vmatpush1.bf16.msra.mxu0 %v200
    %541 = vmatprep.subr.bf16.mxu0 0
    %542 = vmatpush1.bf16.msra.mxu0 %v201
    %543 = vmatprep.subr.bf16.mxu0 0
    %544 = vmatpush1.bf16.msra.mxu0 0
    %545 = vmatprep.subr.bf16.mxu0 0
    %546 = vmatpush1.bf16.msra.mxu0 0
    %547 = vmatprep.subr.bf16.mxu0 0
    %548 = vmatpush1.bf16.msra.mxu0 0
    %549 = vmatprep.subr.bf16.mxu0 0
    %550 = vmatpush1.bf16.msra.mxu0 0
    %551 = vmatprep.subr.bf16.mxu0 0
    %552 = vmatpush1.bf16.msra.mxu0 0
    %553 = vmatprep.subr.bf16.mxu0 0
    %554 = vmatpush1.bf16.msra.mxu0 0
    %555 = vmatprep.subr.bf16.mxu0 0
    %556 = vmatpush1.bf16.msra.mxu0 0
    %557 = vmatprep.subr.bf16.mxu0 0
    %558 = vmatpush1.bf16.msra.mxu0 0
    %559 = vmatprep.subr.bf16.mxu0 0
    %560 = vmatpush1.bf16.msra.mxu0 0
    %561 = vmatprep.subr.bf16.mxu0 0
    %562 = vmatpush1.bf16.msra.mxu0 0
    %563 = vmatprep.subr.bf16.mxu0 0
    %564 = vmatpush1.bf16.msra.mxu0 0
    %565 = vmatprep.subr.bf16.mxu0 0
    %566 = vmatpush1.bf16.msra.mxu0 0
    %567 = vmatprep.mubr.bf16.mxu0 0
    %568 = vmatmul.mubr.bf16.gmra.mrb[0].mxu0 %v530
    %v569 = vpop.f32.mrb[0].mxu0
    %v570 = vadd.f32 0.0, %v569
    %v571 = vpop.f32.mrb[0].mxu0
    %v572 = vpop.f32.mrb[0].mxu0
    %v573 = vadd.f32 0.0, %v572
    %v574 = vpop.f32.mrb[0].mxu0
    %575 = vmatprep.mubr.bf16.mxu0 0
    %576 = vmatmul.mubr.bf16.gmra.mrb[0].mxu0 %v533
    %v577 = vpop.f32.mrb[0].mxu0
    %v578 = vadd.f32 0.0, %v577
    %v579 = vpop.f32.mrb[0].mxu0
    %v580 = vpop.f32.mrb[0].mxu0
    %v581 = vadd.f32 0.0, %v580
    %v582 = vpop.f32.mrb[0].mxu0
    %583 = vdwg.mxu0
    %v584 = vpack.c.bf16 %v573, %v570
    %v585 = vpack.c.bf16 %v581, %v578
    %s586 = scalar_lea.vmem %s2, 64
    %v587 = vld [vmem:[%s586] sm:$0xff]
    %v588 = vld [vmem:[%s586 + $0x8] sm:$0xff]
    %v589 = vld [vmem:[%s586 + $0x10] sm:$0xff]
    %v590 = vld [vmem:[%s586 + $0x18] sm:$0xff]
    %v595 = vunpack.c.l.b16 %v587
    %v596 = vunpack.c.h.b16 %v587
    %v597 = vunpack.c.l.b16 %v588
    %v598 = vunpack.c.h.b16 %v588
    %v599 = vunpack.c.l.b16 %v589
    %v600 = vunpack.c.h.b16 %v589
    %v601 = vunpack.c.l.b16 %v590
    %v602 = vunpack.c.h.b16 %v590
    %v603 = vpack.c.b16 %v597, %v595
    %v604 = vpack.c.b16 %v598, %v596
    %v605 = vpack.c.b16 %v601, %v599
    %v606 = vpack.c.b16 %v602, %v600
    %v612 = vsel %vm375, %v584, 0
    %v615 = vsel %vm375, %v585, 0
    %617 = vmatprep.subr.bf16.mxu0 %v604
    %618 = vmatpush1.bf16.msra.mxu0 %v603
    %619 = vmatprep.subr.bf16.mxu0 %v606
    %620 = vmatpush1.bf16.msra.mxu0 %v605
    %621 = vmatprep.subr.bf16.mxu0 0
    %622 = vmatpush1.bf16.msra.mxu0 0
    %623 = vmatprep.subr.bf16.mxu0 0
    %624 = vmatpush1.bf16.msra.mxu0 0
    %625 = vmatprep.subr.bf16.mxu0 0
    %626 = vmatpush1.bf16.msra.mxu0 0
    %627 = vmatprep.subr.bf16.mxu0 0
    %628 = vmatpush1.bf16.msra.mxu0 0
    %629 = vmatprep.subr.bf16.mxu0 0
    %630 = vmatpush1.bf16.msra.mxu0 0
    %631 = vmatprep.subr.bf16.mxu0 0
    %632 = vmatpush1.bf16.msra.mxu0 0
    %633 = vmatprep.subr.bf16.mxu0 0
    %634 = vmatpush1.bf16.msra.mxu0 0
    %635 = vmatprep.subr.bf16.mxu0 0
    %636 = vmatpush1.bf16.msra.mxu0 0
    %637 = vmatprep.subr.bf16.mxu0 0
    %638 = vmatpush1.bf16.msra.mxu0 0
    %639 = vmatprep.subr.bf16.mxu0 0
    %640 = vmatpush1.bf16.msra.mxu0 0
    %641 = vmatprep.subr.bf16.mxu0 0
    %642 = vmatpush1.bf16.msra.mxu0 0
    %643 = vmatprep.subr.bf16.mxu0 0
    %644 = vmatpush1.bf16.msra.mxu0 0
    %645 = vmatprep.subr.bf16.mxu0 0
    %646 = vmatpush1.bf16.msra.mxu0 0
    %647 = vmatprep.subr.bf16.mxu0 0
    %648 = vmatpush1.bf16.msra.mxu0 0
    %649 = vmatprep.mubr.bf16.mxu0 0
    %650 = vmatmul.mubr.bf16.gmra.mrb[0].mxu0 %v612
    %v651 = vpop.f32.mrb[0].mxu0
    %v652 = vadd.f32 0.0, %v651
    %v653 = vpop.f32.mrb[0].mxu0
    %v654 = vadd.f32 0.0, %v653
    %v655 = vpop.f32.mrb[0].mxu0
    %v656 = vadd.f32 0.0, %v655
    %v657 = vpop.f32.mrb[0].mxu0
    %v658 = vadd.f32 0.0, %v657
    %659 = vmatprep.mubr.bf16.mxu0 0
    %660 = vmatmul.mubr.bf16.gmra.mrb[0].mxu0 %v615
    %v661 = vpop.f32.mrb[0].mxu0
    %v662 = vadd.f32 0.0, %v661
    %v663 = vpop.f32.mrb[0].mxu0
    %v664 = vadd.f32 0.0, %v663
    %v665 = vpop.f32.mrb[0].mxu0
    %v666 = vadd.f32 0.0, %v665
    %v667 = vpop.f32.mrb[0].mxu0
    %v668 = vadd.f32 0.0, %v667
    %669 = vdwg.mxu0
    %v670 = vadd.f32 %v496, %v652
    %v671 = vadd.f32 %v498, %v654
    %v672 = vadd.f32 %v500, %v656
    %v673 = vadd.f32 %v502, %v658
    %v674 = vadd.f32 %v506, %v662
    %v675 = vadd.f32 %v508, %v664
    %v676 = vadd.f32 %v510, %v666
    %v677 = vadd.f32 %v512, %v668
    %s678 = scalar_lea.vmem %s1, 48
    %v679 = vld [vmem:[%s678] sm:$0xf]
    %v680 = vld [vmem:[%s678 + $0x4] sm:$0xf]
    %v681 = vld [vmem:[%s678 + $0x8] sm:$0xf]
    %v682 = vld [vmem:[%s678 + $0xc] sm:$0xf]
    %v687 = vunpack.c.l.b16 %v679
    %v688 = vunpack.c.l.b16 %v680
    %v689 = vunpack.c.l.b16 %v681
    %v690 = vunpack.c.l.b16 %v682
    %v691 = vpack.c.b16 %v688, %v687
    %v692 = vpack.c.b16 %v690, %v689
    %v694 = vsel %vm216, %v691, 0
    %v697 = vsel %vm216, %v692, 0
    %699 = vmatprep.subr.bf16.mxu0 0
    %700 = vmatpush1.bf16.msra.mxu0 %v198
    %701 = vmatprep.subr.bf16.mxu0 0
    %702 = vmatpush1.bf16.msra.mxu0 %v199
    %703 = vmatprep.subr.bf16.mxu0 0
    %704 = vmatpush1.bf16.msra.mxu0 %v200
    %705 = vmatprep.subr.bf16.mxu0 0
    %706 = vmatpush1.bf16.msra.mxu0 %v201
    %707 = vmatprep.subr.bf16.mxu0 0
    %708 = vmatpush1.bf16.msra.mxu0 0
    %709 = vmatprep.subr.bf16.mxu0 0
    %710 = vmatpush1.bf16.msra.mxu0 0
    %711 = vmatprep.subr.bf16.mxu0 0
    %712 = vmatpush1.bf16.msra.mxu0 0
    %713 = vmatprep.subr.bf16.mxu0 0
    %714 = vmatpush1.bf16.msra.mxu0 0
    %715 = vmatprep.subr.bf16.mxu0 0
    %716 = vmatpush1.bf16.msra.mxu0 0
    %717 = vmatprep.subr.bf16.mxu0 0
    %718 = vmatpush1.bf16.msra.mxu0 0
    %719 = vmatprep.subr.bf16.mxu0 0
    %720 = vmatpush1.bf16.msra.mxu0 0
    %721 = vmatprep.subr.bf16.mxu0 0
    %722 = vmatpush1.bf16.msra.mxu0 0
    %723 = vmatprep.subr.bf16.mxu0 0
    %724 = vmatpush1.bf16.msra.mxu0 0
    %725 = vmatprep.subr.bf16.mxu0 0
    %726 = vmatpush1.bf16.msra.mxu0 0
    %727 = vmatprep.subr.bf16.mxu0 0
    %728 = vmatpush1.bf16.msra.mxu0 0
    %729 = vmatprep.subr.bf16.mxu0 0
    %730 = vmatpush1.bf16.msra.mxu0 0
    %731 = vmatprep.mubr.bf16.mxu0 0
    %732 = vmatmul.mubr.bf16.gmra.mrb[0].mxu0 %v694
    %v733 = vpop.f32.mrb[0].mxu0
    %v734 = vadd.f32 0.0, %v733
    %v735 = vpop.f32.mrb[0].mxu0
    %v736 = vpop.f32.mrb[0].mxu0
    %v737 = vadd.f32 0.0, %v736
    %v738 = vpop.f32.mrb[0].mxu0
    %739 = vmatprep.mubr.bf16.mxu0 0
    %740 = vmatmul.mubr.bf16.gmra.mrb[0].mxu0 %v697
    %v741 = vpop.f32.mrb[0].mxu0
    %v742 = vadd.f32 0.0, %v741
    %v743 = vpop.f32.mrb[0].mxu0
    %v744 = vpop.f32.mrb[0].mxu0
    %v745 = vadd.f32 0.0, %v744
    %v746 = vpop.f32.mrb[0].mxu0
    %747 = vdwg.mxu0
    %v748 = vpack.c.bf16 %v737, %v734
    %v749 = vpack.c.bf16 %v745, %v742
    %s750 = scalar_lea.vmem %s2, 96
    %v751 = vld [vmem:[%s750] sm:$0xff]
    %v752 = vld [vmem:[%s750 + $0x8] sm:$0xff]
    %v753 = vld [vmem:[%s750 + $0x10] sm:$0xff]
    %v754 = vld [vmem:[%s750 + $0x18] sm:$0xff]
    %v759 = vunpack.c.l.b16 %v751
    %v760 = vunpack.c.h.b16 %v751
    %v761 = vunpack.c.l.b16 %v752
    %v762 = vunpack.c.h.b16 %v752
    %v763 = vunpack.c.l.b16 %v753
    %v764 = vunpack.c.h.b16 %v753
    %v765 = vunpack.c.l.b16 %v754
    %v766 = vunpack.c.h.b16 %v754
    %v767 = vpack.c.b16 %v761, %v759
    %v768 = vpack.c.b16 %v762, %v760
    %v769 = vpack.c.b16 %v765, %v763
    %v770 = vpack.c.b16 %v766, %v764
    %v776 = vsel %vm375, %v748, 0
    %v779 = vsel %vm375, %v749, 0
    %781 = vmatprep.subr.bf16.mxu0 %v768
    %782 = vmatpush1.bf16.msra.mxu0 %v767
    %783 = vmatprep.subr.bf16.mxu0 %v770
    %784 = vmatpush1.bf16.msra.mxu0 %v769
    %785 = vmatprep.subr.bf16.mxu0 0
    %786 = vmatpush1.bf16.msra.mxu0 0
    %787 = vmatprep.subr.bf16.mxu0 0
    %788 = vmatpush1.bf16.msra.mxu0 0
    %789 = vmatprep.subr.bf16.mxu0 0
    %790 = vmatpush1.bf16.msra.mxu0 0
    %791 = vmatprep.subr.bf16.mxu0 0
    %792 = vmatpush1.bf16.msra.mxu0 0
    %793 = vmatprep.subr.bf16.mxu0 0
    %794 = vmatpush1.bf16.msra.mxu0 0
    %795 = vmatprep.subr.bf16.mxu0 0
    %796 = vmatpush1.bf16.msra.mxu0 0
    %797 = vmatprep.subr.bf16.mxu0 0
    %798 = vmatpush1.bf16.msra.mxu0 0
    %799 = vmatprep.subr.bf16.mxu0 0
    %800 = vmatpush1.bf16.msra.mxu0 0
    %801 = vmatprep.subr.bf16.mxu0 0
    %802 = vmatpush1.bf16.msra.mxu0 0
    %803 = vmatprep.subr.bf16.mxu0 0
    %804 = vmatpush1.bf16.msra.mxu0 0
    %805 = vmatprep.subr.bf16.mxu0 0
    %806 = vmatpush1.bf16.msra.mxu0 0
    %807 = vmatprep.subr.bf16.mxu0 0
    %808 = vmatpush1.bf16.msra.mxu0 0
    %809 = vmatprep.subr.bf16.mxu0 0
    %810 = vmatpush1.bf16.msra.mxu0 0
    %811 = vmatprep.subr.bf16.mxu0 0
    %812 = vmatpush1.bf16.msra.mxu0 0
    %813 = vmatprep.mubr.bf16.mxu0 0
    %814 = vmatmul.mubr.bf16.gmra.mrb[0].mxu0 %v776
    %v815 = vpop.f32.mrb[0].mxu0
    %v816 = vadd.f32 0.0, %v815
    %v817 = vpop.f32.mrb[0].mxu0
    %v818 = vadd.f32 0.0, %v817
    %v819 = vpop.f32.mrb[0].mxu0
    %v820 = vadd.f32 0.0, %v819
    %v821 = vpop.f32.mrb[0].mxu0
    %v822 = vadd.f32 0.0, %v821
    %823 = vmatprep.mubr.bf16.mxu0 0
    %824 = vmatmul.mubr.bf16.gmra.mrb[0].mxu0 %v779
    %v825 = vpop.f32.mrb[0].mxu0
    %v826 = vadd.f32 0.0, %v825
    %v827 = vpop.f32.mrb[0].mxu0
    %v828 = vadd.f32 0.0, %v827
    %v829 = vpop.f32.mrb[0].mxu0
    %v830 = vadd.f32 0.0, %v829
    %v831 = vpop.f32.mrb[0].mxu0
    %v832 = vadd.f32 0.0, %v831
    %833 = vdwg.mxu0
    %v834 = vadd.f32 %v670, %v816
    %v835 = vadd.f32 %v671, %v818
    %v836 = vadd.f32 %v672, %v820
    %v837 = vadd.f32 %v673, %v822
    %v838 = vadd.f32 %v674, %v826
    %v839 = vadd.f32 %v675, %v828
    %v840 = vadd.f32 %v676, %v830
    %v841 = vadd.f32 %v677, %v832
    %s842 = scalar_lea.vmem %s1, 64
    %v843 = vld [vmem:[%s842] sm:$0xf]
    %v844 = vld [vmem:[%s842 + $0x4] sm:$0xf]
    %v845 = vld [vmem:[%s842 + $0x8] sm:$0xf]
    %v846 = vld [vmem:[%s842 + $0xc] sm:$0xf]
    %v851 = vunpack.c.l.b16 %v843
    %v852 = vunpack.c.l.b16 %v844
    %v853 = vunpack.c.l.b16 %v845
    %v854 = vunpack.c.l.b16 %v846
    %v855 = vpack.c.b16 %v852, %v851
    %v856 = vpack.c.b16 %v854, %v853
    %v858 = vsel %vm216, %v855, 0
    %v861 = vsel %vm216, %v856, 0
    %863 = vmatprep.subr.bf16.mxu0 0
    %864 = vmatpush1.bf16.msra.mxu0 %v198
    %865 = vmatprep.subr.bf16.mxu0 0
    %866 = vmatpush1.bf16.msra.mxu0 %v199
    %867 = vmatprep.subr.bf16.mxu0 0
    %868 = vmatpush1.bf16.msra.mxu0 %v200
    %869 = vmatprep.subr.bf16.mxu0 0
    %870 = vmatpush1.bf16.msra.mxu0 %v201
    %871 = vmatprep.subr.bf16.mxu0 0
    %872 = vmatpush1.bf16.msra.mxu0 0
    %873 = vmatprep.subr.bf16.mxu0 0
    %874 = vmatpush1.bf16.msra.mxu0 0
    %875 = vmatprep.subr.bf16.mxu0 0
    %876 = vmatpush1.bf16.msra.mxu0 0
    %877 = vmatprep.subr.bf16.mxu0 0
    %878 = vmatpush1.bf16.msra.mxu0 0
    %879 = vmatprep.subr.bf16.mxu0 0
    %880 = vmatpush1.bf16.msra.mxu0 0
    %881 = vmatprep.subr.bf16.mxu0 0
    %882 = vmatpush1.bf16.msra.mxu0 0
    %883 = vmatprep.subr.bf16.mxu0 0
    %884 = vmatpush1.bf16.msra.mxu0 0
    %885 = vmatprep.subr.bf16.mxu0 0
    %886 = vmatpush1.bf16.msra.mxu0 0
    %887 = vmatprep.subr.bf16.mxu0 0
    %888 = vmatpush1.bf16.msra.mxu0 0
    %889 = vmatprep.subr.bf16.mxu0 0
    %890 = vmatpush1.bf16.msra.mxu0 0
    %891 = vmatprep.subr.bf16.mxu0 0
    %892 = vmatpush1.bf16.msra.mxu0 0
    %893 = vmatprep.subr.bf16.mxu0 0
    %894 = vmatpush1.bf16.msra.mxu0 0
    %895 = vmatprep.mubr.bf16.mxu0 0
    %896 = vmatmul.mubr.bf16.gmra.mrb[0].mxu0 %v858
    %v897 = vpop.f32.mrb[0].mxu0
    %v898 = vadd.f32 0.0, %v897
    %v899 = vpop.f32.mrb[0].mxu0
    %v900 = vpop.f32.mrb[0].mxu0
    %v901 = vadd.f32 0.0, %v900
    %v902 = vpop.f32.mrb[0].mxu0
    %903 = vmatprep.mubr.bf16.mxu0 0
    %904 = vmatmul.mubr.bf16.gmra.mrb[0].mxu0 %v861
    %v905 = vpop.f32.mrb[0].mxu0
    %v906 = vadd.f32 0.0, %v905
    %v907 = vpop.f32.mrb[0].mxu0
    %v908 = vpop.f32.mrb[0].mxu0
    %v909 = vadd.f32 0.0, %v908
    %v910 = vpop.f32.mrb[0].mxu0
    %911 = vdwg.mxu0
    %v912 = vpack.c.bf16 %v901, %v898
    %v913 = vpack.c.bf16 %v909, %v906
    %s914 = scalar_lea.vmem %s2, 128
    %v915 = vld [vmem:[%s914] sm:$0xff]
    %v916 = vld [vmem:[%s914 + $0x8] sm:$0xff]
    %v917 = vld [vmem:[%s914 + $0x10] sm:$0xff]
    %v918 = vld [vmem:[%s914 + $0x18] sm:$0xff]
    %v923 = vunpack.c.l.b16 %v915
    %v924 = vunpack.c.h.b16 %v915
    %v925 = vunpack.c.l.b16 %v916
    %v926 = vunpack.c.h.b16 %v916
    %v927 = vunpack.c.l.b16 %v917
    %v928 = vunpack.c.h.b16 %v917
    %v929 = vunpack.c.l.b16 %v918
    %v930 = vunpack.c.h.b16 %v918
    %v931 = vpack.c.b16 %v925, %v923
    %v932 = vpack.c.b16 %v926, %v924
    %v933 = vpack.c.b16 %v929, %v927
    %v934 = vpack.c.b16 %v930, %v928
    %v940 = vsel %vm375, %v912, 0
    %v943 = vsel %vm375, %v913, 0
    %945 = vmatprep.subr.bf16.mxu0 %v932
    %946 = vmatpush1.bf16.msra.mxu0 %v931
    %947 = vmatprep.subr.bf16.mxu0 %v934
    %948 = vmatpush1.bf16.msra.mxu0 %v933
    %949 = vmatprep.subr.bf16.mxu0 0
    %950 = vmatpush1.bf16.msra.mxu0 0
    %951 = vmatprep.subr.bf16.mxu0 0
    %952 = vmatpush1.bf16.msra.mxu0 0
    %953 = vmatprep.subr.bf16.mxu0 0
    %954 = vmatpush1.bf16.msra.mxu0 0
    %955 = vmatprep.subr.bf16.mxu0 0
    %956 = vmatpush1.bf16.msra.mxu0 0
    %957 = vmatprep.subr.bf16.mxu0 0
    %958 = vmatpush1.bf16.msra.mxu0 0
    %959 = vmatprep.subr.bf16.mxu0 0
    %960 = vmatpush1.bf16.msra.mxu0 0
    %961 = vmatprep.subr.bf16.mxu0 0
    %962 = vmatpush1.bf16.msra.mxu0 0
    %963 = vmatprep.subr.bf16.mxu0 0
    %964 = vmatpush1.bf16.msra.mxu0 0
    %965 = vmatprep.subr.bf16.mxu0 0
    %966 = vmatpush1.bf16.msra.mxu0 0
    %967 = vmatprep.subr.bf16.mxu0 0
    %968 = vmatpush1.bf16.msra.mxu0 0
    %969 = vmatprep.subr.bf16.mxu0 0
    %970 = vmatpush1.bf16.msra.mxu0 0
    %971 = vmatprep.subr.bf16.mxu0 0
    %972 = vmatpush1.bf16.msra.mxu0 0
    %973 = vmatprep.subr.bf16.mxu0 0
    %974 = vmatpush1.bf16.msra.mxu0 0
    %975 = vmatprep.subr.bf16.mxu0 0
    %976 = vmatpush1.bf16.msra.mxu0 0
    %977 = vmatprep.mubr.bf16.mxu0 0
    %978 = vmatmul.mubr.bf16.gmra.mrb[0].mxu0 %v940
    %v979 = vpop.f32.mrb[0].mxu0
    %v980 = vadd.f32 0.0, %v979
    %v981 = vpop.f32.mrb[0].mxu0
    %v982 = vadd.f32 0.0, %v981
    %v983 = vpop.f32.mrb[0].mxu0
    %v984 = vadd.f32 0.0, %v983
    %v985 = vpop.f32.mrb[0].mxu0
    %v986 = vadd.f32 0.0, %v985
    %987 = vmatprep.mubr.bf16.mxu0 0
    %988 = vmatmul.mubr.bf16.gmra.mrb[0].mxu0 %v943
    %v989 = vpop.f32.mrb[0].mxu0
    %v990 = vadd.f32 0.0, %v989
    %v991 = vpop.f32.mrb[0].mxu0
    %v992 = vadd.f32 0.0, %v991
    %v993 = vpop.f32.mrb[0].mxu0
    %v994 = vadd.f32 0.0, %v993
    %v995 = vpop.f32.mrb[0].mxu0
    %v996 = vadd.f32 0.0, %v995
    %997 = vdwg.mxu0
    %v998 = vadd.f32 %v834, %v980
    %v999 = vadd.f32 %v835, %v982
    %v1000 = vadd.f32 %v836, %v984
    %v1001 = vadd.f32 %v837, %v986
    %v1002 = vadd.f32 %v838, %v990
    %v1003 = vadd.f32 %v839, %v992
    %v1004 = vadd.f32 %v840, %v994
    %v1005 = vadd.f32 %v841, %v996
    %v1006 = vld [vmem:[#allocation2] sm:$0x3]
    %v1008 = vlaneseq
    %v1009 = vshrl.u32 %v1008, 7
    %v1010 = vsub.s32 0, %v1009
    %v1011 = vrot.slane %v1006, %v1010
    %v1012 = vlaneseq
    %v1013 = vshrl.u32 %v1012, 7
    %v1014 = vsub.s32 1, %v1013
    %v1015 = vrot.slane %v1006, %v1014
    %v1018 = vadd.f32 %v998, %v1011
    %v1019 = vadd.f32 %v999, %v1015
    %v1020 = vadd.f32 %v1000, %v1011
    %v1021 = vadd.f32 %v1001, %v1015
    %v1022 = vadd.f32 %v1002, %v1011
    %v1023 = vadd.f32 %v1003, %v1015
    %v1024 = vadd.f32 %v1004, %v1011
    %v1025 = vadd.f32 %v1005, %v1015
    %v1026 = vmax.f32 %v1018, 0.0
    %v1027 = vmax.f32 %v1019, 0.0
    %v1028 = vmax.f32 %v1020, 0.0
    %v1029 = vmax.f32 %v1021, 0.0
    %v1030 = vmax.f32 %v1022, 0.0
    %v1031 = vmax.f32 %v1023, 0.0
    %v1032 = vmax.f32 %v1024, 0.0
    %v1033 = vmax.f32 %v1025, 0.0
    %v1034 = vpack.c.bf16 %v1028, %v1026
    %v1035 = vpack.c.bf16 %v1029, %v1027
    %v1036 = vpack.c.bf16 %v1032, %v1030
    %v1037 = vpack.c.bf16 %v1033, %v1031
    %v1038 = vld [vmem:[%s4] sm:$0xf]
    %v1039 = vld [vmem:[%s4 + $0x4] sm:$0xf]
    %v1042 = vunpack.c.l.b16 %v1038
    %v1043 = vunpack.c.l.b16 %v1039
    %v1044 = vpack.c.b16 %v1043, %v1042
    %v1046 = vsel %vm375, %v1044, 0
    %1048 = vmatprep.subr.bf16.mxu0 %v1035
    %1049 = vmatpush1.bf16.msra.mxu0 %v1034
    %1050 = vmatprep.subr.bf16.mxu0 %v1037
    %1051 = vmatpush1.bf16.msra.mxu0 %v1036
    %1052 = vmatprep.subr.bf16.mxu0 0
    %1053 = vmatpush1.bf16.msra.mxu0 0
    %1054 = vmatprep.subr.bf16.mxu0 0
    %1055 = vmatpush1.bf16.msra.mxu0 0
    %1056 = vmatprep.subr.bf16.mxu0 0
    %1057 = vmatpush1.bf16.msra.mxu0 0
    %1058 = vmatprep.subr.bf16.mxu0 0
    %1059 = vmatpush1.bf16.msra.mxu0 0
    %1060 = vmatprep.subr.bf16.mxu0 0
    %1061 = vmatpush1.bf16.msra.mxu0 0
    %1062 = vmatprep.subr.bf16.mxu0 0
    %1063 = vmatpush1.bf16.msra.mxu0 0
    %1064 = vmatprep.subr.bf16.mxu0 0
    %1065 = vmatpush1.bf16.msra.mxu0 0
    %1066 = vmatprep.subr.bf16.mxu0 0
    %1067 = vmatpush1.bf16.msra.mxu0 0
    %1068 = vmatprep.subr.bf16.mxu0 0
    %1069 = vmatpush1.bf16.msra.mxu0 0
    %1070 = vmatprep.subr.bf16.mxu0 0
    %1071 = vmatpush1.bf16.msra.mxu0 0
    %1072 = vmatprep.subr.bf16.mxu0 0
    %1073 = vmatpush1.bf16.msra.mxu0 0
    %1074 = vmatprep.subr.bf16.mxu0 0
    %1075 = vmatpush1.bf16.msra.mxu0 0
    %1076 = vmatprep.subr.bf16.mxu0 0
    %1077 = vmatpush1.bf16.msra.mxu0 0
    %1078 = vmatprep.subr.bf16.mxu0 0
    %1079 = vmatpush1.bf16.msra.mxu0 0
    %1080 = vmatprep.mubr.bf16.mxu0 0
    %1081 = vmatmul.mubr.bf16.gmra.mrb[0].mxu0 %v1046
    %v1082 = vpop.f32.mrb[0].mxu0
    %v1083 = vadd.f32 0.0, %v1082
    %v1084 = vpop.f32.mrb[0].mxu0
    %v1085 = vadd.f32 0.0, %v1084
    %v1086 = vpop.f32.mrb[0].mxu0
    %v1087 = vadd.f32 0.0, %v1086
    %v1088 = vpop.f32.mrb[0].mxu0
    %v1089 = vadd.f32 0.0, %v1088
    %1090 = vdwg.mxu0
    %v1091 = vpack.c.bf16 %v1087, %v1083
    %v1092 = vpack.c.bf16 %v1089, %v1085
    %v1093 = vld [vmem:[#allocation5] sm:$0xff]
    %v1094 = vld [vmem:[#allocation5 + $0x8] sm:$0xff]
    %v1095 = vld [vmem:[#allocation5 + $0x10] sm:$0xff]
    %v1096 = vld [vmem:[#allocation5 + $0x18] sm:$0xff]
    %v1097 = vld [vmem:[#allocation5 + $0x20] sm:$0xff]
    %v1098 = vld [vmem:[#allocation5 + $0x28] sm:$0xff]
    %v1099 = vld [vmem:[#allocation5 + $0x30] sm:$0xff]
    %v1100 = vld [vmem:[#allocation5 + $0x38] sm:$0xff]
    %v1101 = vld [vmem:[#allocation5 + $0x40] sm:$0xff]
    %v1102 = vld [vmem:[#allocation5 + $0x48] sm:$0xff]
    %v1103 = vld [vmem:[#allocation5 + $0x50] sm:$0xff]
    %v1104 = vld [vmem:[#allocation5 + $0x58] sm:$0xff]
    %v1105 = vld [vmem:[#allocation5 + $0x60] sm:$0xff]
    %v1106 = vld [vmem:[#allocation5 + $0x68] sm:$0xff]
    %v1107 = vld [vmem:[#allocation5 + $0x70] sm:$0xff]
    %v1108 = vld [vmem:[#allocation5 + $0x78] sm:$0xff]
    %v1109 = vld [vmem:[#allocation5 + $0x80] sm:$0xff]
    %v1110 = vld [vmem:[#allocation5 + $0x88] sm:$0xff]
    %v1111 = vld [vmem:[#allocation5 + $0x90] sm:$0xff]
    %v1112 = vld [vmem:[#allocation5 + $0x98] sm:$0xff]
    %v1113 = vld [vmem:[#allocation5 + $0xa0] sm:$0xff]
    %v1114 = vld [vmem:[#allocation5 + $0xa8] sm:$0xff]
    %v1115 = vld [vmem:[#allocation5 + $0xb0] sm:$0xff]
    %v1116 = vld [vmem:[#allocation5 + $0xb8] sm:$0xff]
    %v1117 = vld [vmem:[#allocation5 + $0xc0] sm:$0xff]
    %v1118 = vld [vmem:[#allocation5 + $0xc8] sm:$0xff]
    %v1119 = vld [vmem:[#allocation5 + $0xd0] sm:$0xff]
    %v1120 = vld [vmem:[#allocation5 + $0xd8] sm:$0xff]
    %v1121 = vld [vmem:[#allocation5 + $0xe0] sm:$0xff]
    %v1122 = vld [vmem:[#allocation5 + $0xe8] sm:$0xff]
    %v1123 = vld [vmem:[#allocation5 + $0xf0] sm:$0xff]
    %v1124 = vld [vmem:[#allocation5 + $0xf8] sm:$0xff]
    %s1125 = scalar_lea.vmem %s4, 8
    %v1126 = vld [vmem:[%s1125] sm:$0xf]
    %v1127 = vld [vmem:[%s1125 + $0x4] sm:$0xf]
    %v1130 = vunpack.c.l.b16 %v1126
    %v1131 = vunpack.c.l.b16 %v1127
    %v1132 = vpack.c.b16 %v1131, %v1130
    %v1134 = vsel %vm375, %v1132, 0
    %1136 = vmatprep.subr.bf16.mxu0 %v1035
    %1137 = vmatpush1.bf16.msra.mxu0 %v1034
    %1138 = vmatprep.subr.bf16.mxu0 %v1037
    %1139 = vmatpush1.bf16.msra.mxu0 %v1036
    %1140 = vmatprep.subr.bf16.mxu0 0
    %1141 = vmatpush1.bf16.msra.mxu0 0
    %1142 = vmatprep.subr.bf16.mxu0 0
    %1143 = vmatpush1.bf16.msra.mxu0 0
    %1144 = vmatprep.subr.bf16.mxu0 0
    %1145 = vmatpush1.bf16.msra.mxu0 0
    %1146 = vmatprep.subr.bf16.mxu0 0
    %1147 = vmatpush1.bf16.msra.mxu0 0
    %1148 = vmatprep.subr.bf16.mxu0 0
    %1149 = vmatpush1.bf16.msra.mxu0 0
    %1150 = vmatprep.subr.bf16.mxu0 0
    %1151 = vmatpush1.bf16.msra.mxu0 0
    %1152 = vmatprep.subr.bf16.mxu0 0
    %1153 = vmatpush1.bf16.msra.mxu0 0
    %1154 = vmatprep.subr.bf16.mxu0 0
    %1155 = vmatpush1.bf16.msra.mxu0 0
    %1156 = vmatprep.subr.bf16.mxu0 0
    %1157 = vmatpush1.bf16.msra.mxu0 0
    %1158 = vmatprep.subr.bf16.mxu0 0
    %1159 = vmatpush1.bf16.msra.mxu0 0
    %1160 = vmatprep.subr.bf16.mxu0 0
    %1161 = vmatpush1.bf16.msra.mxu0 0
    %1162 = vmatprep.subr.bf16.mxu0 0
    %1163 = vmatpush1.bf16.msra.mxu0 0
    %1164 = vmatprep.subr.bf16.mxu0 0
    %1165 = vmatpush1.bf16.msra.mxu0 0
    %1166 = vmatprep.subr.bf16.mxu0 0
    %1167 = vmatpush1.bf16.msra.mxu0 0
    %1168 = vmatprep.mubr.bf16.mxu0 0
    %1169 = vmatmul.mubr.bf16.gmra.mrb[0].mxu0 %v1134
    %v1170 = vpop.f32.mrb[0].mxu0
    %v1171 = vadd.f32 0.0, %v1170
    %v1172 = vpop.f32.mrb[0].mxu0
    %v1173 = vadd.f32 0.0, %v1172
    %v1174 = vpop.f32.mrb[0].mxu0
    %v1175 = vadd.f32 0.0, %v1174
    %v1176 = vpop.f32.mrb[0].mxu0
    %v1177 = vadd.f32 0.0, %v1176
    %1178 = vdwg.mxu0
    %v1179 = vpack.c.bf16 %v1175, %v1171
    %v1180 = vpack.c.bf16 %v1177, %v1173
    %s1181 = scalar_lea.vmem [#allocation5], 256
    %v1182 = vld [vmem:[%s1181] sm:$0xff]
    %v1183 = vld [vmem:[%s1181 + $0x8] sm:$0xff]
    %v1184 = vld [vmem:[%s1181 + $0x10] sm:$0xff]
    %v1185 = vld [vmem:[%s1181 + $0x18] sm:$0xff]
    %v1186 = vld [vmem:[%s1181 + $0x20] sm:$0xff]
    %v1187 = vld [vmem:[%s1181 + $0x28] sm:$0xff]
    %v1188 = vld [vmem:[%s1181 + $0x30] sm:$0xff]
    %v1189 = vld [vmem:[%s1181 + $0x38] sm:$0xff]
    %v1190 = vld [vmem:[%s1181 + $0x40] sm:$0xff]
    %v1191 = vld [vmem:[%s1181 + $0x48] sm:$0xff]
    %v1192 = vld [vmem:[%s1181 + $0x50] sm:$0xff]
    %v1193 = vld [vmem:[%s1181 + $0x58] sm:$0xff]
    %v1194 = vld [vmem:[%s1181 + $0x60] sm:$0xff]
    %v1195 = vld [vmem:[%s1181 + $0x68] sm:$0xff]
    %v1196 = vld [vmem:[%s1181 + $0x70] sm:$0xff]
    %v1197 = vld [vmem:[%s1181 + $0x78] sm:$0xff]
    %v1198 = vld [vmem:[%s1181 + $0x80] sm:$0xff]
    %v1199 = vld [vmem:[%s1181 + $0x88] sm:$0xff]
    %v1200 = vld [vmem:[%s1181 + $0x90] sm:$0xff]
    %v1201 = vld [vmem:[%s1181 + $0x98] sm:$0xff]
    %v1202 = vld [vmem:[%s1181 + $0xa0] sm:$0xff]
    %v1203 = vld [vmem:[%s1181 + $0xa8] sm:$0xff]
    %v1204 = vld [vmem:[%s1181 + $0xb0] sm:$0xff]
    %v1205 = vld [vmem:[%s1181 + $0xb8] sm:$0xff]
    %v1206 = vld [vmem:[%s1181 + $0xc0] sm:$0xff]
    %v1207 = vld [vmem:[%s1181 + $0xc8] sm:$0xff]
    %v1208 = vld [vmem:[%s1181 + $0xd0] sm:$0xff]
    %v1209 = vld [vmem:[%s1181 + $0xd8] sm:$0xff]
    %v1210 = vld [vmem:[%s1181 + $0xe0] sm:$0xff]
    %v1211 = vld [vmem:[%s1181 + $0xe8] sm:$0xff]
    %v1212 = vld [vmem:[%s1181 + $0xf0] sm:$0xff]
    %v1213 = vld [vmem:[%s1181 + $0xf8] sm:$0xff]
    %v1246 = vunpack.c.l.b16 %v1182
    %v1247 = vunpack.c.h.b16 %v1182
    %v1248 = vunpack.c.l.b16 %v1183
    %v1249 = vunpack.c.h.b16 %v1183
    %v1250 = vunpack.c.l.b16 %v1184
    %v1251 = vunpack.c.h.b16 %v1184
    %v1252 = vunpack.c.l.b16 %v1185
    %v1253 = vunpack.c.h.b16 %v1185
    %v1254 = vunpack.c.l.b16 %v1186
    %v1255 = vunpack.c.h.b16 %v1186
    %v1256 = vunpack.c.l.b16 %v1187
    %v1257 = vunpack.c.h.b16 %v1187
    %v1258 = vunpack.c.l.b16 %v1188
    %v1259 = vunpack.c.h.b16 %v1188
    %v1260 = vunpack.c.l.b16 %v1189
    %v1261 = vunpack.c.h.b16 %v1189
    %v1262 = vunpack.c.l.b16 %v1190
    %v1263 = vunpack.c.h.b16 %v1190
    %v1264 = vunpack.c.l.b16 %v1191
    %v1265 = vunpack.c.h.b16 %v1191
    %v1266 = vunpack.c.l.b16 %v1192
    %v1267 = vunpack.c.h.b16 %v1192
    %v1268 = vunpack.c.l.b16 %v1193
    %v1269 = vunpack.c.h.b16 %v1193
    %v1270 = vunpack.c.l.b16 %v1194
    %v1271 = vunpack.c.h.b16 %v1194
    %v1272 = vunpack.c.l.b16 %v1195
    %v1273 = vunpack.c.h.b16 %v1195
    %v1274 = vunpack.c.l.b16 %v1196
    %v1275 = vunpack.c.h.b16 %v1196
    %v1276 = vunpack.c.l.b16 %v1197
    %v1277 = vunpack.c.h.b16 %v1197
    %v1278 = vunpack.c.l.b16 %v1198
    %v1279 = vunpack.c.h.b16 %v1198
    %v1280 = vunpack.c.l.b16 %v1199
    %v1281 = vunpack.c.h.b16 %v1199
    %v1282 = vunpack.c.l.b16 %v1200
    %v1283 = vunpack.c.h.b16 %v1200
    %v1284 = vunpack.c.l.b16 %v1201
    %v1285 = vunpack.c.h.b16 %v1201
    %v1286 = vunpack.c.l.b16 %v1202
    %v1287 = vunpack.c.h.b16 %v1202
    %v1288 = vunpack.c.l.b16 %v1203
    %v1289 = vunpack.c.h.b16 %v1203
    %v1290 = vunpack.c.l.b16 %v1204
    %v1291 = vunpack.c.h.b16 %v1204
    %v1292 = vunpack.c.l.b16 %v1205
    %v1293 = vunpack.c.h.b16 %v1205
    %v1294 = vunpack.c.l.b16 %v1206
    %v1295 = vunpack.c.h.b16 %v1206
    %v1296 = vunpack.c.l.b16 %v1207
    %v1297 = vunpack.c.h.b16 %v1207
    %v1298 = vunpack.c.l.b16 %v1208
    %v1299 = vunpack.c.h.b16 %v1208
    %v1300 = vunpack.c.l.b16 %v1209
    %v1301 = vunpack.c.h.b16 %v1209
    %v1302 = vunpack.c.l.b16 %v1210
    %v1303 = vunpack.c.h.b16 %v1210
    %v1304 = vunpack.c.l.b16 %v1211
    %v1305 = vunpack.c.h.b16 %v1211
    %v1306 = vunpack.c.l.b16 %v1212
    %v1307 = vunpack.c.h.b16 %v1212
    %v1308 = vunpack.c.l.b16 %v1213
    %v1309 = vunpack.c.h.b16 %v1213
    %v1310 = vpack.c.b16 %v1248, %v1246
    %v1311 = vpack.c.b16 %v1249, %v1247
    %v1312 = vpack.c.b16 %v1252, %v1250
    %v1313 = vpack.c.b16 %v1253, %v1251
    %v1314 = vpack.c.b16 %v1256, %v1254
    %v1315 = vpack.c.b16 %v1257, %v1255
    %v1316 = vpack.c.b16 %v1260, %v1258
    %v1317 = vpack.c.b16 %v1261, %v1259
    %v1318 = vpack.c.b16 %v1264, %v1262
    %v1319 = vpack.c.b16 %v1265, %v1263
    %v1320 = vpack.c.b16 %v1268, %v1266
    %v1321 = vpack.c.b16 %v1269, %v1267
    %v1322 = vpack.c.b16 %v1272, %v1270
    %v1323 = vpack.c.b16 %v1273, %v1271
    %v1324 = vpack.c.b16 %v1276, %v1274
    %v1325 = vpack.c.b16 %v1277, %v1275
    %v1326 = vpack.c.b16 %v1280, %v1278
    %v1327 = vpack.c.b16 %v1281, %v1279
    %v1328 = vpack.c.b16 %v1284, %v1282
    %v1329 = vpack.c.b16 %v1285, %v1283
    %v1330 = vpack.c.b16 %v1288, %v1286
    %v1331 = vpack.c.b16 %v1289, %v1287
    %v1332 = vpack.c.b16 %v1292, %v1290
    %v1333 = vpack.c.b16 %v1293, %v1291
    %v1334 = vpack.c.b16 %v1296, %v1294
    %v1335 = vpack.c.b16 %v1297, %v1295
    %v1336 = vpack.c.b16 %v1300, %v1298
    %v1337 = vpack.c.b16 %v1301, %v1299
    %v1338 = vpack.c.b16 %v1304, %v1302
    %v1339 = vpack.c.b16 %v1305, %v1303
    %v1340 = vpack.c.b16 %v1308, %v1306
    %v1341 = vpack.c.b16 %v1309, %v1307
    %1374 = vmatprep.subr.bf16.mxu0 %v1311
    %1375 = vmatpush1.bf16.msra.mxu0 %v1310
    %1376 = vmatprep.subr.bf16.mxu0 %v1313
    %1377 = vmatpush1.bf16.msra.mxu0 %v1312
    %1378 = vmatprep.subr.bf16.mxu0 %v1315
    %1379 = vmatpush1.bf16.msra.mxu0 %v1314
    %1380 = vmatprep.subr.bf16.mxu0 %v1317
    %1381 = vmatpush1.bf16.msra.mxu0 %v1316
    %1382 = vmatprep.subr.bf16.mxu0 %v1319
    %1383 = vmatpush1.bf16.msra.mxu0 %v1318
    %1384 = vmatprep.subr.bf16.mxu0 %v1321
    %1385 = vmatpush1.bf16.msra.mxu0 %v1320
    %1386 = vmatprep.subr.bf16.mxu0 %v1323
    %1387 = vmatpush1.bf16.msra.mxu0 %v1322
    %1388 = vmatprep.subr.bf16.mxu0 %v1325
    %1389 = vmatpush1.bf16.msra.mxu0 %v1324
    %1390 = vmatprep.subr.bf16.mxu0 %v1327
    %1391 = vmatpush1.bf16.msra.mxu0 %v1326
    %1392 = vmatprep.subr.bf16.mxu0 %v1329
    %1393 = vmatpush1.bf16.msra.mxu0 %v1328
    %1394 = vmatprep.subr.bf16.mxu0 %v1331
    %1395 = vmatpush1.bf16.msra.mxu0 %v1330
    %1396 = vmatprep.subr.bf16.mxu0 %v1333
    %1397 = vmatpush1.bf16.msra.mxu0 %v1332
    %1398 = vmatprep.subr.bf16.mxu0 %v1335
    %1399 = vmatpush1.bf16.msra.mxu0 %v1334
    %1400 = vmatprep.subr.bf16.mxu0 %v1337
    %1401 = vmatpush1.bf16.msra.mxu0 %v1336
    %1402 = vmatprep.subr.bf16.mxu0 %v1339
    %1403 = vmatpush1.bf16.msra.mxu0 %v1338
    %1404 = vmatprep.subr.bf16.mxu0 %v1341
    %1405 = vmatpush1.bf16.msra.mxu0 %v1340
    %1406 = vmatprep.mubr.bf16.mxu0 %v1180
    %1407 = vmatmul.mubr.bf16.gmra.mrb[0].mxu0 %v1179
    %v1408 = vpop.f32.mrb[0].mxu0
    %v1409 = vadd.f32 0.0, %v1408
    %v1410 = vpop.f32.mrb[0].mxu0
    %v1411 = vadd.f32 0.0, %v1410
    %v1412 = vpop.f32.mrb[0].mxu0
    %v1413 = vadd.f32 0.0, %v1412
    %v1414 = vpop.f32.mrb[0].mxu0
    %v1415 = vadd.f32 0.0, %v1414
    %1416 = vdwg.mxu0
    %v1449 = vunpack.c.l.b16 %v1093
    %v1450 = vunpack.c.h.b16 %v1093
    %v1451 = vunpack.c.l.b16 %v1094
    %v1452 = vunpack.c.h.b16 %v1094
    %v1453 = vunpack.c.l.b16 %v1095
    %v1454 = vunpack.c.h.b16 %v1095
    %v1455 = vunpack.c.l.b16 %v1096
    %v1456 = vunpack.c.h.b16 %v1096
    %v1457 = vunpack.c.l.b16 %v1097
    %v1458 = vunpack.c.h.b16 %v1097
    %v1459 = vunpack.c.l.b16 %v1098
    %v1460 = vunpack.c.h.b16 %v1098
    %v1461 = vunpack.c.l.b16 %v1099
    %v1462 = vunpack.c.h.b16 %v1099
    %v1463 = vunpack.c.l.b16 %v1100
    %v1464 = vunpack.c.h.b16 %v1100
    %v1465 = vunpack.c.l.b16 %v1101
    %v1466 = vunpack.c.h.b16 %v1101
    %v1467 = vunpack.c.l.b16 %v1102
    %v1468 = vunpack.c.h.b16 %v1102
    %v1469 = vunpack.c.l.b16 %v1103
    %v1470 = vunpack.c.h.b16 %v1103
    %v1471 = vunpack.c.l.b16 %v1104
    %v1472 = vunpack.c.h.b16 %v1104
    %v1473 = vunpack.c.l.b16 %v1105
    %v1474 = vunpack.c.h.b16 %v1105
    %v1475 = vunpack.c.l.b16 %v1106
    %v1476 = vunpack.c.h.b16 %v1106
    %v1477 = vunpack.c.l.b16 %v1107
    %v1478 = vunpack.c.h.b16 %v1107
    %v1479 = vunpack.c.l.b16 %v1108
    %v1480 = vunpack.c.h.b16 %v1108
    %v1481 = vunpack.c.l.b16 %v1109
    %v1482 = vunpack.c.h.b16 %v1109
    %v1483 = vunpack.c.l.b16 %v1110
    %v1484 = vunpack.c.h.b16 %v1110
    %v1485 = vunpack.c.l.b16 %v1111
    %v1486 = vunpack.c.h.b16 %v1111
    %v1487 = vunpack.c.l.b16 %v1112
    %v1488 = vunpack.c.h.b16 %v1112
    %v1489 = vunpack.c.l.b16 %v1113
    %v1490 = vunpack.c.h.b16 %v1113
    %v1491 = vunpack.c.l.b16 %v1114
    %v1492 = vunpack.c.h.b16 %v1114
    %v1493 = vunpack.c.l.b16 %v1115
    %v1494 = vunpack.c.h.b16 %v1115
    %v1495 = vunpack.c.l.b16 %v1116
    %v1496 = vunpack.c.h.b16 %v1116
    %v1497 = vunpack.c.l.b16 %v1117
    %v1498 = vunpack.c.h.b16 %v1117
    %v1499 = vunpack.c.l.b16 %v1118
    %v1500 = vunpack.c.h.b16 %v1118
    %v1501 = vunpack.c.l.b16 %v1119
    %v1502 = vunpack.c.h.b16 %v1119
    %v1503 = vunpack.c.l.b16 %v1120
    %v1504 = vunpack.c.h.b16 %v1120
    %v1505 = vunpack.c.l.b16 %v1121
    %v1506 = vunpack.c.h.b16 %v1121
    %v1507 = vunpack.c.l.b16 %v1122
    %v1508 = vunpack.c.h.b16 %v1122
    %v1509 = vunpack.c.l.b16 %v1123
    %v1510 = vunpack.c.h.b16 %v1123
    %v1511 = vunpack.c.l.b16 %v1124
    %v1512 = vunpack.c.h.b16 %v1124
    %v1513 = vpack.c.b16 %v1451, %v1449
    %v1514 = vpack.c.b16 %v1452, %v1450
    %v1515 = vpack.c.b16 %v1455, %v1453
    %v1516 = vpack.c.b16 %v1456, %v1454
    %v1517 = vpack.c.b16 %v1459, %v1457
    %v1518 = vpack.c.b16 %v1460, %v1458
    %v1519 = vpack.c.b16 %v1463, %v1461
    %v1520 = vpack.c.b16 %v1464, %v1462
    %v1521 = vpack.c.b16 %v1467, %v1465
    %v1522 = vpack.c.b16 %v1468, %v1466
    %v1523 = vpack.c.b16 %v1471, %v1469
    %v1524 = vpack.c.b16 %v1472, %v1470
    %v1525 = vpack.c.b16 %v1475, %v1473
    %v1526 = vpack.c.b16 %v1476, %v1474
    %v1527 = vpack.c.b16 %v1479, %v1477
    %v1528 = vpack.c.b16 %v1480, %v1478
    %v1529 = vpack.c.b16 %v1483, %v1481
    %v1530 = vpack.c.b16 %v1484, %v1482
    %v1531 = vpack.c.b16 %v1487, %v1485
    %v1532 = vpack.c.b16 %v1488, %v1486
    %v1533 = vpack.c.b16 %v1491, %v1489
    %v1534 = vpack.c.b16 %v1492, %v1490
    %v1535 = vpack.c.b16 %v1495, %v1493
    %v1536 = vpack.c.b16 %v1496, %v1494
    %v1537 = vpack.c.b16 %v1499, %v1497
    %v1538 = vpack.c.b16 %v1500, %v1498
    %v1539 = vpack.c.b16 %v1503, %v1501
    %v1540 = vpack.c.b16 %v1504, %v1502
    %v1541 = vpack.c.b16 %v1507, %v1505
    %v1542 = vpack.c.b16 %v1508, %v1506
    %v1543 = vpack.c.b16 %v1511, %v1509
    %v1544 = vpack.c.b16 %v1512, %v1510
    %1577 = vmatprep.subr.bf16.mxu0 %v1514
    %1578 = vmatpush1.bf16.msra.mxu0 %v1513
    %1579 = vmatprep.subr.bf16.mxu0 %v1516
    %1580 = vmatpush1.bf16.msra.mxu0 %v1515
    %1581 = vmatprep.subr.bf16.mxu0 %v1518
    %1582 = vmatpush1.bf16.msra.mxu0 %v1517
    %1583 = vmatprep.subr.bf16.mxu0 %v1520
    %1584 = vmatpush1.bf16.msra.mxu0 %v1519
    %1585 = vmatprep.subr.bf16.mxu0 %v1522
    %1586 = vmatpush1.bf16.msra.mxu0 %v1521
    %1587 = vmatprep.subr.bf16.mxu0 %v1524
    %1588 = vmatpush1.bf16.msra.mxu0 %v1523
    %1589 = vmatprep.subr.bf16.mxu0 %v1526
    %1590 = vmatpush1.bf16.msra.mxu0 %v1525
    %1591 = vmatprep.subr.bf16.mxu0 %v1528
    %1592 = vmatpush1.bf16.msra.mxu0 %v1527
    %1593 = vmatprep.subr.bf16.mxu0 %v1530
    %1594 = vmatpush1.bf16.msra.mxu0 %v1529
    %1595 = vmatprep.subr.bf16.mxu0 %v1532
    %1596 = vmatpush1.bf16.msra.mxu0 %v1531
    %1597 = vmatprep.subr.bf16.mxu0 %v1534
    %1598 = vmatpush1.bf16.msra.mxu0 %v1533
    %1599 = vmatprep.subr.bf16.mxu0 %v1536
    %1600 = vmatpush1.bf16.msra.mxu0 %v1535
    %1601 = vmatprep.subr.bf16.mxu0 %v1538
    %1602 = vmatpush1.bf16.msra.mxu0 %v1537
    %1603 = vmatprep.subr.bf16.mxu0 %v1540
    %1604 = vmatpush1.bf16.msra.mxu0 %v1539
    %1605 = vmatprep.subr.bf16.mxu0 %v1542
    %1606 = vmatpush1.bf16.msra.mxu0 %v1541
    %1607 = vmatprep.subr.bf16.mxu0 %v1544
    %1608 = vmatpush1.bf16.msra.mxu0 %v1543
    %1609 = vmatprep.mubr.bf16.mxu0 %v1092
    %1610 = vmatmul.mubr.bf16.gmra.mrb[0].mxu0 %v1091
    %v1611 = vpop.f32.mrb[0].mxu0
    %v1612 = vadd.f32 %v1409, %v1611
    %v1613 = vpop.f32.mrb[0].mxu0
    %v1614 = vadd.f32 %v1411, %v1613
    %v1615 = vpop.f32.mrb[0].mxu0
    %v1616 = vadd.f32 %v1413, %v1615
    %v1617 = vpop.f32.mrb[0].mxu0
    %v1618 = vadd.f32 %v1415, %v1617
    %1619 = vdwg.mxu0
    %s1620 = scalar_lea.vmem %s4, 16
    %v1621 = vld [vmem:[%s1620] sm:$0xf]
    %v1622 = vld [vmem:[%s1620 + $0x4] sm:$0xf]
    %v1625 = vunpack.c.l.b16 %v1621
    %v1626 = vunpack.c.l.b16 %v1622
    %v1627 = vpack.c.b16 %v1626, %v1625
    %v1629 = vsel %vm375, %v1627, 0
    %1631 = vmatprep.subr.bf16.mxu0 %v1035
    %1632 = vmatpush1.bf16.msra.mxu0 %v1034
    %1633 = vmatprep.subr.bf16.mxu0 %v1037
    %1634 = vmatpush1.bf16.msra.mxu0 %v1036
    %1635 = vmatprep.subr.bf16.mxu0 0
    %1636 = vmatpush1.bf16.msra.mxu0 0
    %1637 = vmatprep.subr.bf16.mxu0 0
    %1638 = vmatpush1.bf16.msra.mxu0 0
    %1639 = vmatprep.subr.bf16.mxu0 0
    %1640 = vmatpush1.bf16.msra.mxu0 0
    %1641 = vmatprep.subr.bf16.mxu0 0
    %1642 = vmatpush1.bf16.msra.mxu0 0
    %1643 = vmatprep.subr.bf16.mxu0 0
    %1644 = vmatpush1.bf16.msra.mxu0 0
    %1645 = vmatprep.subr.bf16.mxu0 0
    %1646 = vmatpush1.bf16.msra.mxu0 0
    %1647 = vmatprep.subr.bf16.mxu0 0
    %1648 = vmatpush1.bf16.msra.mxu0 0
    %1649 = vmatprep.subr.bf16.mxu0 0
    %1650 = vmatpush1.bf16.msra.mxu0 0
    %1651 = vmatprep.subr.bf16.mxu0 0
    %1652 = vmatpush1.bf16.msra.mxu0 0
    %1653 = vmatprep.subr.bf16.mxu0 0
    %1654 = vmatpush1.bf16.msra.mxu0 0
    %1655 = vmatprep.subr.bf16.mxu0 0
    %1656 = vmatpush1.bf16.msra.mxu0 0
    %1657 = vmatprep.subr.bf16.mxu0 0
    %1658 = vmatpush1.bf16.msra.mxu0 0
    %1659 = vmatprep.subr.bf16.mxu0 0
    %1660 = vmatpush1.bf16.msra.mxu0 0
    %1661 = vmatprep.subr.bf16.mxu0 0
    %1662 = vmatpush1.bf16.msra.mxu0 0
    %1663 = vmatprep.mubr.bf16.mxu0 0
    %1664 = vmatmul.mubr.bf16.gmra.mrb[0].mxu0 %v1629
    %v1665 = vpop.f32.mrb[0].mxu0
    %v1666 = vadd.f32 0.0, %v1665
    %v1667 = vpop.f32.mrb[0].mxu0
    %v1668 = vadd.f32 0.0, %v1667
    %v1669 = vpop.f32.mrb[0].mxu0
    %v1670 = vadd.f32 0.0, %v1669
    %v1671 = vpop.f32.mrb[0].mxu0
    %v1672 = vadd.f32 0.0, %v1671
    %1673 = vdwg.mxu0
    %v1674 = vpack.c.bf16 %v1670, %v1666
    %v1675 = vpack.c.bf16 %v1672, %v1668
    %s1676 = scalar_lea.vmem [#allocation5], 512
    %v1677 = vld [vmem:[%s1676] sm:$0xff]
    %v1678 = vld [vmem:[%s1676 + $0x8] sm:$0xff]
    %v1679 = vld [vmem:[%s1676 + $0x10] sm:$0xff]
    %v1680 = vld [vmem:[%s1676 + $0x18] sm:$0xff]
    %v1681 = vld [vmem:[%s1676 + $0x20] sm:$0xff]
    %v1682 = vld [vmem:[%s1676 + $0x28] sm:$0xff]
    %v1683 = vld [vmem:[%s1676 + $0x30] sm:$0xff]
    %v1684 = vld [vmem:[%s1676 + $0x38] sm:$0xff]
    %v1685 = vld [vmem:[%s1676 + $0x40] sm:$0xff]
    %v1686 = vld [vmem:[%s1676 + $0x48] sm:$0xff]
    %v1687 = vld [vmem:[%s1676 + $0x50] sm:$0xff]
    %v1688 = vld [vmem:[%s1676 + $0x58] sm:$0xff]
    %v1689 = vld [vmem:[%s1676 + $0x60] sm:$0xff]
    %v1690 = vld [vmem:[%s1676 + $0x68] sm:$0xff]
    %v1691 = vld [vmem:[%s1676 + $0x70] sm:$0xff]
    %v1692 = vld [vmem:[%s1676 + $0x78] sm:$0xff]
    %v1693 = vld [vmem:[%s1676 + $0x80] sm:$0xff]
    %v1694 = vld [vmem:[%s1676 + $0x88] sm:$0xff]
    %v1695 = vld [vmem:[%s1676 + $0x90] sm:$0xff]
    %v1696 = vld [vmem:[%s1676 + $0x98] sm:$0xff]
    %v1697 = vld [vmem:[%s1676 + $0xa0] sm:$0xff]
    %v1698 = vld [vmem:[%s1676 + $0xa8] sm:$0xff]
    %v1699 = vld [vmem:[%s1676 + $0xb0] sm:$0xff]
    %v1700 = vld [vmem:[%s1676 + $0xb8] sm:$0xff]
    %v1701 = vld [vmem:[%s1676 + $0xc0] sm:$0xff]
    %v1702 = vld [vmem:[%s1676 + $0xc8] sm:$0xff]
    %v1703 = vld [vmem:[%s1676 + $0xd0] sm:$0xff]
    %v1704 = vld [vmem:[%s1676 + $0xd8] sm:$0xff]
    %v1705 = vld [vmem:[%s1676 + $0xe0] sm:$0xff]
    %v1706 = vld [vmem:[%s1676 + $0xe8] sm:$0xff]
    %v1707 = vld [vmem:[%s1676 + $0xf0] sm:$0xff]
    %v1708 = vld [vmem:[%s1676 + $0xf8] sm:$0xff]
    %v1741 = vunpack.c.l.b16 %v1677
    %v1742 = vunpack.c.h.b16 %v1677
    %v1743 = vunpack.c.l.b16 %v1678
    %v1744 = vunpack.c.h.b16 %v1678
    %v1745 = vunpack.c.l.b16 %v1679
    %v1746 = vunpack.c.h.b16 %v1679
    %v1747 = vunpack.c.l.b16 %v1680
    %v1748 = vunpack.c.h.b16 %v1680
    %v1749 = vunpack.c.l.b16 %v1681
    %v1750 = vunpack.c.h.b16 %v1681
    %v1751 = vunpack.c.l.b16 %v1682
    %v1752 = vunpack.c.h.b16 %v1682
    %v1753 = vunpack.c.l.b16 %v1683
    %v1754 = vunpack.c.h.b16 %v1683
    %v1755 = vunpack.c.l.b16 %v1684
    %v1756 = vunpack.c.h.b16 %v1684
    %v1757 = vunpack.c.l.b16 %v1685
    %v1758 = vunpack.c.h.b16 %v1685
    %v1759 = vunpack.c.l.b16 %v1686
    %v1760 = vunpack.c.h.b16 %v1686
    %v1761 = vunpack.c.l.b16 %v1687
    %v1762 = vunpack.c.h.b16 %v1687
    %v1763 = vunpack.c.l.b16 %v1688
    %v1764 = vunpack.c.h.b16 %v1688
    %v1765 = vunpack.c.l.b16 %v1689
    %v1766 = vunpack.c.h.b16 %v1689
    %v1767 = vunpack.c.l.b16 %v1690
    %v1768 = vunpack.c.h.b16 %v1690
    %v1769 = vunpack.c.l.b16 %v1691
    %v1770 = vunpack.c.h.b16 %v1691
    %v1771 = vunpack.c.l.b16 %v1692
    %v1772 = vunpack.c.h.b16 %v1692
    %v1773 = vunpack.c.l.b16 %v1693
    %v1774 = vunpack.c.h.b16 %v1693
    %v1775 = vunpack.c.l.b16 %v1694
    %v1776 = vunpack.c.h.b16 %v1694
    %v1777 = vunpack.c.l.b16 %v1695
    %v1778 = vunpack.c.h.b16 %v1695
    %v1779 = vunpack.c.l.b16 %v1696
    %v1780 = vunpack.c.h.b16 %v1696
    %v1781 = vunpack.c.l.b16 %v1697
    %v1782 = vunpack.c.h.b16 %v1697
    %v1783 = vunpack.c.l.b16 %v1698
    %v1784 = vunpack.c.h.b16 %v1698
    %v1785 = vunpack.c.l.b16 %v1699
    %v1786 = vunpack.c.h.b16 %v1699
    %v1787 = vunpack.c.l.b16 %v1700
    %v1788 = vunpack.c.h.b16 %v1700
    %v1789 = vunpack.c.l.b16 %v1701
    %v1790 = vunpack.c.h.b16 %v1701
    %v1791 = vunpack.c.l.b16 %v1702
    %v1792 = vunpack.c.h.b16 %v1702
    %v1793 = vunpack.c.l.b16 %v1703
    %v1794 = vunpack.c.h.b16 %v1703
    %v1795 = vunpack.c.l.b16 %v1704
    %v1796 = vunpack.c.h.b16 %v1704
    %v1797 = vunpack.c.l.b16 %v1705
    %v1798 = vunpack.c.h.b16 %v1705
    %v1799 = vunpack.c.l.b16 %v1706
    %v1800 = vunpack.c.h.b16 %v1706
    %v1801 = vunpack.c.l.b16 %v1707
    %v1802 = vunpack.c.h.b16 %v1707
    %v1803 = vunpack.c.l.b16 %v1708
    %v1804 = vunpack.c.h.b16 %v1708
    %v1805 = vpack.c.b16 %v1743, %v1741
    %v1806 = vpack.c.b16 %v1744, %v1742
    %v1807 = vpack.c.b16 %v1747, %v1745
    %v1808 = vpack.c.b16 %v1748, %v1746
    %v1809 = vpack.c.b16 %v1751, %v1749
    %v1810 = vpack.c.b16 %v1752, %v1750
    %v1811 = vpack.c.b16 %v1755, %v1753
    %v1812 = vpack.c.b16 %v1756, %v1754
    %v1813 = vpack.c.b16 %v1759, %v1757
    %v1814 = vpack.c.b16 %v1760, %v1758
    %v1815 = vpack.c.b16 %v1763, %v1761
    %v1816 = vpack.c.b16 %v1764, %v1762
    %v1817 = vpack.c.b16 %v1767, %v1765
    %v1818 = vpack.c.b16 %v1768, %v1766
    %v1819 = vpack.c.b16 %v1771, %v1769
    %v1820 = vpack.c.b16 %v1772, %v1770
    %v1821 = vpack.c.b16 %v1775, %v1773
    %v1822 = vpack.c.b16 %v1776, %v1774
    %v1823 = vpack.c.b16 %v1779, %v1777
    %v1824 = vpack.c.b16 %v1780, %v1778
    %v1825 = vpack.c.b16 %v1783, %v1781
    %v1826 = vpack.c.b16 %v1784, %v1782
    %v1827 = vpack.c.b16 %v1787, %v1785
    %v1828 = vpack.c.b16 %v1788, %v1786
    %v1829 = vpack.c.b16 %v1791, %v1789
    %v1830 = vpack.c.b16 %v1792, %v1790
    %v1831 = vpack.c.b16 %v1795, %v1793
    %v1832 = vpack.c.b16 %v1796, %v1794
    %v1833 = vpack.c.b16 %v1799, %v1797
    %v1834 = vpack.c.b16 %v1800, %v1798
    %v1835 = vpack.c.b16 %v1803, %v1801
    %v1836 = vpack.c.b16 %v1804, %v1802
    %1869 = vmatprep.subr.bf16.mxu0 %v1806
    %1870 = vmatpush1.bf16.msra.mxu0 %v1805
    %1871 = vmatprep.subr.bf16.mxu0 %v1808
    %1872 = vmatpush1.bf16.msra.mxu0 %v1807
    %1873 = vmatprep.subr.bf16.mxu0 %v1810
    %1874 = vmatpush1.bf16.msra.mxu0 %v1809
    %1875 = vmatprep.subr.bf16.mxu0 %v1812
    %1876 = vmatpush1.bf16.msra.mxu0 %v1811
    %1877 = vmatprep.subr.bf16.mxu0 %v1814
    %1878 = vmatpush1.bf16.msra.mxu0 %v1813
    %1879 = vmatprep.subr.bf16.mxu0 %v1816
    %1880 = vmatpush1.bf16.msra.mxu0 %v1815
    %1881 = vmatprep.subr.bf16.mxu0 %v1818
    %1882 = vmatpush1.bf16.msra.mxu0 %v1817
    %1883 = vmatprep.subr.bf16.mxu0 %v1820
    %1884 = vmatpush1.bf16.msra.mxu0 %v1819
    %1885 = vmatprep.subr.bf16.mxu0 %v1822
    %1886 = vmatpush1.bf16.msra.mxu0 %v1821
    %1887 = vmatprep.subr.bf16.mxu0 %v1824
    %1888 = vmatpush1.bf16.msra.mxu0 %v1823
    %1889 = vmatprep.subr.bf16.mxu0 %v1826
    %1890 = vmatpush1.bf16.msra.mxu0 %v1825
    %1891 = vmatprep.subr.bf16.mxu0 %v1828
    %1892 = vmatpush1.bf16.msra.mxu0 %v1827
    %1893 = vmatprep.subr.bf16.mxu0 %v1830
    %1894 = vmatpush1.bf16.msra.mxu0 %v1829
    %1895 = vmatprep.subr.bf16.mxu0 %v1832
    %1896 = vmatpush1.bf16.msra.mxu0 %v1831
    %1897 = vmatprep.subr.bf16.mxu0 %v1834
    %1898 = vmatpush1.bf16.msra.mxu0 %v1833
    %1899 = vmatprep.subr.bf16.mxu0 %v1836
    %1900 = vmatpush1.bf16.msra.mxu0 %v1835
    %1901 = vmatprep.mubr.bf16.mxu0 %v1675
    %1902 = vmatmul.mubr.bf16.gmra.mrb[0].mxu0 %v1674
    %v1903 = vpop.f32.mrb[0].mxu0
    %v1904 = vadd.f32 0.0, %v1903
    %v1905 = vpop.f32.mrb[0].mxu0
    %v1906 = vadd.f32 0.0, %v1905
    %v1907 = vpop.f32.mrb[0].mxu0
    %v1908 = vadd.f32 0.0, %v1907
    %v1909 = vpop.f32.mrb[0].mxu0
    %v1910 = vadd.f32 0.0, %v1909
    %1911 = vdwg.mxu0
    %v1912 = vadd.f32 %v1612, %v1904
    %v1913 = vadd.f32 %v1614, %v1906
    %v1914 = vadd.f32 %v1616, %v1908
    %v1915 = vadd.f32 %v1618, %v1910
    %s1916 = scalar_lea.vmem %s4, 24
    %v1917 = vld [vmem:[%s1916] sm:$0xf]
    %v1918 = vld [vmem:[%s1916 + $0x4] sm:$0xf]
    %v1921 = vunpack.c.l.b16 %v1917
    %v1922 = vunpack.c.l.b16 %v1918
    %v1923 = vpack.c.b16 %v1922, %v1921
    %v1925 = vsel %vm375, %v1923, 0
    %1927 = vmatprep.subr.bf16.mxu0 %v1035
    %1928 = vmatpush1.bf16.msra.mxu0 %v1034
    %1929 = vmatprep.subr.bf16.mxu0 %v1037
    %1930 = vmatpush1.bf16.msra.mxu0 %v1036
    %1931 = vmatprep.subr.bf16.mxu0 0
    %1932 = vmatpush1.bf16.msra.mxu0 0
    %1933 = vmatprep.subr.bf16.mxu0 0
    %1934 = vmatpush1.bf16.msra.mxu0 0
    %1935 = vmatprep.subr.bf16.mxu0 0
    %1936 = vmatpush1.bf16.msra.mxu0 0
    %1937 = vmatprep.subr.bf16.mxu0 0
    %1938 = vmatpush1.bf16.msra.mxu0 0
    %1939 = vmatprep.subr.bf16.mxu0 0
    %1940 = vmatpush1.bf16.msra.mxu0 0
    %1941 = vmatprep.subr.bf16.mxu0 0
    %1942 = vmatpush1.bf16.msra.mxu0 0
    %1943 = vmatprep.subr.bf16.mxu0 0
    %1944 = vmatpush1.bf16.msra.mxu0 0
    %1945 = vmatprep.subr.bf16.mxu0 0
    %1946 = vmatpush1.bf16.msra.mxu0 0
    %1947 = vmatprep.subr.bf16.mxu0 0
    %1948 = vmatpush1.bf16.msra.mxu0 0
    %1949 = vmatprep.subr.bf16.mxu0 0
    %1950 = vmatpush1.bf16.msra.mxu0 0
    %1951 = vmatprep.subr.bf16.mxu0 0
    %1952 = vmatpush1.bf16.msra.mxu0 0
    %1953 = vmatprep.subr.bf16.mxu0 0
    %1954 = vmatpush1.bf16.msra.mxu0 0
    %1955 = vmatprep.subr.bf16.mxu0 0
    %1956 = vmatpush1.bf16.msra.mxu0 0
    %1957 = vmatprep.subr.bf16.mxu0 0
    %1958 = vmatpush1.bf16.msra.mxu0 0
    %1959 = vmatprep.mubr.bf16.mxu0 0
    %1960 = vmatmul.mubr.bf16.gmra.mrb[0].mxu0 %v1925
    %v1961 = vpop.f32.mrb[0].mxu0
    %v1962 = vadd.f32 0.0, %v1961
    %v1963 = vpop.f32.mrb[0].mxu0
    %v1964 = vadd.f32 0.0, %v1963
    %v1965 = vpop.f32.mrb[0].mxu0
    %v1966 = vadd.f32 0.0, %v1965
    %v1967 = vpop.f32.mrb[0].mxu0
    %v1968 = vadd.f32 0.0, %v1967
    %1969 = vdwg.mxu0
    %v1970 = vpack.c.bf16 %v1966, %v1962
    %v1971 = vpack.c.bf16 %v1968, %v1964
    %s1972 = scalar_lea.vmem [#allocation5], 768
    %v1973 = vld [vmem:[%s1972] sm:$0xff]
    %v1974 = vld [vmem:[%s1972 + $0x8] sm:$0xff]
    %v1975 = vld [vmem:[%s1972 + $0x10] sm:$0xff]
    %v1976 = vld [vmem:[%s1972 + $0x18] sm:$0xff]
    %v1977 = vld [vmem:[%s1972 + $0x20] sm:$0xff]
    %v1978 = vld [vmem:[%s1972 + $0x28] sm:$0xff]
    %v1979 = vld [vmem:[%s1972 + $0x30] sm:$0xff]
    %v1980 = vld [vmem:[%s1972 + $0x38] sm:$0xff]
    %v1981 = vld [vmem:[%s1972 + $0x40] sm:$0xff]
    %v1982 = vld [vmem:[%s1972 + $0x48] sm:$0xff]
    %v1983 = vld [vmem:[%s1972 + $0x50] sm:$0xff]
    %v1984 = vld [vmem:[%s1972 + $0x58] sm:$0xff]
    %v1985 = vld [vmem:[%s1972 + $0x60] sm:$0xff]
    %v1986 = vld [vmem:[%s1972 + $0x68] sm:$0xff]
    %v1987 = vld [vmem:[%s1972 + $0x70] sm:$0xff]
    %v1988 = vld [vmem:[%s1972 + $0x78] sm:$0xff]
    %v1989 = vld [vmem:[%s1972 + $0x80] sm:$0xff]
    %v1990 = vld [vmem:[%s1972 + $0x88] sm:$0xff]
    %v1991 = vld [vmem:[%s1972 + $0x90] sm:$0xff]
    %v1992 = vld [vmem:[%s1972 + $0x98] sm:$0xff]
    %v1993 = vld [vmem:[%s1972 + $0xa0] sm:$0xff]
    %v1994 = vld [vmem:[%s1972 + $0xa8] sm:$0xff]
    %v1995 = vld [vmem:[%s1972 + $0xb0] sm:$0xff]
    %v1996 = vld [vmem:[%s1972 + $0xb8] sm:$0xff]
    %v1997 = vld [vmem:[%s1972 + $0xc0] sm:$0xff]
    %v1998 = vld [vmem:[%s1972 + $0xc8] sm:$0xff]
    %v1999 = vld [vmem:[%s1972 + $0xd0] sm:$0xff]
    %v2000 = vld [vmem:[%s1972 + $0xd8] sm:$0xff]
    %v2001 = vld [vmem:[%s1972 + $0xe0] sm:$0xff]
    %v2002 = vld [vmem:[%s1972 + $0xe8] sm:$0xff]
    %v2003 = vld [vmem:[%s1972 + $0xf0] sm:$0xff]
    %v2004 = vld [vmem:[%s1972 + $0xf8] sm:$0xff]
    %v2037 = vunpack.c.l.b16 %v1973
    %v2038 = vunpack.c.h.b16 %v1973
    %v2039 = vunpack.c.l.b16 %v1974
    %v2040 = vunpack.c.h.b16 %v1974
    %v2041 = vunpack.c.l.b16 %v1975
    %v2042 = vunpack.c.h.b16 %v1975
    %v2043 = vunpack.c.l.b16 %v1976
    %v2044 = vunpack.c.h.b16 %v1976
    %v2045 = vunpack.c.l.b16 %v1977
    %v2046 = vunpack.c.h.b16 %v1977
    %v2047 = vunpack.c.l.b16 %v1978
    %v2048 = vunpack.c.h.b16 %v1978
    %v2049 = vunpack.c.l.b16 %v1979
    %v2050 = vunpack.c.h.b16 %v1979
    %v2051 = vunpack.c.l.b16 %v1980
    %v2052 = vunpack.c.h.b16 %v1980
    %v2053 = vunpack.c.l.b16 %v1981
    %v2054 = vunpack.c.h.b16 %v1981
    %v2055 = vunpack.c.l.b16 %v1982
    %v2056 = vunpack.c.h.b16 %v1982
    %v2057 = vunpack.c.l.b16 %v1983
    %v2058 = vunpack.c.h.b16 %v1983
    %v2059 = vunpack.c.l.b16 %v1984
    %v2060 = vunpack.c.h.b16 %v1984
    %v2061 = vunpack.c.l.b16 %v1985
    %v2062 = vunpack.c.h.b16 %v1985
    %v2063 = vunpack.c.l.b16 %v1986
    %v2064 = vunpack.c.h.b16 %v1986
    %v2065 = vunpack.c.l.b16 %v1987
    %v2066 = vunpack.c.h.b16 %v1987
    %v2067 = vunpack.c.l.b16 %v1988
    %v2068 = vunpack.c.h.b16 %v1988
    %v2069 = vunpack.c.l.b16 %v1989
    %v2070 = vunpack.c.h.b16 %v1989
    %v2071 = vunpack.c.l.b16 %v1990
    %v2072 = vunpack.c.h.b16 %v1990
    %v2073 = vunpack.c.l.b16 %v1991
    %v2074 = vunpack.c.h.b16 %v1991
    %v2075 = vunpack.c.l.b16 %v1992
    %v2076 = vunpack.c.h.b16 %v1992
    %v2077 = vunpack.c.l.b16 %v1993
    %v2078 = vunpack.c.h.b16 %v1993
    %v2079 = vunpack.c.l.b16 %v1994
    %v2080 = vunpack.c.h.b16 %v1994
    %v2081 = vunpack.c.l.b16 %v1995
    %v2082 = vunpack.c.h.b16 %v1995
    %v2083 = vunpack.c.l.b16 %v1996
    %v2084 = vunpack.c.h.b16 %v1996
    %v2085 = vunpack.c.l.b16 %v1997
    %v2086 = vunpack.c.h.b16 %v1997
    %v2087 = vunpack.c.l.b16 %v1998
    %v2088 = vunpack.c.h.b16 %v1998
    %v2089 = vunpack.c.l.b16 %v1999
    %v2090 = vunpack.c.h.b16 %v1999
    %v2091 = vunpack.c.l.b16 %v2000
    %v2092 = vunpack.c.h.b16 %v2000
    %v2093 = vunpack.c.l.b16 %v2001
    %v2094 = vunpack.c.h.b16 %v2001
    %v2095 = vunpack.c.l.b16 %v2002
    %v2096 = vunpack.c.h.b16 %v2002
    %v2097 = vunpack.c.l.b16 %v2003
    %v2098 = vunpack.c.h.b16 %v2003
    %v2099 = vunpack.c.l.b16 %v2004
    %v2100 = vunpack.c.h.b16 %v2004
    %v2101 = vpack.c.b16 %v2039, %v2037
    %v2102 = vpack.c.b16 %v2040, %v2038
    %v2103 = vpack.c.b16 %v2043, %v2041
    %v2104 = vpack.c.b16 %v2044, %v2042
    %v2105 = vpack.c.b16 %v2047, %v2045
    %v2106 = vpack.c.b16 %v2048, %v2046
    %v2107 = vpack.c.b16 %v2051, %v2049
    %v2108 = vpack.c.b16 %v2052, %v2050
    %v2109 = vpack.c.b16 %v2055, %v2053
    %v2110 = vpack.c.b16 %v2056, %v2054
    %v2111 = vpack.c.b16 %v2059, %v2057
    %v2112 = vpack.c.b16 %v2060, %v2058
    %v2113 = vpack.c.b16 %v2063, %v2061
    %v2114 = vpack.c.b16 %v2064, %v2062
    %v2115 = vpack.c.b16 %v2067, %v2065
    %v2116 = vpack.c.b16 %v2068, %v2066
    %v2117 = vpack.c.b16 %v2071, %v2069
    %v2118 = vpack.c.b16 %v2072, %v2070
    %v2119 = vpack.c.b16 %v2075, %v2073
    %v2120 = vpack.c.b16 %v2076, %v2074
    %v2121 = vpack.c.b16 %v2079, %v2077
    %v2122 = vpack.c.b16 %v2080, %v2078
    %v2123 = vpack.c.b16 %v2083, %v2081
    %v2124 = vpack.c.b16 %v2084, %v2082
    %v2125 = vpack.c.b16 %v2087, %v2085
    %v2126 = vpack.c.b16 %v2088, %v2086
    %v2127 = vpack.c.b16 %v2091, %v2089
    %v2128 = vpack.c.b16 %v2092, %v2090
    %v2129 = vpack.c.b16 %v2095, %v2093
    %v2130 = vpack.c.b16 %v2096, %v2094
    %v2131 = vpack.c.b16 %v2099, %v2097
    %v2132 = vpack.c.b16 %v2100, %v2098
    %2165 = vmatprep.subr.bf16.mxu0 %v2102
    %2166 = vmatpush1.bf16.msra.mxu0 %v2101
    %2167 = vmatprep.subr.bf16.mxu0 %v2104
    %2168 = vmatpush1.bf16.msra.mxu0 %v2103
    %2169 = vmatprep.subr.bf16.mxu0 %v2106
    %2170 = vmatpush1.bf16.msra.mxu0 %v2105
    %2171 = vmatprep.subr.bf16.mxu0 %v2108
    %2172 = vmatpush1.bf16.msra.mxu0 %v2107
    %2173 = vmatprep.subr.bf16.mxu0 %v2110
    %2174 = vmatpush1.bf16.msra.mxu0 %v2109
    %2175 = vmatprep.subr.bf16.mxu0 %v2112
    %2176 = vmatpush1.bf16.msra.mxu0 %v2111
    %2177 = vmatprep.subr.bf16.mxu0 %v2114
    %2178 = vmatpush1.bf16.msra.mxu0 %v2113
    %2179 = vmatprep.subr.bf16.mxu0 %v2116
    %2180 = vmatpush1.bf16.msra.mxu0 %v2115
    %2181 = vmatprep.subr.bf16.mxu0 %v2118
    %2182 = vmatpush1.bf16.msra.mxu0 %v2117
    %2183 = vmatprep.subr.bf16.mxu0 %v2120
    %2184 = vmatpush1.bf16.msra.mxu0 %v2119
    %2185 = vmatprep.subr.bf16.mxu0 %v2122
    %2186 = vmatpush1.bf16.msra.mxu0 %v2121
    %2187 = vmatprep.subr.bf16.mxu0 %v2124
    %2188 = vmatpush1.bf16.msra.mxu0 %v2123
    %2189 = vmatprep.subr.bf16.mxu0 %v2126
    %2190 = vmatpush1.bf16.msra.mxu0 %v2125
    %2191 = vmatprep.subr.bf16.mxu0 %v2128
    %2192 = vmatpush1.bf16.msra.mxu0 %v2127
    %2193 = vmatprep.subr.bf16.mxu0 %v2130
    %2194 = vmatpush1.bf16.msra.mxu0 %v2129
    %2195 = vmatprep.subr.bf16.mxu0 %v2132
    %2196 = vmatpush1.bf16.msra.mxu0 %v2131
    %2197 = vmatprep.mubr.bf16.mxu0 %v1971
    %2198 = vmatmul.mubr.bf16.gmra.mrb[0].mxu0 %v1970
    %v2199 = vpop.f32.mrb[0].mxu0
    %v2200 = vadd.f32 0.0, %v2199
    %v2201 = vpop.f32.mrb[0].mxu0
    %v2202 = vadd.f32 0.0, %v2201
    %v2203 = vpop.f32.mrb[0].mxu0
    %v2204 = vadd.f32 0.0, %v2203
    %v2205 = vpop.f32.mrb[0].mxu0
    %v2206 = vadd.f32 0.0, %v2205
    %2207 = vdwg.mxu0
    %v2208 = vadd.f32 %v1912, %v2200
    %v2209 = vadd.f32 %v1913, %v2202
    %v2210 = vadd.f32 %v1914, %v2204
    %v2211 = vadd.f32 %v1915, %v2206
    %s2212 = scalar_lea.vmem %s4, 32
    %v2213 = vld [vmem:[%s2212] sm:$0xf]
    %v2214 = vld [vmem:[%s2212 + $0x4] sm:$0xf]
    %v2217 = vunpack.c.l.b16 %v2213
    %v2218 = vunpack.c.l.b16 %v2214
    %v2219 = vpack.c.b16 %v2218, %v2217
    %v2221 = vsel %vm375, %v2219, 0
    %2223 = vmatprep.subr.bf16.mxu0 %v1035
    %2224 = vmatpush1.bf16.msra.mxu0 %v1034
    %2225 = vmatprep.subr.bf16.mxu0 %v1037
    %2226 = vmatpush1.bf16.msra.mxu0 %v1036
    %2227 = vmatprep.subr.bf16.mxu0 0
    %2228 = vmatpush1.bf16.msra.mxu0 0
    %2229 = vmatprep.subr.bf16.mxu0 0
    %2230 = vmatpush1.bf16.msra.mxu0 0
    %2231 = vmatprep.subr.bf16.mxu0 0
    %2232 = vmatpush1.bf16.msra.mxu0 0
    %2233 = vmatprep.subr.bf16.mxu0 0
    %2234 = vmatpush1.bf16.msra.mxu0 0
    %2235 = vmatprep.subr.bf16.mxu0 0
    %2236 = vmatpush1.bf16.msra.mxu0 0
    %2237 = vmatprep.subr.bf16.mxu0 0
    %2238 = vmatpush1.bf16.msra.mxu0 0
    %2239 = vmatprep.subr.bf16.mxu0 0
    %2240 = vmatpush1.bf16.msra.mxu0 0
    %2241 = vmatprep.subr.bf16.mxu0 0
    %2242 = vmatpush1.bf16.msra.mxu0 0
    %2243 = vmatprep.subr.bf16.mxu0 0
    %2244 = vmatpush1.bf16.msra.mxu0 0
    %2245 = vmatprep.subr.bf16.mxu0 0
    %2246 = vmatpush1.bf16.msra.mxu0 0
    %2247 = vmatprep.subr.bf16.mxu0 0
    %2248 = vmatpush1.bf16.msra.mxu0 0
    %2249 = vmatprep.subr.bf16.mxu0 0
    %2250 = vmatpush1.bf16.msra.mxu0 0
    %2251 = vmatprep.subr.bf16.mxu0 0
    %2252 = vmatpush1.bf16.msra.mxu0 0
    %2253 = vmatprep.subr.bf16.mxu0 0
    %2254 = vmatpush1.bf16.msra.mxu0 0
    %2255 = vmatprep.mubr.bf16.mxu0 0
    %2256 = vmatmul.mubr.bf16.gmra.mrb[0].mxu0 %v2221
    %v2257 = vpop.f32.mrb[0].mxu0
    %v2258 = vadd.f32 0.0, %v2257
    %v2259 = vpop.f32.mrb[0].mxu0
    %v2260 = vadd.f32 0.0, %v2259
    %v2261 = vpop.f32.mrb[0].mxu0
    %v2262 = vadd.f32 0.0, %v2261
    %v2263 = vpop.f32.mrb[0].mxu0
    %v2264 = vadd.f32 0.0, %v2263
    %2265 = vdwg.mxu0
    %v2266 = vpack.c.bf16 %v2262, %v2258
    %v2267 = vpack.c.bf16 %v2264, %v2260
    %s2268 = scalar_lea.vmem [#allocation5], 1024
    %v2269 = vld [vmem:[%s2268] sm:$0xff]
    %v2270 = vld [vmem:[%s2268 + $0x8] sm:$0xff]
    %v2271 = vld [vmem:[%s2268 + $0x10] sm:$0xff]
    %v2272 = vld [vmem:[%s2268 + $0x18] sm:$0xff]
    %v2273 = vld [vmem:[%s2268 + $0x20] sm:$0xff]
    %v2274 = vld [vmem:[%s2268 + $0x28] sm:$0xff]
    %v2275 = vld [vmem:[%s2268 + $0x30] sm:$0xff]
    %v2276 = vld [vmem:[%s2268 + $0x38] sm:$0xff]
    %v2277 = vld [vmem:[%s2268 + $0x40] sm:$0xff]
    %v2278 = vld [vmem:[%s2268 + $0x48] sm:$0xff]
    %v2279 = vld [vmem:[%s2268 + $0x50] sm:$0xff]
    %v2280 = vld [vmem:[%s2268 + $0x58] sm:$0xff]
    %v2281 = vld [vmem:[%s2268 + $0x60] sm:$0xff]
    %v2282 = vld [vmem:[%s2268 + $0x68] sm:$0xff]
    %v2283 = vld [vmem:[%s2268 + $0x70] sm:$0xff]
    %v2284 = vld [vmem:[%s2268 + $0x78] sm:$0xff]
    %v2285 = vld [vmem:[%s2268 + $0x80] sm:$0xff]
    %v2286 = vld [vmem:[%s2268 + $0x88] sm:$0xff]
    %v2287 = vld [vmem:[%s2268 + $0x90] sm:$0xff]
    %v2288 = vld [vmem:[%s2268 + $0x98] sm:$0xff]
    %v2289 = vld [vmem:[%s2268 + $0xa0] sm:$0xff]
    %v2290 = vld [vmem:[%s2268 + $0xa8] sm:$0xff]
    %v2291 = vld [vmem:[%s2268 + $0xb0] sm:$0xff]
    %v2292 = vld [vmem:[%s2268 + $0xb8] sm:$0xff]
    %v2293 = vld [vmem:[%s2268 + $0xc0] sm:$0xff]
    %v2294 = vld [vmem:[%s2268 + $0xc8] sm:$0xff]
    %v2295 = vld [vmem:[%s2268 + $0xd0] sm:$0xff]
    %v2296 = vld [vmem:[%s2268 + $0xd8] sm:$0xff]
    %v2297 = vld [vmem:[%s2268 + $0xe0] sm:$0xff]
    %v2298 = vld [vmem:[%s2268 + $0xe8] sm:$0xff]
    %v2299 = vld [vmem:[%s2268 + $0xf0] sm:$0xff]
    %v2300 = vld [vmem:[%s2268 + $0xf8] sm:$0xff]
    %v2333 = vunpack.c.l.b16 %v2269
    %v2334 = vunpack.c.h.b16 %v2269
    %v2335 = vunpack.c.l.b16 %v2270
    %v2336 = vunpack.c.h.b16 %v2270
    %v2337 = vunpack.c.l.b16 %v2271
    %v2338 = vunpack.c.h.b16 %v2271
    %v2339 = vunpack.c.l.b16 %v2272
    %v2340 = vunpack.c.h.b16 %v2272
    %v2341 = vunpack.c.l.b16 %v2273
    %v2342 = vunpack.c.h.b16 %v2273
    %v2343 = vunpack.c.l.b16 %v2274
    %v2344 = vunpack.c.h.b16 %v2274
    %v2345 = vunpack.c.l.b16 %v2275
    %v2346 = vunpack.c.h.b16 %v2275
    %v2347 = vunpack.c.l.b16 %v2276
    %v2348 = vunpack.c.h.b16 %v2276
    %v2349 = vunpack.c.l.b16 %v2277
    %v2350 = vunpack.c.h.b16 %v2277
    %v2351 = vunpack.c.l.b16 %v2278
    %v2352 = vunpack.c.h.b16 %v2278
    %v2353 = vunpack.c.l.b16 %v2279
    %v2354 = vunpack.c.h.b16 %v2279
    %v2355 = vunpack.c.l.b16 %v2280
    %v2356 = vunpack.c.h.b16 %v2280
    %v2357 = vunpack.c.l.b16 %v2281
    %v2358 = vunpack.c.h.b16 %v2281
    %v2359 = vunpack.c.l.b16 %v2282
    %v2360 = vunpack.c.h.b16 %v2282
    %v2361 = vunpack.c.l.b16 %v2283
    %v2362 = vunpack.c.h.b16 %v2283
    %v2363 = vunpack.c.l.b16 %v2284
    %v2364 = vunpack.c.h.b16 %v2284
    %v2365 = vunpack.c.l.b16 %v2285
    %v2366 = vunpack.c.h.b16 %v2285
    %v2367 = vunpack.c.l.b16 %v2286
    %v2368 = vunpack.c.h.b16 %v2286
    %v2369 = vunpack.c.l.b16 %v2287
    %v2370 = vunpack.c.h.b16 %v2287
    %v2371 = vunpack.c.l.b16 %v2288
    %v2372 = vunpack.c.h.b16 %v2288
    %v2373 = vunpack.c.l.b16 %v2289
    %v2374 = vunpack.c.h.b16 %v2289
    %v2375 = vunpack.c.l.b16 %v2290
    %v2376 = vunpack.c.h.b16 %v2290
    %v2377 = vunpack.c.l.b16 %v2291
    %v2378 = vunpack.c.h.b16 %v2291
    %v2379 = vunpack.c.l.b16 %v2292
    %v2380 = vunpack.c.h.b16 %v2292
    %v2381 = vunpack.c.l.b16 %v2293
    %v2382 = vunpack.c.h.b16 %v2293
    %v2383 = vunpack.c.l.b16 %v2294
    %v2384 = vunpack.c.h.b16 %v2294
    %v2385 = vunpack.c.l.b16 %v2295
    %v2386 = vunpack.c.h.b16 %v2295
    %v2387 = vunpack.c.l.b16 %v2296
    %v2388 = vunpack.c.h.b16 %v2296
    %v2389 = vunpack.c.l.b16 %v2297
    %v2390 = vunpack.c.h.b16 %v2297
    %v2391 = vunpack.c.l.b16 %v2298
    %v2392 = vunpack.c.h.b16 %v2298
    %v2393 = vunpack.c.l.b16 %v2299
    %v2394 = vunpack.c.h.b16 %v2299
    %v2395 = vunpack.c.l.b16 %v2300
    %v2396 = vunpack.c.h.b16 %v2300
    %v2397 = vpack.c.b16 %v2335, %v2333
    %v2398 = vpack.c.b16 %v2336, %v2334
    %v2399 = vpack.c.b16 %v2339, %v2337
    %v2400 = vpack.c.b16 %v2340, %v2338
    %v2401 = vpack.c.b16 %v2343, %v2341
    %v2402 = vpack.c.b16 %v2344, %v2342
    %v2403 = vpack.c.b16 %v2347, %v2345
    %v2404 = vpack.c.b16 %v2348, %v2346
    %v2405 = vpack.c.b16 %v2351, %v2349
    %v2406 = vpack.c.b16 %v2352, %v2350
    %v2407 = vpack.c.b16 %v2355, %v2353
    %v2408 = vpack.c.b16 %v2356, %v2354
    %v2409 = vpack.c.b16 %v2359, %v2357
    %v2410 = vpack.c.b16 %v2360, %v2358
    %v2411 = vpack.c.b16 %v2363, %v2361
    %v2412 = vpack.c.b16 %v2364, %v2362
    %v2413 = vpack.c.b16 %v2367, %v2365
    %v2414 = vpack.c.b16 %v2368, %v2366
    %v2415 = vpack.c.b16 %v2371, %v2369
    %v2416 = vpack.c.b16 %v2372, %v2370
    %v2417 = vpack.c.b16 %v2375, %v2373
    %v2418 = vpack.c.b16 %v2376, %v2374
    %v2419 = vpack.c.b16 %v2379, %v2377
    %v2420 = vpack.c.b16 %v2380, %v2378
    %v2421 = vpack.c.b16 %v2383, %v2381
    %v2422 = vpack.c.b16 %v2384, %v2382
    %v2423 = vpack.c.b16 %v2387, %v2385
    %v2424 = vpack.c.b16 %v2388, %v2386
    %v2425 = vpack.c.b16 %v2391, %v2389
    %v2426 = vpack.c.b16 %v2392, %v2390
    %v2427 = vpack.c.b16 %v2395, %v2393
    %v2428 = vpack.c.b16 %v2396, %v2394
    %2461 = vmatprep.subr.bf16.mxu0 %v2398
    %2462 = vmatpush1.bf16.msra.mxu0 %v2397
    %2463 = vmatprep.subr.bf16.mxu0 %v2400
    %2464 = vmatpush1.bf16.msra.mxu0 %v2399
    %2465 = vmatprep.subr.bf16.mxu0 %v2402
    %2466 = vmatpush1.bf16.msra.mxu0 %v2401
    %2467 = vmatprep.subr.bf16.mxu0 %v2404
    %2468 = vmatpush1.bf16.msra.mxu0 %v2403
    %2469 = vmatprep.subr.bf16.mxu0 %v2406
    %2470 = vmatpush1.bf16.msra.mxu0 %v2405
    %2471 = vmatprep.subr.bf16.mxu0 %v2408
    %2472 = vmatpush1.bf16.msra.mxu0 %v2407
    %2473 = vmatprep.subr.bf16.mxu0 %v2410
    %2474 = vmatpush1.bf16.msra.mxu0 %v2409
    %2475 = vmatprep.subr.bf16.mxu0 %v2412
    %2476 = vmatpush1.bf16.msra.mxu0 %v2411
    %2477 = vmatprep.subr.bf16.mxu0 %v2414
    %2478 = vmatpush1.bf16.msra.mxu0 %v2413
    %2479 = vmatprep.subr.bf16.mxu0 %v2416
    %2480 = vmatpush1.bf16.msra.mxu0 %v2415
    %2481 = vmatprep.subr.bf16.mxu0 %v2418
    %2482 = vmatpush1.bf16.msra.mxu0 %v2417
    %2483 = vmatprep.subr.bf16.mxu0 %v2420
    %2484 = vmatpush1.bf16.msra.mxu0 %v2419
    %2485 = vmatprep.subr.bf16.mxu0 %v2422
    %2486 = vmatpush1.bf16.msra.mxu0 %v2421
    %2487 = vmatprep.subr.bf16.mxu0 %v2424
    %2488 = vmatpush1.bf16.msra.mxu0 %v2423
    %2489 = vmatprep.subr.bf16.mxu0 %v2426
    %2490 = vmatpush1.bf16.msra.mxu0 %v2425
    %2491 = vmatprep.subr.bf16.mxu0 %v2428
    %2492 = vmatpush1.bf16.msra.mxu0 %v2427
    %2493 = vmatprep.mubr.bf16.mxu0 %v2267
    %2494 = vmatmul.mubr.bf16.gmra.mrb[0].mxu0 %v2266
    %v2495 = vpop.f32.mrb[0].mxu0
    %v2496 = vadd.f32 0.0, %v2495
    %v2497 = vpop.f32.mrb[0].mxu0
    %v2498 = vadd.f32 0.0, %v2497
    %v2499 = vpop.f32.mrb[0].mxu0
    %v2500 = vadd.f32 0.0, %v2499
    %v2501 = vpop.f32.mrb[0].mxu0
    %v2502 = vadd.f32 0.0, %v2501
    %2503 = vdwg.mxu0
    %v2504 = vadd.f32 %v2208, %v2496
    %v2505 = vadd.f32 %v2209, %v2498
    %v2506 = vadd.f32 %v2210, %v2500
    %v2507 = vadd.f32 %v2211, %v2502
    %v2508 = vld [vmem:[#allocation7] sm:$0x3]
    %v2510 = vlaneseq
    %v2511 = vshrl.u32 %v2510, 7
    %v2512 = vsub.s32 0, %v2511
    %v2513 = vrot.slane %v2508, %v2512
    %v2514 = vlaneseq
    %v2515 = vshrl.u32 %v2514, 7
    %v2516 = vsub.s32 1, %v2515
    %v2517 = vrot.slane %v2508, %v2516
    %v2520 = vadd.f32 %v2504, %v2513
    %v2521 = vadd.f32 %v2505, %v2517
    %v2522 = vadd.f32 %v2506, %v2513
    %v2523 = vadd.f32 %v2507, %v2517
    %v2524 = vmax.f32 %v2520, 0.0
    %v2525 = vmax.f32 %v2521, 0.0
    %v2526 = vmax.f32 %v2522, 0.0
    %v2527 = vmax.f32 %v2523, 0.0
    %v2528 = vpack.c.bf16 %v2526, %v2524
    %v2529 = vpack.c.bf16 %v2527, %v2525
    %v2530 = vld [vmem:[%s7] sm:$0xf]
    %vm2531 = vcmask 130048
    %v2533 = vsel %vm2531, %v2530, 0
    %2535 = vmatprep.subr.bf16.mxu0 %v2529
    %2536 = vmatpush1.bf16.msra.mxu0 %v2528
    %2537 = vmatprep.subr.bf16.mxu0 0
    %2538 = vmatpush1.bf16.msra.mxu0 0
    %2539 = vmatprep.subr.bf16.mxu0 0
    %2540 = vmatpush1.bf16.msra.mxu0 0
    %2541 = vmatprep.subr.bf16.mxu0 0
    %2542 = vmatpush1.bf16.msra.mxu0 0
    %2543 = vmatprep.subr.bf16.mxu0 0
    %2544 = vmatpush1.bf16.msra.mxu0 0
    %2545 = vmatprep.subr.bf16.mxu0 0
    %2546 = vmatpush1.bf16.msra.mxu0 0
    %2547 = vmatprep.subr.bf16.mxu0 0
    %2548 = vmatpush1.bf16.msra.mxu0 0
    %2549 = vmatprep.subr.bf16.mxu0 0
    %2550 = vmatpush1.bf16.msra.mxu0 0
    %2551 = vmatprep.subr.bf16.mxu0 0
    %2552 = vmatpush1.bf16.msra.mxu0 0
    %2553 = vmatprep.subr.bf16.mxu0 0
    %2554 = vmatpush1.bf16.msra.mxu0 0
    %2555 = vmatprep.subr.bf16.mxu0 0
    %2556 = vmatpush1.bf16.msra.mxu0 0
    %2557 = vmatprep.subr.bf16.mxu0 0
    %2558 = vmatpush1.bf16.msra.mxu0 0
    %2559 = vmatprep.subr.bf16.mxu0 0
    %2560 = vmatpush1.bf16.msra.mxu0 0
    %2561 = vmatprep.subr.bf16.mxu0 0
    %2562 = vmatpush1.bf16.msra.mxu0 0
    %2563 = vmatprep.subr.bf16.mxu0 0
    %2564 = vmatpush1.bf16.msra.mxu0 0
    %2565 = vmatprep.subr.bf16.mxu0 0
    %2566 = vmatpush1.bf16.msra.mxu0 0
    %2567 = vmatprep.mubr.bf16.mxu0 0
    %2568 = vmatmul.mubr.bf16.gmra.mrb[0].mxu0 %v2533
    %v2569 = vpop.f32.mrb[0].mxu0
    %v2570 = vadd.f32 0.0, %v2569
    %v2571 = vpop.f32.mrb[0].mxu0
    %v2572 = vadd.f32 0.0, %v2571
    %v2573 = vpop.f32.mrb[0].mxu0
    %v2574 = vpop.f32.mrb[0].mxu0
    %2575 = vdwg.mxu0
    %v2576 = vpack.c.bf16 %v2570, %v2570
    %v2577 = vpack.c.bf16 %v2572, %v2572
    %v2578 = vld [vmem:[#allocation8] sm:$0xf]
    %v2579 = vld [vmem:[#allocation8 + $0x4] sm:$0xf]
    %v2580 = vld [vmem:[#allocation8 + $0x8] sm:$0xf]
    %v2581 = vld [vmem:[#allocation8 + $0xc] sm:$0xf]
    %v2582 = vld [vmem:[#allocation8 + $0x10] sm:$0xf]
    %v2583 = vld [vmem:[#allocation8 + $0x14] sm:$0xf]
    %v2584 = vld [vmem:[#allocation8 + $0x18] sm:$0xf]
    %v2585 = vld [vmem:[#allocation8 + $0x1c] sm:$0xf]
    %v2586 = vld [vmem:[#allocation8 + $0x20] sm:$0xf]
    %v2587 = vld [vmem:[#allocation8 + $0x24] sm:$0xf]
    %v2588 = vld [vmem:[#allocation8 + $0x28] sm:$0xf]
    %v2589 = vld [vmem:[#allocation8 + $0x2c] sm:$0xf]
    %v2590 = vld [vmem:[#allocation8 + $0x30] sm:$0xf]
    %v2591 = vld [vmem:[#allocation8 + $0x34] sm:$0xf]
    %v2592 = vld [vmem:[#allocation8 + $0x38] sm:$0xf]
    %v2593 = vld [vmem:[#allocation8 + $0x3c] sm:$0xf]
    %v2594 = vld [vmem:[#allocation8 + $0x40] sm:$0xf]
    %v2595 = vld [vmem:[#allocation8 + $0x44] sm:$0xf]
    %v2596 = vld [vmem:[#allocation8 + $0x48] sm:$0xf]
    %v2597 = vld [vmem:[#allocation8 + $0x4c] sm:$0xf]
    %v2598 = vld [vmem:[#allocation8 + $0x50] sm:$0xf]
    %v2599 = vld [vmem:[#allocation8 + $0x54] sm:$0xf]
    %v2600 = vld [vmem:[#allocation8 + $0x58] sm:$0xf]
    %v2601 = vld [vmem:[#allocation8 + $0x5c] sm:$0xf]
    %v2602 = vld [vmem:[#allocation8 + $0x60] sm:$0xf]
    %v2603 = vld [vmem:[#allocation8 + $0x64] sm:$0xf]
    %v2604 = vld [vmem:[#allocation8 + $0x68] sm:$0xf]
    %v2605 = vld [vmem:[#allocation8 + $0x6c] sm:$0xf]
    %v2606 = vld [vmem:[#allocation8 + $0x70] sm:$0xf]
    %v2607 = vld [vmem:[#allocation8 + $0x74] sm:$0xf]
    %v2608 = vld [vmem:[#allocation8 + $0x78] sm:$0xf]
    %v2609 = vld [vmem:[#allocation8 + $0x7c] sm:$0xf]
    %s2610 = scalar_lea.vmem %s7, 4
    %v2611 = vld [vmem:[%s2610] sm:$0xf]
    %v2613 = vsel %vm2531, %v2611, 0
    %2615 = vmatprep.subr.bf16.mxu0 %v2529
    %2616 = vmatpush1.bf16.msra.mxu0 %v2528
    %2617 = vmatprep.subr.bf16.mxu0 0
    %2618 = vmatpush1.bf16.msra.mxu0 0
    %2619 = vmatprep.subr.bf16.mxu0 0
    %2620 = vmatpush1.bf16.msra.mxu0 0
    %2621 = vmatprep.subr.bf16.mxu0 0
    %2622 = vmatpush1.bf16.msra.mxu0 0
    %2623 = vmatprep.subr.bf16.mxu0 0
    %2624 = vmatpush1.bf16.msra.mxu0 0
    %2625 = vmatprep.subr.bf16.mxu0 0
    %2626 = vmatpush1.bf16.msra.mxu0 0
    %2627 = vmatprep.subr.bf16.mxu0 0
    %2628 = vmatpush1.bf16.msra.mxu0 0
    %2629 = vmatprep.subr.bf16.mxu0 0
    %2630 = vmatpush1.bf16.msra.mxu0 0
    %2631 = vmatprep.subr.bf16.mxu0 0
    %2632 = vmatpush1.bf16.msra.mxu0 0
    %2633 = vmatprep.subr.bf16.mxu0 0
    %2634 = vmatpush1.bf16.msra.mxu0 0
    %2635 = vmatprep.subr.bf16.mxu0 0
    %2636 = vmatpush1.bf16.msra.mxu0 0
    %2637 = vmatprep.subr.bf16.mxu0 0
    %2638 = vmatpush1.bf16.msra.mxu0 0
    %2639 = vmatprep.subr.bf16.mxu0 0
    %2640 = vmatpush1.bf16.msra.mxu0 0
    %2641 = vmatprep.subr.bf16.mxu0 0
    %2642 = vmatpush1.bf16.msra.mxu0 0
    %2643 = vmatprep.subr.bf16.mxu0 0
    %2644 = vmatpush1.bf16.msra.mxu0 0
    %2645 = vmatprep.subr.bf16.mxu0 0
    %2646 = vmatpush1.bf16.msra.mxu0 0
    %2647 = vmatprep.mubr.bf16.mxu0 0
    %2648 = vmatmul.mubr.bf16.gmra.mrb[0].mxu0 %v2613
    %v2649 = vpop.f32.mrb[0].mxu0
    %v2650 = vadd.f32 0.0, %v2649
    %v2651 = vpop.f32.mrb[0].mxu0
    %v2652 = vadd.f32 0.0, %v2651
    %v2653 = vpop.f32.mrb[0].mxu0
    %v2654 = vpop.f32.mrb[0].mxu0
    %2655 = vdwg.mxu0
    %v2656 = vpack.c.bf16 %v2650, %v2650
    %v2657 = vpack.c.bf16 %v2652, %v2652
    %s2658 = scalar_lea.vmem [#allocation8], 128
    %v2659 = vld [vmem:[%s2658] sm:$0xf]
    %v2660 = vld [vmem:[%s2658 + $0x4] sm:$0xf]
    %v2661 = vld [vmem:[%s2658 + $0x8] sm:$0xf]
    %v2662 = vld [vmem:[%s2658 + $0xc] sm:$0xf]
    %v2663 = vld [vmem:[%s2658 + $0x10] sm:$0xf]
    %v2664 = vld [vmem:[%s2658 + $0x14] sm:$0xf]
    %v2665 = vld [vmem:[%s2658 + $0x18] sm:$0xf]
    %v2666 = vld [vmem:[%s2658 + $0x1c] sm:$0xf]
    %v2667 = vld [vmem:[%s2658 + $0x20] sm:$0xf]
    %v2668 = vld [vmem:[%s2658 + $0x24] sm:$0xf]
    %v2669 = vld [vmem:[%s2658 + $0x28] sm:$0xf]
    %v2670 = vld [vmem:[%s2658 + $0x2c] sm:$0xf]
    %v2671 = vld [vmem:[%s2658 + $0x30] sm:$0xf]
    %v2672 = vld [vmem:[%s2658 + $0x34] sm:$0xf]
    %v2673 = vld [vmem:[%s2658 + $0x38] sm:$0xf]
    %v2674 = vld [vmem:[%s2658 + $0x3c] sm:$0xf]
    %v2675 = vld [vmem:[%s2658 + $0x40] sm:$0xf]
    %v2676 = vld [vmem:[%s2658 + $0x44] sm:$0xf]
    %v2677 = vld [vmem:[%s2658 + $0x48] sm:$0xf]
    %v2678 = vld [vmem:[%s2658 + $0x4c] sm:$0xf]
    %v2679 = vld [vmem:[%s2658 + $0x50] sm:$0xf]
    %v2680 = vld [vmem:[%s2658 + $0x54] sm:$0xf]
    %v2681 = vld [vmem:[%s2658 + $0x58] sm:$0xf]
    %v2682 = vld [vmem:[%s2658 + $0x5c] sm:$0xf]
    %v2683 = vld [vmem:[%s2658 + $0x60] sm:$0xf]
    %v2684 = vld [vmem:[%s2658 + $0x64] sm:$0xf]
    %v2685 = vld [vmem:[%s2658 + $0x68] sm:$0xf]
    %v2686 = vld [vmem:[%s2658 + $0x6c] sm:$0xf]
    %v2687 = vld [vmem:[%s2658 + $0x70] sm:$0xf]
    %v2688 = vld [vmem:[%s2658 + $0x74] sm:$0xf]
    %v2689 = vld [vmem:[%s2658 + $0x78] sm:$0xf]
    %v2690 = vld [vmem:[%s2658 + $0x7c] sm:$0xf]
    %v2723 = vunpack.c.l.b16 %v2659
    %v2724 = vunpack.c.l.b16 %v2660
    %v2725 = vunpack.c.l.b16 %v2661
    %v2726 = vunpack.c.l.b16 %v2662
    %v2727 = vunpack.c.l.b16 %v2663
    %v2728 = vunpack.c.l.b16 %v2664
    %v2729 = vunpack.c.l.b16 %v2665
    %v2730 = vunpack.c.l.b16 %v2666
    %v2731 = vunpack.c.l.b16 %v2667
    %v2732 = vunpack.c.l.b16 %v2668
    %v2733 = vunpack.c.l.b16 %v2669
    %v2734 = vunpack.c.l.b16 %v2670
    %v2735 = vunpack.c.l.b16 %v2671
    %v2736 = vunpack.c.l.b16 %v2672
    %v2737 = vunpack.c.l.b16 %v2673
    %v2738 = vunpack.c.l.b16 %v2674
    %v2739 = vunpack.c.l.b16 %v2675
    %v2740 = vunpack.c.l.b16 %v2676
    %v2741 = vunpack.c.l.b16 %v2677
    %v2742 = vunpack.c.l.b16 %v2678
    %v2743 = vunpack.c.l.b16 %v2679
    %v2744 = vunpack.c.l.b16 %v2680
    %v2745 = vunpack.c.l.b16 %v2681
    %v2746 = vunpack.c.l.b16 %v2682
    %v2747 = vunpack.c.l.b16 %v2683
    %v2748 = vunpack.c.l.b16 %v2684
    %v2749 = vunpack.c.l.b16 %v2685
    %v2750 = vunpack.c.l.b16 %v2686
    %v2751 = vunpack.c.l.b16 %v2687
    %v2752 = vunpack.c.l.b16 %v2688
    %v2753 = vunpack.c.l.b16 %v2689
    %v2754 = vunpack.c.l.b16 %v2690
    %v2755 = vpack.c.b16 %v2724, %v2723
    %v2756 = vpack.c.b16 %v2726, %v2725
    %v2757 = vpack.c.b16 %v2728, %v2727
    %v2758 = vpack.c.b16 %v2730, %v2729
    %v2759 = vpack.c.b16 %v2732, %v2731
    %v2760 = vpack.c.b16 %v2734, %v2733
    %v2761 = vpack.c.b16 %v2736, %v2735
    %v2762 = vpack.c.b16 %v2738, %v2737
    %v2763 = vpack.c.b16 %v2740, %v2739
    %v2764 = vpack.c.b16 %v2742, %v2741
    %v2765 = vpack.c.b16 %v2744, %v2743
    %v2766 = vpack.c.b16 %v2746, %v2745
    %v2767 = vpack.c.b16 %v2748, %v2747
    %v2768 = vpack.c.b16 %v2750, %v2749
    %v2769 = vpack.c.b16 %v2752, %v2751
    %v2770 = vpack.c.b16 %v2754, %v2753
    %2787 = vmatprep.subr.bf16.mxu0 0
    %2788 = vmatpush1.bf16.msra.mxu0 %v2755
    %2789 = vmatprep.subr.bf16.mxu0 0
    %2790 = vmatpush1.bf16.msra.mxu0 %v2756
    %2791 = vmatprep.subr.bf16.mxu0 0
    %2792 = vmatpush1.bf16.msra.mxu0 %v2757
    %2793 = vmatprep.subr.bf16.mxu0 0
    %2794 = vmatpush1.bf16.msra.mxu0 %v2758
    %2795 = vmatprep.subr.bf16.mxu0 0
    %2796 = vmatpush1.bf16.msra.mxu0 %v2759
    %2797 = vmatprep.subr.bf16.mxu0 0
    %2798 = vmatpush1.bf16.msra.mxu0 %v2760
    %2799 = vmatprep.subr.bf16.mxu0 0
    %2800 = vmatpush1.bf16.msra.mxu0 %v2761
    %2801 = vmatprep.subr.bf16.mxu0 0
    %2802 = vmatpush1.bf16.msra.mxu0 %v2762
    %2803 = vmatprep.subr.bf16.mxu0 0
    %2804 = vmatpush1.bf16.msra.mxu0 %v2763
    %2805 = vmatprep.subr.bf16.mxu0 0
    %2806 = vmatpush1.bf16.msra.mxu0 %v2764
    %2807 = vmatprep.subr.bf16.mxu0 0
    %2808 = vmatpush1.bf16.msra.mxu0 %v2765
    %2809 = vmatprep.subr.bf16.mxu0 0
    %2810 = vmatpush1.bf16.msra.mxu0 %v2766
    %2811 = vmatprep.subr.bf16.mxu0 0
    %2812 = vmatpush1.bf16.msra.mxu0 %v2767
    %2813 = vmatprep.subr.bf16.mxu0 0
    %2814 = vmatpush1.bf16.msra.mxu0 %v2768
    %2815 = vmatprep.subr.bf16.mxu0 0
    %2816 = vmatpush1.bf16.msra.mxu0 %v2769
    %2817 = vmatprep.subr.bf16.mxu0 0
    %2818 = vmatpush1.bf16.msra.mxu0 %v2770
    %2819 = vmatprep.mubr.bf16.mxu0 %v2657
    %2820 = vmatmul.mubr.bf16.gmra.mrb[0].mxu0 %v2656
    %v2821 = vpop.f32.mrb[0].mxu0
    %v2822 = vadd.f32 0.0, %v2821
    %v2823 = vpop.f32.mrb[0].mxu0
    %v2824 = vpop.f32.mrb[0].mxu0
    %v2825 = vpop.f32.mrb[0].mxu0
    %2826 = vdwg.mxu0
    %v2859 = vunpack.c.l.b16 %v2578
    %v2860 = vunpack.c.l.b16 %v2579
    %v2861 = vunpack.c.l.b16 %v2580
    %v2862 = vunpack.c.l.b16 %v2581
    %v2863 = vunpack.c.l.b16 %v2582
    %v2864 = vunpack.c.l.b16 %v2583
    %v2865 = vunpack.c.l.b16 %v2584
    %v2866 = vunpack.c.l.b16 %v2585
    %v2867 = vunpack.c.l.b16 %v2586
    %v2868 = vunpack.c.l.b16 %v2587
    %v2869 = vunpack.c.l.b16 %v2588
    %v2870 = vunpack.c.l.b16 %v2589
    %v2871 = vunpack.c.l.b16 %v2590
    %v2872 = vunpack.c.l.b16 %v2591
    %v2873 = vunpack.c.l.b16 %v2592
    %v2874 = vunpack.c.l.b16 %v2593
    %v2875 = vunpack.c.l.b16 %v2594
    %v2876 = vunpack.c.l.b16 %v2595
    %v2877 = vunpack.c.l.b16 %v2596
    %v2878 = vunpack.c.l.b16 %v2597
    %v2879 = vunpack.c.l.b16 %v2598
    %v2880 = vunpack.c.l.b16 %v2599
    %v2881 = vunpack.c.l.b16 %v2600
    %v2882 = vunpack.c.l.b16 %v2601
    %v2883 = vunpack.c.l.b16 %v2602
    %v2884 = vunpack.c.l.b16 %v2603
    %v2885 = vunpack.c.l.b16 %v2604
    %v2886 = vunpack.c.l.b16 %v2605
    %v2887 = vunpack.c.l.b16 %v2606
    %v2888 = vunpack.c.l.b16 %v2607
    %v2889 = vunpack.c.l.b16 %v2608
    %v2890 = vunpack.c.l.b16 %v2609
    %v2891 = vpack.c.b16 %v2860, %v2859
    %v2892 = vpack.c.b16 %v2862, %v2861
    %v2893 = vpack.c.b16 %v2864, %v2863
    %v2894 = vpack.c.b16 %v2866, %v2865
    %v2895 = vpack.c.b16 %v2868, %v2867
    %v2896 = vpack.c.b16 %v2870, %v2869
    %v2897 = vpack.c.b16 %v2872, %v2871
    %v2898 = vpack.c.b16 %v2874, %v2873
    %v2899 = vpack.c.b16 %v2876, %v2875
    %v2900 = vpack.c.b16 %v2878, %v2877
    %v2901 = vpack.c.b16 %v2880, %v2879
    %v2902 = vpack.c.b16 %v2882, %v2881
    %v2903 = vpack.c.b16 %v2884, %v2883
    %v2904 = vpack.c.b16 %v2886, %v2885
    %v2905 = vpack.c.b16 %v2888, %v2887
    %v2906 = vpack.c.b16 %v2890, %v2889
    %2923 = vmatprep.subr.bf16.mxu0 0
    %2924 = vmatpush1.bf16.msra.mxu0 %v2891
    %2925 = vmatprep.subr.bf16.mxu0 0
    %2926 = vmatpush1.bf16.msra.mxu0 %v2892
    %2927 = vmatprep.subr.bf16.mxu0 0
    %2928 = vmatpush1.bf16.msra.mxu0 %v2893
    %2929 = vmatprep.subr.bf16.mxu0 0
    %2930 = vmatpush1.bf16.msra.mxu0 %v2894
    %2931 = vmatprep.subr.bf16.mxu0 0
    %2932 = vmatpush1.bf16.msra.mxu0 %v2895
    %2933 = vmatprep.subr.bf16.mxu0 0
    %2934 = vmatpush1.bf16.msra.mxu0 %v2896
    %2935 = vmatprep.subr.bf16.mxu0 0
    %2936 = vmatpush1.bf16.msra.mxu0 %v2897
    %2937 = vmatprep.subr.bf16.mxu0 0
    %2938 = vmatpush1.bf16.msra.mxu0 %v2898
    %2939 = vmatprep.subr.bf16.mxu0 0
    %2940 = vmatpush1.bf16.msra.mxu0 %v2899
    %2941 = vmatprep.subr.bf16.mxu0 0
    %2942 = vmatpush1.bf16.msra.mxu0 %v2900
    %2943 = vmatprep.subr.bf16.mxu0 0
    %2944 = vmatpush1.bf16.msra.mxu0 %v2901
    %2945 = vmatprep.subr.bf16.mxu0 0
    %2946 = vmatpush1.bf16.msra.mxu0 %v2902
    %2947 = vmatprep.subr.bf16.mxu0 0
    %2948 = vmatpush1.bf16.msra.mxu0 %v2903
    %2949 = vmatprep.subr.bf16.mxu0 0
    %2950 = vmatpush1.bf16.msra.mxu0 %v2904
    %2951 = vmatprep.subr.bf16.mxu0 0
    %2952 = vmatpush1.bf16.msra.mxu0 %v2905
    %2953 = vmatprep.subr.bf16.mxu0 0
    %2954 = vmatpush1.bf16.msra.mxu0 %v2906
    %2955 = vmatprep.mubr.bf16.mxu0 %v2577
    %2956 = vmatmul.mubr.bf16.gmra.mrb[0].mxu0 %v2576
    %v2957 = vpop.f32.mrb[0].mxu0
    %v2958 = vadd.f32 %v2822, %v2957
    %v2959 = vpop.f32.mrb[0].mxu0
    %v2960 = vpop.f32.mrb[0].mxu0
    %v2961 = vpop.f32.mrb[0].mxu0
    %2962 = vdwg.mxu0
    %s2963 = scalar_lea.vmem %s7, 8
    %v2964 = vld [vmem:[%s2963] sm:$0xf]
    %v2966 = vsel %vm2531, %v2964, 0
    %2968 = vmatprep.subr.bf16.mxu0 %v2529
    %2969 = vmatpush1.bf16.msra.mxu0 %v2528
    %2970 = vmatprep.subr.bf16.mxu0 0
    %2971 = vmatpush1.bf16.msra.mxu0 0
    %2972 = vmatprep.subr.bf16.mxu0 0
    %2973 = vmatpush1.bf16.msra.mxu0 0
    %2974 = vmatprep.subr.bf16.mxu0 0
    %2975 = vmatpush1.bf16.msra.mxu0 0
    %2976 = vmatprep.subr.bf16.mxu0 0
    %2977 = vmatpush1.bf16.msra.mxu0 0
    %2978 = vmatprep.subr.bf16.mxu0 0
    %2979 = vmatpush1.bf16.msra.mxu0 0
    %2980 = vmatprep.subr.bf16.mxu0 0
    %2981 = vmatpush1.bf16.msra.mxu0 0
    %2982 = vmatprep.subr.bf16.mxu0 0
    %2983 = vmatpush1.bf16.msra.mxu0 0
    %2984 = vmatprep.subr.bf16.mxu0 0
    %2985 = vmatpush1.bf16.msra.mxu0 0
    %2986 = vmatprep.subr.bf16.mxu0 0
    %2987 = vmatpush1.bf16.msra.mxu0 0
    %2988 = vmatprep.subr.bf16.mxu0 0
    %2989 = vmatpush1.bf16.msra.mxu0 0
    %2990 = vmatprep.subr.bf16.mxu0 0
    %2991 = vmatpush1.bf16.msra.mxu0 0
    %2992 = vmatprep.subr.bf16.mxu0 0
    %2993 = vmatpush1.bf16.msra.mxu0 0
    %2994 = vmatprep.subr.bf16.mxu0 0
    %2995 = vmatpush1.bf16.msra.mxu0 0
    %2996 = vmatprep.subr.bf16.mxu0 0
    %2997 = vmatpush1.bf16.msra.mxu0 0
    %2998 = vmatprep.subr.bf16.mxu0 0
    %2999 = vmatpush1.bf16.msra.mxu0 0
    %3000 = vmatprep.mubr.bf16.mxu0 0
    %3001 = vmatmul.mubr.bf16.gmra.mrb[0].mxu0 %v2966
    %v3002 = vpop.f32.mrb[0].mxu0
    %v3003 = vadd.f32 0.0, %v3002
    %v3004 = vpop.f32.mrb[0].mxu0
    %v3005 = vadd.f32 0.0, %v3004
    %v3006 = vpop.f32.mrb[0].mxu0
    %v3007 = vpop.f32.mrb[0].mxu0
    %3008 = vdwg.mxu0
    %v3009 = vpack.c.bf16 %v3003, %v3003
    %v3010 = vpack.c.bf16 %v3005, %v3005
    %s3011 = scalar_lea.vmem [#allocation8], 256
    %v3012 = vld [vmem:[%s3011] sm:$0xf]
    %v3013 = vld [vmem:[%s3011 + $0x4] sm:$0xf]
    %v3014 = vld [vmem:[%s3011 + $0x8] sm:$0xf]
    %v3015 = vld [vmem:[%s3011 + $0xc] sm:$0xf]
    %v3016 = vld [vmem:[%s3011 + $0x10] sm:$0xf]
    %v3017 = vld [vmem:[%s3011 + $0x14] sm:$0xf]
    %v3018 = vld [vmem:[%s3011 + $0x18] sm:$0xf]
    %v3019 = vld [vmem:[%s3011 + $0x1c] sm:$0xf]
    %v3020 = vld [vmem:[%s3011 + $0x20] sm:$0xf]
    %v3021 = vld [vmem:[%s3011 + $0x24] sm:$0xf]
    %v3022 = vld [vmem:[%s3011 + $0x28] sm:$0xf]
    %v3023 = vld [vmem:[%s3011 + $0x2c] sm:$0xf]
    %v3024 = vld [vmem:[%s3011 + $0x30] sm:$0xf]
    %v3025 = vld [vmem:[%s3011 + $0x34] sm:$0xf]
    %v3026 = vld [vmem:[%s3011 + $0x38] sm:$0xf]
    %v3027 = vld [vmem:[%s3011 + $0x3c] sm:$0xf]
    %v3028 = vld [vmem:[%s3011 + $0x40] sm:$0xf]
    %v3029 = vld [vmem:[%s3011 + $0x44] sm:$0xf]
    %v3030 = vld [vmem:[%s3011 + $0x48] sm:$0xf]
    %v3031 = vld [vmem:[%s3011 + $0x4c] sm:$0xf]
    %v3032 = vld [vmem:[%s3011 + $0x50] sm:$0xf]
    %v3033 = vld [vmem:[%s3011 + $0x54] sm:$0xf]
    %v3034 = vld [vmem:[%s3011 + $0x58] sm:$0xf]
    %v3035 = vld [vmem:[%s3011 + $0x5c] sm:$0xf]
    %v3036 = vld [vmem:[%s3011 + $0x60] sm:$0xf]
    %v3037 = vld [vmem:[%s3011 + $0x64] sm:$0xf]
    %v3038 = vld [vmem:[%s3011 + $0x68] sm:$0xf]
    %v3039 = vld [vmem:[%s3011 + $0x6c] sm:$0xf]
    %v3040 = vld [vmem:[%s3011 + $0x70] sm:$0xf]
    %v3041 = vld [vmem:[%s3011 + $0x74] sm:$0xf]
    %v3042 = vld [vmem:[%s3011 + $0x78] sm:$0xf]
    %v3043 = vld [vmem:[%s3011 + $0x7c] sm:$0xf]
    %v3076 = vunpack.c.l.b16 %v3012
    %v3077 = vunpack.c.l.b16 %v3013
    %v3078 = vunpack.c.l.b16 %v3014
    %v3079 = vunpack.c.l.b16 %v3015
    %v3080 = vunpack.c.l.b16 %v3016
    %v3081 = vunpack.c.l.b16 %v3017
    %v3082 = vunpack.c.l.b16 %v3018
    %v3083 = vunpack.c.l.b16 %v3019
    %v3084 = vunpack.c.l.b16 %v3020
    %v3085 = vunpack.c.l.b16 %v3021
    %v3086 = vunpack.c.l.b16 %v3022
    %v3087 = vunpack.c.l.b16 %v3023
    %v3088 = vunpack.c.l.b16 %v3024
    %v3089 = vunpack.c.l.b16 %v3025
    %v3090 = vunpack.c.l.b16 %v3026
    %v3091 = vunpack.c.l.b16 %v3027
    %v3092 = vunpack.c.l.b16 %v3028
    %v3093 = vunpack.c.l.b16 %v3029
    %v3094 = vunpack.c.l.b16 %v3030
    %v3095 = vunpack.c.l.b16 %v3031
    %v3096 = vunpack.c.l.b16 %v3032
    %v3097 = vunpack.c.l.b16 %v3033
    %v3098 = vunpack.c.l.b16 %v3034
    %v3099 = vunpack.c.l.b16 %v3035
    %v3100 = vunpack.c.l.b16 %v3036
    %v3101 = vunpack.c.l.b16 %v3037
    %v3102 = vunpack.c.l.b16 %v3038
    %v3103 = vunpack.c.l.b16 %v3039
    %v3104 = vunpack.c.l.b16 %v3040
    %v3105 = vunpack.c.l.b16 %v3041
    %v3106 = vunpack.c.l.b16 %v3042
    %v3107 = vunpack.c.l.b16 %v3043
    %v3108 = vpack.c.b16 %v3077, %v3076
    %v3109 = vpack.c.b16 %v3079, %v3078
    %v3110 = vpack.c.b16 %v3081, %v3080
    %v3111 = vpack.c.b16 %v3083, %v3082
    %v3112 = vpack.c.b16 %v3085, %v3084
    %v3113 = vpack.c.b16 %v3087, %v3086
    %v3114 = vpack.c.b16 %v3089, %v3088
    %v3115 = vpack.c.b16 %v3091, %v3090
    %v3116 = vpack.c.b16 %v3093, %v3092
    %v3117 = vpack.c.b16 %v3095, %v3094
    %v3118 = vpack.c.b16 %v3097, %v3096
    %v3119 = vpack.c.b16 %v3099, %v3098
    %v3120 = vpack.c.b16 %v3101, %v3100
    %v3121 = vpack.c.b16 %v3103, %v3102
    %v3122 = vpack.c.b16 %v3105, %v3104
    %v3123 = vpack.c.b16 %v3107, %v3106
    %3140 = vmatprep.subr.bf16.mxu0 0
    %3141 = vmatpush1.bf16.msra.mxu0 %v3108
    %3142 = vmatprep.subr.bf16.mxu0 0
    %3143 = vmatpush1.bf16.msra.mxu0 %v3109
    %3144 = vmatprep.subr.bf16.mxu0 0
    %3145 = vmatpush1.bf16.msra.mxu0 %v3110
    %3146 = vmatprep.subr.bf16.mxu0 0
    %3147 = vmatpush1.bf16.msra.mxu0 %v3111
    %3148 = vmatprep.subr.bf16.mxu0 0
    %3149 = vmatpush1.bf16.msra.mxu0 %v3112
    %3150 = vmatprep.subr.bf16.mxu0 0
    %3151 = vmatpush1.bf16.msra.mxu0 %v3113
    %3152 = vmatprep.subr.bf16.mxu0 0
    %3153 = vmatpush1.bf16.msra.mxu0 %v3114
    %3154 = vmatprep.subr.bf16.mxu0 0
    %3155 = vmatpush1.bf16.msra.mxu0 %v3115
    %3156 = vmatprep.subr.bf16.mxu0 0
    %3157 = vmatpush1.bf16.msra.mxu0 %v3116
    %3158 = vmatprep.subr.bf16.mxu0 0
    %3159 = vmatpush1.bf16.msra.mxu0 %v3117
    %3160 = vmatprep.subr.bf16.mxu0 0
    %3161 = vmatpush1.bf16.msra.mxu0 %v3118
    %3162 = vmatprep.subr.bf16.mxu0 0
    %3163 = vmatpush1.bf16.msra.mxu0 %v3119
    %3164 = vmatprep.subr.bf16.mxu0 0
    %3165 = vmatpush1.bf16.msra.mxu0 %v3120
    %3166 = vmatprep.subr.bf16.mxu0 0
    %3167 = vmatpush1.bf16.msra.mxu0 %v3121
    %3168 = vmatprep.subr.bf16.mxu0 0
    %3169 = vmatpush1.bf16.msra.mxu0 %v3122
    %3170 = vmatprep.subr.bf16.mxu0 0
    %3171 = vmatpush1.bf16.msra.mxu0 %v3123
    %3172 = vmatprep.mubr.bf16.mxu0 %v3010
    %3173 = vmatmul.mubr.bf16.gmra.mrb[0].mxu0 %v3009
    %v3174 = vpop.f32.mrb[0].mxu0
    %v3175 = vadd.f32 0.0, %v3174
    %v3176 = vpop.f32.mrb[0].mxu0
    %v3177 = vpop.f32.mrb[0].mxu0
    %v3178 = vpop.f32.mrb[0].mxu0
    %3179 = vdwg.mxu0
    %v3180 = vadd.f32 %v2958, %v3175
    %s3181 = scalar_lea.vmem %s7, 12
    %v3182 = vld [vmem:[%s3181] sm:$0xf]
    %v3184 = vsel %vm2531, %v3182, 0
    %3186 = vmatprep.subr.bf16.mxu0 %v2529
    %3187 = vmatpush1.bf16.msra.mxu0 %v2528
    %3188 = vmatprep.subr.bf16.mxu0 0
    %3189 = vmatpush1.bf16.msra.mxu0 0
    %3190 = vmatprep.subr.bf16.mxu0 0
    %3191 = vmatpush1.bf16.msra.mxu0 0
    %3192 = vmatprep.subr.bf16.mxu0 0
    %3193 = vmatpush1.bf16.msra.mxu0 0
    %3194 = vmatprep.subr.bf16.mxu0 0
    %3195 = vmatpush1.bf16.msra.mxu0 0
    %3196 = vmatprep.subr.bf16.mxu0 0
    %3197 = vmatpush1.bf16.msra.mxu0 0
    %3198 = vmatprep.subr.bf16.mxu0 0
    %3199 = vmatpush1.bf16.msra.mxu0 0
    %3200 = vmatprep.subr.bf16.mxu0 0
    %3201 = vmatpush1.bf16.msra.mxu0 0
    %3202 = vmatprep.subr.bf16.mxu0 0
    %3203 = vmatpush1.bf16.msra.mxu0 0
    %3204 = vmatprep.subr.bf16.mxu0 0
    %3205 = vmatpush1.bf16.msra.mxu0 0
    %3206 = vmatprep.subr.bf16.mxu0 0
    %3207 = vmatpush1.bf16.msra.mxu0 0
    %3208 = vmatprep.subr.bf16.mxu0 0
    %3209 = vmatpush1.bf16.msra.mxu0 0
    %3210 = vmatprep.subr.bf16.mxu0 0
    %3211 = vmatpush1.bf16.msra.mxu0 0
    %3212 = vmatprep.subr.bf16.mxu0 0
    %3213 = vmatpush1.bf16.msra.mxu0 0
    %3214 = vmatprep.subr.bf16.mxu0 0
    %3215 = vmatpush1.bf16.msra.mxu0 0
    %3216 = vmatprep.subr.bf16.mxu0 0
    %3217 = vmatpush1.bf16.msra.mxu0 0
    %3218 = vmatprep.mubr.bf16.mxu0 0
    %3219 = vmatmul.mubr.bf16.gmra.mrb[0].mxu0 %v3184
    %v3220 = vpop.f32.mrb[0].mxu0
    %v3221 = vadd.f32 0.0, %v3220
    %v3222 = vpop.f32.mrb[0].mxu0
    %v3223 = vadd.f32 0.0, %v3222
    %v3224 = vpop.f32.mrb[0].mxu0
    %v3225 = vpop.f32.mrb[0].mxu0
    %3226 = vdwg.mxu0
    %v3227 = vpack.c.bf16 %v3221, %v3221
    %v3228 = vpack.c.bf16 %v3223, %v3223
    %s3229 = scalar_lea.vmem [#allocation8], 384
    %v3230 = vld [vmem:[%s3229] sm:$0xf]
    %v3231 = vld [vmem:[%s3229 + $0x4] sm:$0xf]
    %v3232 = vld [vmem:[%s3229 + $0x8] sm:$0xf]
    %v3233 = vld [vmem:[%s3229 + $0xc] sm:$0xf]
    %v3234 = vld [vmem:[%s3229 + $0x10] sm:$0xf]
    %v3235 = vld [vmem:[%s3229 + $0x14] sm:$0xf]
    %v3236 = vld [vmem:[%s3229 + $0x18] sm:$0xf]
    %v3237 = vld [vmem:[%s3229 + $0x1c] sm:$0xf]
    %v3238 = vld [vmem:[%s3229 + $0x20] sm:$0xf]
    %v3239 = vld [vmem:[%s3229 + $0x24] sm:$0xf]
    %v3240 = vld [vmem:[%s3229 + $0x28] sm:$0xf]
    %v3241 = vld [vmem:[%s3229 + $0x2c] sm:$0xf]
    %v3242 = vld [vmem:[%s3229 + $0x30] sm:$0xf]
    %v3243 = vld [vmem:[%s3229 + $0x34] sm:$0xf]
    %v3244 = vld [vmem:[%s3229 + $0x38] sm:$0xf]
    %v3245 = vld [vmem:[%s3229 + $0x3c] sm:$0xf]
    %v3246 = vld [vmem:[%s3229 + $0x40] sm:$0xf]
    %v3247 = vld [vmem:[%s3229 + $0x44] sm:$0xf]
    %v3248 = vld [vmem:[%s3229 + $0x48] sm:$0xf]
    %v3249 = vld [vmem:[%s3229 + $0x4c] sm:$0xf]
    %v3250 = vld [vmem:[%s3229 + $0x50] sm:$0xf]
    %v3251 = vld [vmem:[%s3229 + $0x54] sm:$0xf]
    %v3252 = vld [vmem:[%s3229 + $0x58] sm:$0xf]
    %v3253 = vld [vmem:[%s3229 + $0x5c] sm:$0xf]
    %v3254 = vld [vmem:[%s3229 + $0x60] sm:$0xf]
    %v3255 = vld [vmem:[%s3229 + $0x64] sm:$0xf]
    %v3256 = vld [vmem:[%s3229 + $0x68] sm:$0xf]
    %v3257 = vld [vmem:[%s3229 + $0x6c] sm:$0xf]
    %v3258 = vld [vmem:[%s3229 + $0x70] sm:$0xf]
    %v3259 = vld [vmem:[%s3229 + $0x74] sm:$0xf]
    %v3260 = vld [vmem:[%s3229 + $0x78] sm:$0xf]
    %v3261 = vld [vmem:[%s3229 + $0x7c] sm:$0xf]
    %v3294 = vunpack.c.l.b16 %v3230
    %v3295 = vunpack.c.l.b16 %v3231
    %v3296 = vunpack.c.l.b16 %v3232
    %v3297 = vunpack.c.l.b16 %v3233
    %v3298 = vunpack.c.l.b16 %v3234
    %v3299 = vunpack.c.l.b16 %v3235
    %v3300 = vunpack.c.l.b16 %v3236
    %v3301 = vunpack.c.l.b16 %v3237
    %v3302 = vunpack.c.l.b16 %v3238
    %v3303 = vunpack.c.l.b16 %v3239
    %v3304 = vunpack.c.l.b16 %v3240
    %v3305 = vunpack.c.l.b16 %v3241
    %v3306 = vunpack.c.l.b16 %v3242
    %v3307 = vunpack.c.l.b16 %v3243
    %v3308 = vunpack.c.l.b16 %v3244
    %v3309 = vunpack.c.l.b16 %v3245
    %v3310 = vunpack.c.l.b16 %v3246
    %v3311 = vunpack.c.l.b16 %v3247
    %v3312 = vunpack.c.l.b16 %v3248
    %v3313 = vunpack.c.l.b16 %v3249
    %v3314 = vunpack.c.l.b16 %v3250
    %v3315 = vunpack.c.l.b16 %v3251
    %v3316 = vunpack.c.l.b16 %v3252
    %v3317 = vunpack.c.l.b16 %v3253
    %v3318 = vunpack.c.l.b16 %v3254
    %v3319 = vunpack.c.l.b16 %v3255
    %v3320 = vunpack.c.l.b16 %v3256
    %v3321 = vunpack.c.l.b16 %v3257
    %v3322 = vunpack.c.l.b16 %v3258
    %v3323 = vunpack.c.l.b16 %v3259
    %v3324 = vunpack.c.l.b16 %v3260
    %v3325 = vunpack.c.l.b16 %v3261
    %v3326 = vpack.c.b16 %v3295, %v3294
    %v3327 = vpack.c.b16 %v3297, %v3296
    %v3328 = vpack.c.b16 %v3299, %v3298
    %v3329 = vpack.c.b16 %v3301, %v3300
    %v3330 = vpack.c.b16 %v3303, %v3302
    %v3331 = vpack.c.b16 %v3305, %v3304
    %v3332 = vpack.c.b16 %v3307, %v3306
    %v3333 = vpack.c.b16 %v3309, %v3308
    %v3334 = vpack.c.b16 %v3311, %v3310
    %v3335 = vpack.c.b16 %v3313, %v3312
    %v3336 = vpack.c.b16 %v3315, %v3314
    %v3337 = vpack.c.b16 %v3317, %v3316
    %v3338 = vpack.c.b16 %v3319, %v3318
    %v3339 = vpack.c.b16 %v3321, %v3320
    %v3340 = vpack.c.b16 %v3323, %v3322
    %v3341 = vpack.c.b16 %v3325, %v3324
    %3358 = vmatprep.subr.bf16.mxu0 0
    %3359 = vmatpush1.bf16.msra.mxu0 %v3326
    %3360 = vmatprep.subr.bf16.mxu0 0
    %3361 = vmatpush1.bf16.msra.mxu0 %v3327
    %3362 = vmatprep.subr.bf16.mxu0 0
    %3363 = vmatpush1.bf16.msra.mxu0 %v3328
    %3364 = vmatprep.subr.bf16.mxu0 0
    %3365 = vmatpush1.bf16.msra.mxu0 %v3329
    %3366 = vmatprep.subr.bf16.mxu0 0
    %3367 = vmatpush1.bf16.msra.mxu0 %v3330
    %3368 = vmatprep.subr.bf16.mxu0 0
    %3369 = vmatpush1.bf16.msra.mxu0 %v3331
    %3370 = vmatprep.subr.bf16.mxu0 0
    %3371 = vmatpush1.bf16.msra.mxu0 %v3332
    %3372 = vmatprep.subr.bf16.mxu0 0
    %3373 = vmatpush1.bf16.msra.mxu0 %v3333
    %3374 = vmatprep.subr.bf16.mxu0 0
    %3375 = vmatpush1.bf16.msra.mxu0 %v3334
    %3376 = vmatprep.subr.bf16.mxu0 0
    %3377 = vmatpush1.bf16.msra.mxu0 %v3335
    %3378 = vmatprep.subr.bf16.mxu0 0
    %3379 = vmatpush1.bf16.msra.mxu0 %v3336
    %3380 = vmatprep.subr.bf16.mxu0 0
    %3381 = vmatpush1.bf16.msra.mxu0 %v3337
    %3382 = vmatprep.subr.bf16.mxu0 0
    %3383 = vmatpush1.bf16.msra.mxu0 %v3338
    %3384 = vmatprep.subr.bf16.mxu0 0
    %3385 = vmatpush1.bf16.msra.mxu0 %v3339
    %3386 = vmatprep.subr.bf16.mxu0 0
    %3387 = vmatpush1.bf16.msra.mxu0 %v3340
    %3388 = vmatprep.subr.bf16.mxu0 0
    %3389 = vmatpush1.bf16.msra.mxu0 %v3341
    %3390 = vmatprep.mubr.bf16.mxu0 %v3228
    %3391 = vmatmul.mubr.bf16.gmra.mrb[0].mxu0 %v3227
    %v3392 = vpop.f32.mrb[0].mxu0
    %v3393 = vadd.f32 0.0, %v3392
    %v3394 = vpop.f32.mrb[0].mxu0
    %v3395 = vpop.f32.mrb[0].mxu0
    %v3396 = vpop.f32.mrb[0].mxu0
    %3397 = vdwg.mxu0
    %v3398 = vadd.f32 %v3180, %v3393
    %s3399 = scalar_lea.vmem %s7, 16
    %v3400 = vld [vmem:[%s3399] sm:$0xf]
    %v3402 = vsel %vm2531, %v3400, 0
    %3404 = vmatprep.subr.bf16.mxu0 %v2529
    %3405 = vmatpush1.bf16.msra.mxu0 %v2528
    %3406 = vmatprep.subr.bf16.mxu0 0
    %3407 = vmatpush1.bf16.msra.mxu0 0
    %3408 = vmatprep.subr.bf16.mxu0 0
    %3409 = vmatpush1.bf16.msra.mxu0 0
    %3410 = vmatprep.subr.bf16.mxu0 0
    %3411 = vmatpush1.bf16.msra.mxu0 0
    %3412 = vmatprep.subr.bf16.mxu0 0
    %3413 = vmatpush1.bf16.msra.mxu0 0
    %3414 = vmatprep.subr.bf16.mxu0 0
    %3415 = vmatpush1.bf16.msra.mxu0 0
    %3416 = vmatprep.subr.bf16.mxu0 0
    %3417 = vmatpush1.bf16.msra.mxu0 0
    %3418 = vmatprep.subr.bf16.mxu0 0
    %3419 = vmatpush1.bf16.msra.mxu0 0
    %3420 = vmatprep.subr.bf16.mxu0 0
    %3421 = vmatpush1.bf16.msra.mxu0 0
    %3422 = vmatprep.subr.bf16.mxu0 0
    %3423 = vmatpush1.bf16.msra.mxu0 0
    %3424 = vmatprep.subr.bf16.mxu0 0
    %3425 = vmatpush1.bf16.msra.mxu0 0
    %3426 = vmatprep.subr.bf16.mxu0 0
    %3427 = vmatpush1.bf16.msra.mxu0 0
    %3428 = vmatprep.subr.bf16.mxu0 0
    %3429 = vmatpush1.bf16.msra.mxu0 0
    %3430 = vmatprep.subr.bf16.mxu0 0
    %3431 = vmatpush1.bf16.msra.mxu0 0
    %3432 = vmatprep.subr.bf16.mxu0 0
    %3433 = vmatpush1.bf16.msra.mxu0 0
    %3434 = vmatprep.subr.bf16.mxu0 0
    %3435 = vmatpush1.bf16.msra.mxu0 0
    %3436 = vmatprep.mubr.bf16.mxu0 0
    %3437 = vmatmul.mubr.bf16.gmra.mrb[0].mxu0 %v3402
    %v3438 = vpop.f32.mrb[0].mxu0
    %v3439 = vadd.f32 0.0, %v3438
    %v3440 = vpop.f32.mrb[0].mxu0
    %v3441 = vadd.f32 0.0, %v3440
    %v3442 = vpop.f32.mrb[0].mxu0
    %v3443 = vpop.f32.mrb[0].mxu0
    %3444 = vdwg.mxu0
    %v3445 = vpack.c.bf16 %v3439, %v3439
    %v3446 = vpack.c.bf16 %v3441, %v3441
    %s3447 = scalar_lea.vmem [#allocation8], 512
    %v3448 = vld [vmem:[%s3447] sm:$0xf]
    %v3449 = vld [vmem:[%s3447 + $0x4] sm:$0xf]
    %v3450 = vld [vmem:[%s3447 + $0x8] sm:$0xf]
    %v3451 = vld [vmem:[%s3447 + $0xc] sm:$0xf]
    %v3452 = vld [vmem:[%s3447 + $0x10] sm:$0xf]
    %v3453 = vld [vmem:[%s3447 + $0x14] sm:$0xf]
    %v3454 = vld [vmem:[%s3447 + $0x18] sm:$0xf]
    %v3455 = vld [vmem:[%s3447 + $0x1c] sm:$0xf]
    %v3456 = vld [vmem:[%s3447 + $0x20] sm:$0xf]
    %v3457 = vld [vmem:[%s3447 + $0x24] sm:$0xf]
    %v3458 = vld [vmem:[%s3447 + $0x28] sm:$0xf]
    %v3459 = vld [vmem:[%s3447 + $0x2c] sm:$0xf]
    %v3460 = vld [vmem:[%s3447 + $0x30] sm:$0xf]
    %v3461 = vld [vmem:[%s3447 + $0x34] sm:$0xf]
    %v3462 = vld [vmem:[%s3447 + $0x38] sm:$0xf]
    %v3463 = vld [vmem:[%s3447 + $0x3c] sm:$0xf]
    %v3464 = vld [vmem:[%s3447 + $0x40] sm:$0xf]
    %v3465 = vld [vmem:[%s3447 + $0x44] sm:$0xf]
    %v3466 = vld [vmem:[%s3447 + $0x48] sm:$0xf]
    %v3467 = vld [vmem:[%s3447 + $0x4c] sm:$0xf]
    %v3468 = vld [vmem:[%s3447 + $0x50] sm:$0xf]
    %v3469 = vld [vmem:[%s3447 + $0x54] sm:$0xf]
    %v3470 = vld [vmem:[%s3447 + $0x58] sm:$0xf]
    %v3471 = vld [vmem:[%s3447 + $0x5c] sm:$0xf]
    %v3472 = vld [vmem:[%s3447 + $0x60] sm:$0xf]
    %v3473 = vld [vmem:[%s3447 + $0x64] sm:$0xf]
    %v3474 = vld [vmem:[%s3447 + $0x68] sm:$0xf]
    %v3475 = vld [vmem:[%s3447 + $0x6c] sm:$0xf]
    %v3476 = vld [vmem:[%s3447 + $0x70] sm:$0xf]
    %v3477 = vld [vmem:[%s3447 + $0x74] sm:$0xf]
    %v3478 = vld [vmem:[%s3447 + $0x78] sm:$0xf]
    %v3479 = vld [vmem:[%s3447 + $0x7c] sm:$0xf]
    %v3512 = vunpack.c.l.b16 %v3448
    %v3513 = vunpack.c.l.b16 %v3449
    %v3514 = vunpack.c.l.b16 %v3450
    %v3515 = vunpack.c.l.b16 %v3451
    %v3516 = vunpack.c.l.b16 %v3452
    %v3517 = vunpack.c.l.b16 %v3453
    %v3518 = vunpack.c.l.b16 %v3454
    %v3519 = vunpack.c.l.b16 %v3455
    %v3520 = vunpack.c.l.b16 %v3456
    %v3521 = vunpack.c.l.b16 %v3457
    %v3522 = vunpack.c.l.b16 %v3458
    %v3523 = vunpack.c.l.b16 %v3459
    %v3524 = vunpack.c.l.b16 %v3460
    %v3525 = vunpack.c.l.b16 %v3461
    %v3526 = vunpack.c.l.b16 %v3462
    %v3527 = vunpack.c.l.b16 %v3463
    %v3528 = vunpack.c.l.b16 %v3464
    %v3529 = vunpack.c.l.b16 %v3465
    %v3530 = vunpack.c.l.b16 %v3466
    %v3531 = vunpack.c.l.b16 %v3467
    %v3532 = vunpack.c.l.b16 %v3468
    %v3533 = vunpack.c.l.b16 %v3469
    %v3534 = vunpack.c.l.b16 %v3470
    %v3535 = vunpack.c.l.b16 %v3471
    %v3536 = vunpack.c.l.b16 %v3472
    %v3537 = vunpack.c.l.b16 %v3473
    %v3538 = vunpack.c.l.b16 %v3474
    %v3539 = vunpack.c.l.b16 %v3475
    %v3540 = vunpack.c.l.b16 %v3476
    %v3541 = vunpack.c.l.b16 %v3477
    %v3542 = vunpack.c.l.b16 %v3478
    %v3543 = vunpack.c.l.b16 %v3479
    %v3544 = vpack.c.b16 %v3513, %v3512
    %v3545 = vpack.c.b16 %v3515, %v3514
    %v3546 = vpack.c.b16 %v3517, %v3516
    %v3547 = vpack.c.b16 %v3519, %v3518
    %v3548 = vpack.c.b16 %v3521, %v3520
    %v3549 = vpack.c.b16 %v3523, %v3522
    %v3550 = vpack.c.b16 %v3525, %v3524
    %v3551 = vpack.c.b16 %v3527, %v3526
    %v3552 = vpack.c.b16 %v3529, %v3528
    %v3553 = vpack.c.b16 %v3531, %v3530
    %v3554 = vpack.c.b16 %v3533, %v3532
    %v3555 = vpack.c.b16 %v3535, %v3534
    %v3556 = vpack.c.b16 %v3537, %v3536
    %v3557 = vpack.c.b16 %v3539, %v3538
    %v3558 = vpack.c.b16 %v3541, %v3540
    %v3559 = vpack.c.b16 %v3543, %v3542
    %3576 = vmatprep.subr.bf16.mxu0 0
    %3577 = vmatpush1.bf16.msra.mxu0 %v3544
    %3578 = vmatprep.subr.bf16.mxu0 0
    %3579 = vmatpush1.bf16.msra.mxu0 %v3545
    %3580 = vmatprep.subr.bf16.mxu0 0
    %3581 = vmatpush1.bf16.msra.mxu0 %v3546
    %3582 = vmatprep.subr.bf16.mxu0 0
    %3583 = vmatpush1.bf16.msra.mxu0 %v3547
    %3584 = vmatprep.subr.bf16.mxu0 0
    %3585 = vmatpush1.bf16.msra.mxu0 %v3548
    %3586 = vmatprep.subr.bf16.mxu0 0
    %3587 = vmatpush1.bf16.msra.mxu0 %v3549
    %3588 = vmatprep.subr.bf16.mxu0 0
    %3589 = vmatpush1.bf16.msra.mxu0 %v3550
    %3590 = vmatprep.subr.bf16.mxu0 0
    %3591 = vmatpush1.bf16.msra.mxu0 %v3551
    %3592 = vmatprep.subr.bf16.mxu0 0
    %3593 = vmatpush1.bf16.msra.mxu0 %v3552
    %3594 = vmatprep.subr.bf16.mxu0 0
    %3595 = vmatpush1.bf16.msra.mxu0 %v3553
    %3596 = vmatprep.subr.bf16.mxu0 0
    %3597 = vmatpush1.bf16.msra.mxu0 %v3554
    %3598 = vmatprep.subr.bf16.mxu0 0
    %3599 = vmatpush1.bf16.msra.mxu0 %v3555
    %3600 = vmatprep.subr.bf16.mxu0 0
    %3601 = vmatpush1.bf16.msra.mxu0 %v3556
    %3602 = vmatprep.subr.bf16.mxu0 0
    %3603 = vmatpush1.bf16.msra.mxu0 %v3557
    %3604 = vmatprep.subr.bf16.mxu0 0
    %3605 = vmatpush1.bf16.msra.mxu0 %v3558
    %3606 = vmatprep.subr.bf16.mxu0 0
    %3607 = vmatpush1.bf16.msra.mxu0 %v3559
    %3608 = vmatprep.mubr.bf16.mxu0 %v3446
    %3609 = vmatmul.mubr.bf16.gmra.mrb[0].mxu0 %v3445
    %v3610 = vpop.f32.mrb[0].mxu0
    %v3611 = vadd.f32 0.0, %v3610
    %v3612 = vpop.f32.mrb[0].mxu0
    %v3613 = vpop.f32.mrb[0].mxu0
    %v3614 = vpop.f32.mrb[0].mxu0
    %3615 = vdwg.mxu0
    %v3616 = vadd.f32 %v3398, %v3611
    %v3617 = vld [vmem:[#allocation10] sm:$0x1]
    %v3619 = vlaneseq
    %v3620 = vshrl.u32 %v3619, 7
    %v3621 = vsub.s32 0, %v3620
    %v3622 = vrot.slane %v3617, %v3621
    %v3624 = vadd.f32 %v3616, %v3622
    %v3625 = vmax.f32 %v3624, 0.0
    %v3626 = vpack.c.bf16 %v3625, %v3625
    %v3627 = vld [vmem:[#allocation11] sm:$0x1]
    %vm3628 = vcmask 64512
    %v3630 = vsel %vm3628, %v3627, 0
    %vm3632 = vcmask 1043456
    %v3634 = vsel %vm3632, %v3626, 0
    %3636 = vmatprep.subr.bf16.mxu0 0
    %3637 = vmatpush1.bf16.msra.mxu0 %v3634
    %3638 = vmatprep.subr.bf16.mxu0 0
    %3639 = vmatpush1.bf16.msra.mxu0 0
    %3640 = vmatprep.subr.bf16.mxu0 0
    %3641 = vmatpush1.bf16.msra.mxu0 0
    %3642 = vmatprep.subr.bf16.mxu0 0
    %3643 = vmatpush1.bf16.msra.mxu0 0
    %3644 = vmatprep.subr.bf16.mxu0 0
    %3645 = vmatpush1.bf16.msra.mxu0 0
    %3646 = vmatprep.subr.bf16.mxu0 0
    %3647 = vmatpush1.bf16.msra.mxu0 0
    %3648 = vmatprep.subr.bf16.mxu0 0
    %3649 = vmatpush1.bf16.msra.mxu0 0
    %3650 = vmatprep.subr.bf16.mxu0 0
    %3651 = vmatpush1.bf16.msra.mxu0 0
    %3652 = vmatprep.subr.bf16.mxu0 0
    %3653 = vmatpush1.bf16.msra.mxu0 0
    %3654 = vmatprep.subr.bf16.mxu0 0
    %3655 = vmatpush1.bf16.msra.mxu0 0
    %3656 = vmatprep.subr.bf16.mxu0 0
    %3657 = vmatpush1.bf16.msra.mxu0 0
    %3658 = vmatprep.subr.bf16.mxu0 0
    %3659 = vmatpush1.bf16.msra.mxu0 0
    %3660 = vmatprep.subr.bf16.mxu0 0
    %3661 = vmatpush1.bf16.msra.mxu0 0
    %3662 = vmatprep.subr.bf16.mxu0 0
    %3663 = vmatpush1.bf16.msra.mxu0 0
    %3664 = vmatprep.subr.bf16.mxu0 0
    %3665 = vmatpush1.bf16.msra.mxu0 0
    %3666 = vmatprep.subr.bf16.mxu0 0
    %3667 = vmatpush1.bf16.msra.mxu0 0
    %3668 = vmatprep.mubr.bf16.mxu0 0
    %3669 = vmatmul.mubr.bf16.gmra.mrb[0].mxu0 %v3630
    %v3670 = vpop.f32.mrb[0].mxu0
    %v3671 = vadd.f32 0.0, %v3670
    %v3672 = vpop.f32.mrb[0].mxu0
    %v3673 = vpop.f32.mrb[0].mxu0
    %v3674 = vpop.f32.mrb[0].mxu0
    %3675 = vdwg.mxu0
    %v3676 = vpack.c.bf16 %v3671, %v3671
    %v3677 = vld [vmem:[#allocation13] sm:$0xff]
    %v3678 = vld [vmem:[#allocation13 + $0x8] sm:$0xff]
    %v3679 = vld [vmem:[#allocation13 + $0x10] sm:$0xff]
    %v3680 = vld [vmem:[#allocation13 + $0x18] sm:$0xff]
    %v3681 = vld [vmem:[#allocation13 + $0x20] sm:$0xff]
    %v3682 = vld [vmem:[#allocation13 + $0x28] sm:$0xff]
    %v3683 = vld [vmem:[#allocation13 + $0x30] sm:$0xff]
    %v3684 = vld [vmem:[#allocation13 + $0x38] sm:$0xff]
    %v3685 = vld [vmem:[#allocation13 + $0x40] sm:$0xff]
    %v3686 = vld [vmem:[#allocation13 + $0x48] sm:$0xff]
    %v3687 = vld [vmem:[#allocation13 + $0x50] sm:$0xff]
    %v3688 = vld [vmem:[#allocation13 + $0x58] sm:$0xff]
    %v3689 = vld [vmem:[#allocation13 + $0x60] sm:$0xff]
    %v3690 = vld [vmem:[#allocation13 + $0x68] sm:$0xff]
    %v3691 = vld [vmem:[#allocation13 + $0x70] sm:$0xff]
    %v3692 = vld [vmem:[#allocation13 + $0x78] sm:$0xff]
    %s3693 = scalar_lea.vmem [#allocation11], 1
    %v3694 = vld [vmem:[%s3693] sm:$0x1]
    %v3696 = vsel %vm3628, %v3694, 0
    %3698 = vmatprep.subr.bf16.mxu0 0
    %3699 = vmatpush1.bf16.msra.mxu0 %v3634
    %3700 = vmatprep.subr.bf16.mxu0 0
    %3701 = vmatpush1.bf16.msra.mxu0 0
    %3702 = vmatprep.subr.bf16.mxu0 0
    %3703 = vmatpush1.bf16.msra.mxu0 0
    %3704 = vmatprep.subr.bf16.mxu0 0
    %3705 = vmatpush1.bf16.msra.mxu0 0
    %3706 = vmatprep.subr.bf16.mxu0 0
    %3707 = vmatpush1.bf16.msra.mxu0 0
    %3708 = vmatprep.subr.bf16.mxu0 0
    %3709 = vmatpush1.bf16.msra.mxu0 0
    %3710 = vmatprep.subr.bf16.mxu0 0
    %3711 = vmatpush1.bf16.msra.mxu0 0
    %3712 = vmatprep.subr.bf16.mxu0 0
    %3713 = vmatpush1.bf16.msra.mxu0 0
    %3714 = vmatprep.subr.bf16.mxu0 0
    %3715 = vmatpush1.bf16.msra.mxu0 0
    %3716 = vmatprep.subr.bf16.mxu0 0
    %3717 = vmatpush1.bf16.msra.mxu0 0
    %3718 = vmatprep.subr.bf16.mxu0 0
    %3719 = vmatpush1.bf16.msra.mxu0 0
    %3720 = vmatprep.subr.bf16.mxu0 0
    %3721 = vmatpush1.bf16.msra.mxu0 0
    %3722 = vmatprep.subr.bf16.mxu0 0
    %3723 = vmatpush1.bf16.msra.mxu0 0
    %3724 = vmatprep.subr.bf16.mxu0 0
    %3725 = vmatpush1.bf16.msra.mxu0 0
    %3726 = vmatprep.subr.bf16.mxu0 0
    %3727 = vmatpush1.bf16.msra.mxu0 0
    %3728 = vmatprep.subr.bf16.mxu0 0
    %3729 = vmatpush1.bf16.msra.mxu0 0
    %3730 = vmatprep.mubr.bf16.mxu0 0
    %3731 = vmatmul.mubr.bf16.gmra.mrb[0].mxu0 %v3696
    %v3732 = vpop.f32.mrb[0].mxu0
    %v3733 = vadd.f32 0.0, %v3732
    %v3734 = vpop.f32.mrb[0].mxu0
    %v3735 = vpop.f32.mrb[0].mxu0
    %v3736 = vpop.f32.mrb[0].mxu0
    %3737 = vdwg.mxu0
    %v3738 = vpack.c.bf16 %v3733, %v3733
    %s3739 = scalar_lea.vmem [#allocation13], 128
    %v3740 = vld [vmem:[%s3739] sm:$0xff]
    %v3741 = vld [vmem:[%s3739 + $0x8] sm:$0xff]
    %v3742 = vld [vmem:[%s3739 + $0x10] sm:$0xff]
    %v3743 = vld [vmem:[%s3739 + $0x18] sm:$0xff]
    %v3744 = vld [vmem:[%s3739 + $0x20] sm:$0xff]
    %v3745 = vld [vmem:[%s3739 + $0x28] sm:$0xff]
    %v3746 = vld [vmem:[%s3739 + $0x30] sm:$0xff]
    %v3747 = vld [vmem:[%s3739 + $0x38] sm:$0xff]
    %v3748 = vld [vmem:[%s3739 + $0x40] sm:$0xff]
    %v3749 = vld [vmem:[%s3739 + $0x48] sm:$0xff]
    %v3750 = vld [vmem:[%s3739 + $0x50] sm:$0xff]
    %v3751 = vld [vmem:[%s3739 + $0x58] sm:$0xff]
    %v3752 = vld [vmem:[%s3739 + $0x60] sm:$0xff]
    %v3753 = vld [vmem:[%s3739 + $0x68] sm:$0xff]
    %v3754 = vld [vmem:[%s3739 + $0x70] sm:$0xff]
    %v3755 = vld [vmem:[%s3739 + $0x78] sm:$0xff]
    %v3772 = vunpack.c.l.b16 %v3740
    %v3773 = vunpack.c.h.b16 %v3740
    %v3774 = vunpack.c.l.b16 %v3741
    %v3775 = vunpack.c.h.b16 %v3741
    %v3776 = vunpack.c.l.b16 %v3742
    %v3777 = vunpack.c.h.b16 %v3742
    %v3778 = vunpack.c.l.b16 %v3743
    %v3779 = vunpack.c.h.b16 %v3743
    %v3780 = vunpack.c.l.b16 %v3744
    %v3781 = vunpack.c.h.b16 %v3744
    %v3782 = vunpack.c.l.b16 %v3745
    %v3783 = vunpack.c.h.b16 %v3745
    %v3784 = vunpack.c.l.b16 %v3746
    %v3785 = vunpack.c.h.b16 %v3746
    %v3786 = vunpack.c.l.b16 %v3747
    %v3787 = vunpack.c.h.b16 %v3747
    %v3788 = vunpack.c.l.b16 %v3748
    %v3789 = vunpack.c.h.b16 %v3748
    %v3790 = vunpack.c.l.b16 %v3749
    %v3791 = vunpack.c.h.b16 %v3749
    %v3792 = vunpack.c.l.b16 %v3750
    %v3793 = vunpack.c.h.b16 %v3750
    %v3794 = vunpack.c.l.b16 %v3751
    %v3795 = vunpack.c.h.b16 %v3751
    %v3796 = vunpack.c.l.b16 %v3752
    %v3797 = vunpack.c.h.b16 %v3752
    %v3798 = vunpack.c.l.b16 %v3753
    %v3799 = vunpack.c.h.b16 %v3753
    %v3800 = vunpack.c.l.b16 %v3754
    %v3801 = vunpack.c.h.b16 %v3754
    %v3802 = vunpack.c.l.b16 %v3755
    %v3803 = vunpack.c.h.b16 %v3755
    %v3804 = vpack.c.b16 %v3774, %v3772
    %v3805 = vpack.c.b16 %v3775, %v3773
    %v3806 = vpack.c.b16 %v3778, %v3776
    %v3807 = vpack.c.b16 %v3779, %v3777
    %v3808 = vpack.c.b16 %v3782, %v3780
    %v3809 = vpack.c.b16 %v3783, %v3781
    %v3810 = vpack.c.b16 %v3786, %v3784
    %v3811 = vpack.c.b16 %v3787, %v3785
    %v3812 = vpack.c.b16 %v3790, %v3788
    %v3813 = vpack.c.b16 %v3791, %v3789
    %v3814 = vpack.c.b16 %v3794, %v3792
    %v3815 = vpack.c.b16 %v3795, %v3793
    %v3816 = vpack.c.b16 %v3798, %v3796
    %v3817 = vpack.c.b16 %v3799, %v3797
    %v3818 = vpack.c.b16 %v3802, %v3800
    %v3819 = vpack.c.b16 %v3803, %v3801
    %3836 = vmatprep.subr.bf16.mxu0 %v3805
    %3837 = vmatpush1.bf16.msra.mxu0 %v3804
    %3838 = vmatprep.subr.bf16.mxu0 %v3807
    %3839 = vmatpush1.bf16.msra.mxu0 %v3806
    %3840 = vmatprep.subr.bf16.mxu0 %v3809
    %3841 = vmatpush1.bf16.msra.mxu0 %v3808
    %3842 = vmatprep.subr.bf16.mxu0 %v3811
    %3843 = vmatpush1.bf16.msra.mxu0 %v3810
    %3844 = vmatprep.subr.bf16.mxu0 %v3813
    %3845 = vmatpush1.bf16.msra.mxu0 %v3812
    %3846 = vmatprep.subr.bf16.mxu0 %v3815
    %3847 = vmatpush1.bf16.msra.mxu0 %v3814
    %3848 = vmatprep.subr.bf16.mxu0 %v3817
    %3849 = vmatpush1.bf16.msra.mxu0 %v3816
    %3850 = vmatprep.subr.bf16.mxu0 %v3819
    %3851 = vmatpush1.bf16.msra.mxu0 %v3818
    %3852 = vmatprep.subr.bf16.mxu0 0
    %3853 = vmatpush1.bf16.msra.mxu0 0
    %3854 = vmatprep.subr.bf16.mxu0 0
    %3855 = vmatpush1.bf16.msra.mxu0 0
    %3856 = vmatprep.subr.bf16.mxu0 0
    %3857 = vmatpush1.bf16.msra.mxu0 0
    %3858 = vmatprep.subr.bf16.mxu0 0
    %3859 = vmatpush1.bf16.msra.mxu0 0
    %3860 = vmatprep.subr.bf16.mxu0 0
    %3861 = vmatpush1.bf16.msra.mxu0 0
    %3862 = vmatprep.subr.bf16.mxu0 0
    %3863 = vmatpush1.bf16.msra.mxu0 0
    %3864 = vmatprep.subr.bf16.mxu0 0
    %3865 = vmatpush1.bf16.msra.mxu0 0
    %3866 = vmatprep.subr.bf16.mxu0 0
    %3867 = vmatpush1.bf16.msra.mxu0 0
    %3868 = vmatprep.mubr.bf16.mxu0 0
    %3869 = vmatmul.mubr.bf16.gmra.mrb[0].mxu0 %v3738
    %v3870 = vpop.f32.mrb[0].mxu0
    %v3871 = vadd.f32 0.0, %v3870
    %v3872 = vpop.f32.mrb[0].mxu0
    %v3873 = vadd.f32 0.0, %v3872
    %v3874 = vpop.f32.mrb[0].mxu0
    %v3875 = vpop.f32.mrb[0].mxu0
    %3876 = vdwg.mxu0
    %v3893 = vunpack.c.l.b16 %v3677
    %v3894 = vunpack.c.h.b16 %v3677
    %v3895 = vunpack.c.l.b16 %v3678
    %v3896 = vunpack.c.h.b16 %v3678
    %v3897 = vunpack.c.l.b16 %v3679
    %v3898 = vunpack.c.h.b16 %v3679
    %v3899 = vunpack.c.l.b16 %v3680
    %v3900 = vunpack.c.h.b16 %v3680
    %v3901 = vunpack.c.l.b16 %v3681
    %v3902 = vunpack.c.h.b16 %v3681
    %v3903 = vunpack.c.l.b16 %v3682
    %v3904 = vunpack.c.h.b16 %v3682
    %v3905 = vunpack.c.l.b16 %v3683
    %v3906 = vunpack.c.h.b16 %v3683
    %v3907 = vunpack.c.l.b16 %v3684
    %v3908 = vunpack.c.h.b16 %v3684
    %v3909 = vunpack.c.l.b16 %v3685
    %v3910 = vunpack.c.h.b16 %v3685
    %v3911 = vunpack.c.l.b16 %v3686
    %v3912 = vunpack.c.h.b16 %v3686
    %v3913 = vunpack.c.l.b16 %v3687
    %v3914 = vunpack.c.h.b16 %v3687
    %v3915 = vunpack.c.l.b16 %v3688
    %v3916 = vunpack.c.h.b16 %v3688
    %v3917 = vunpack.c.l.b16 %v3689
    %v3918 = vunpack.c.h.b16 %v3689
    %v3919 = vunpack.c.l.b16 %v3690
    %v3920 = vunpack.c.h.b16 %v3690
    %v3921 = vunpack.c.l.b16 %v3691
    %v3922 = vunpack.c.h.b16 %v3691
    %v3923 = vunpack.c.l.b16 %v3692
    %v3924 = vunpack.c.h.b16 %v3692
    %v3925 = vpack.c.b16 %v3895, %v3893
    %v3926 = vpack.c.b16 %v3896, %v3894
    %v3927 = vpack.c.b16 %v3899, %v3897
    %v3928 = vpack.c.b16 %v3900, %v3898
    %v3929 = vpack.c.b16 %v3903, %v3901
    %v3930 = vpack.c.b16 %v3904, %v3902
    %v3931 = vpack.c.b16 %v3907, %v3905
    %v3932 = vpack.c.b16 %v3908, %v3906
    %v3933 = vpack.c.b16 %v3911, %v3909
    %v3934 = vpack.c.b16 %v3912, %v3910
    %v3935 = vpack.c.b16 %v3915, %v3913
    %v3936 = vpack.c.b16 %v3916, %v3914
    %v3937 = vpack.c.b16 %v3919, %v3917
    %v3938 = vpack.c.b16 %v3920, %v3918
    %v3939 = vpack.c.b16 %v3923, %v3921
    %v3940 = vpack.c.b16 %v3924, %v3922
    %3957 = vmatprep.subr.bf16.mxu0 %v3926
    %3958 = vmatpush1.bf16.msra.mxu0 %v3925
    %3959 = vmatprep.subr.bf16.mxu0 %v3928
    %3960 = vmatpush1.bf16.msra.mxu0 %v3927
    %3961 = vmatprep.subr.bf16.mxu0 %v3930
    %3962 = vmatpush1.bf16.msra.mxu0 %v3929
    %3963 = vmatprep.subr.bf16.mxu0 %v3932
    %3964 = vmatpush1.bf16.msra.mxu0 %v3931
    %3965 = vmatprep.subr.bf16.mxu0 %v3934
    %3966 = vmatpush1.bf16.msra.mxu0 %v3933
    %3967 = vmatprep.subr.bf16.mxu0 %v3936
    %3968 = vmatpush1.bf16.msra.mxu0 %v3935
    %3969 = vmatprep.subr.bf16.mxu0 %v3938
    %3970 = vmatpush1.bf16.msra.mxu0 %v3937
    %3971 = vmatprep.subr.bf16.mxu0 %v3940
    %3972 = vmatpush1.bf16.msra.mxu0 %v3939
    %3973 = vmatprep.subr.bf16.mxu0 0
    %3974 = vmatpush1.bf16.msra.mxu0 0
    %3975 = vmatprep.subr.bf16.mxu0 0
    %3976 = vmatpush1.bf16.msra.mxu0 0
    %3977 = vmatprep.subr.bf16.mxu0 0
    %3978 = vmatpush1.bf16.msra.mxu0 0
    %3979 = vmatprep.subr.bf16.mxu0 0
    %3980 = vmatpush1.bf16.msra.mxu0 0
    %3981 = vmatprep.subr.bf16.mxu0 0
    %3982 = vmatpush1.bf16.msra.mxu0 0
    %3983 = vmatprep.subr.bf16.mxu0 0
    %3984 = vmatpush1.bf16.msra.mxu0 0
    %3985 = vmatprep.subr.bf16.mxu0 0
    %3986 = vmatpush1.bf16.msra.mxu0 0
    %3987 = vmatprep.subr.bf16.mxu0 0
    %3988 = vmatpush1.bf16.msra.mxu0 0
    %3989 = vmatprep.mubr.bf16.mxu0 0
    %3990 = vmatmul.mubr.bf16.gmra.mrb[0].mxu0 %v3676
    %v3991 = vpop.f32.mrb[0].mxu0
    %v3992 = vadd.f32 %v3871, %v3991
    %v3993 = vpop.f32.mrb[0].mxu0
    %v3994 = vadd.f32 %v3873, %v3993
    %v3995 = vpop.f32.mrb[0].mxu0
    %v3996 = vpop.f32.mrb[0].mxu0
    %3997 = vdwg.mxu0
    %s3998 = scalar_lea.vmem [#allocation11], 2
    %v3999 = vld [vmem:[%s3998] sm:$0x1]
    %v4001 = vsel %vm3628, %v3999, 0
    %4003 = vmatprep.subr.bf16.mxu0 0
    %4004 = vmatpush1.bf16.msra.mxu0 %v3634
    %4005 = vmatprep.subr.bf16.mxu0 0
    %4006 = vmatpush1.bf16.msra.mxu0 0
    %4007 = vmatprep.subr.bf16.mxu0 0
    %4008 = vmatpush1.bf16.msra.mxu0 0
    %4009 = vmatprep.subr.bf16.mxu0 0
    %4010 = vmatpush1.bf16.msra.mxu0 0
    %4011 = vmatprep.subr.bf16.mxu0 0
    %4012 = vmatpush1.bf16.msra.mxu0 0
    %4013 = vmatprep.subr.bf16.mxu0 0
    %4014 = vmatpush1.bf16.msra.mxu0 0
    %4015 = vmatprep.subr.bf16.mxu0 0
    %4016 = vmatpush1.bf16.msra.mxu0 0
    %4017 = vmatprep.subr.bf16.mxu0 0
    %4018 = vmatpush1.bf16.msra.mxu0 0
    %4019 = vmatprep.subr.bf16.mxu0 0
    %4020 = vmatpush1.bf16.msra.mxu0 0
    %4021 = vmatprep.subr.bf16.mxu0 0
    %4022 = vmatpush1.bf16.msra.mxu0 0
    %4023 = vmatprep.subr.bf16.mxu0 0
    %4024 = vmatpush1.bf16.msra.mxu0 0
    %4025 = vmatprep.subr.bf16.mxu0 0
    %4026 = vmatpush1.bf16.msra.mxu0 0
    %4027 = vmatprep.subr.bf16.mxu0 0
    %4028 = vmatpush1.bf16.msra.mxu0 0
    %4029 = vmatprep.subr.bf16.mxu0 0
    %4030 = vmatpush1.bf16.msra.mxu0 0
    %4031 = vmatprep.subr.bf16.mxu0 0
    %4032 = vmatpush1.bf16.msra.mxu0 0
    %4033 = vmatprep.subr.bf16.mxu0 0
    %4034 = vmatpush1.bf16.msra.mxu0 0
    %4035 = vmatprep.mubr.bf16.mxu0 0
    %4036 = vmatmul.mubr.bf16.gmra.mrb[0].mxu0 %v4001
    %v4037 = vpop.f32.mrb[0].mxu0
    %v4038 = vadd.f32 0.0, %v4037
    %v4039 = vpop.f32.mrb[0].mxu0
    %v4040 = vpop.f32.mrb[0].mxu0
    %v4041 = vpop.f32.mrb[0].mxu0
    %4042 = vdwg.mxu0
    %v4043 = vpack.c.bf16 %v4038, %v4038
    %s4044 = scalar_lea.vmem [#allocation13], 256
    %v4045 = vld [vmem:[%s4044] sm:$0xff]
    %v4046 = vld [vmem:[%s4044 + $0x8] sm:$0xff]
    %v4047 = vld [vmem:[%s4044 + $0x10] sm:$0xff]
    %v4048 = vld [vmem:[%s4044 + $0x18] sm:$0xff]
    %v4049 = vld [vmem:[%s4044 + $0x20] sm:$0xff]
    %v4050 = vld [vmem:[%s4044 + $0x28] sm:$0xff]
    %v4051 = vld [vmem:[%s4044 + $0x30] sm:$0xff]
    %v4052 = vld [vmem:[%s4044 + $0x38] sm:$0xff]
    %v4053 = vld [vmem:[%s4044 + $0x40] sm:$0xff]
    %v4054 = vld [vmem:[%s4044 + $0x48] sm:$0xff]
    %v4055 = vld [vmem:[%s4044 + $0x50] sm:$0xff]
    %v4056 = vld [vmem:[%s4044 + $0x58] sm:$0xff]
    %v4057 = vld [vmem:[%s4044 + $0x60] sm:$0xff]
    %v4058 = vld [vmem:[%s4044 + $0x68] sm:$0xff]
    %v4059 = vld [vmem:[%s4044 + $0x70] sm:$0xff]
    %v4060 = vld [vmem:[%s4044 + $0x78] sm:$0xff]
    %v4077 = vunpack.c.l.b16 %v4045
    %v4078 = vunpack.c.h.b16 %v4045
    %v4079 = vunpack.c.l.b16 %v4046
    %v4080 = vunpack.c.h.b16 %v4046
    %v4081 = vunpack.c.l.b16 %v4047
    %v4082 = vunpack.c.h.b16 %v4047
    %v4083 = vunpack.c.l.b16 %v4048
    %v4084 = vunpack.c.h.b16 %v4048
    %v4085 = vunpack.c.l.b16 %v4049
    %v4086 = vunpack.c.h.b16 %v4049
    %v4087 = vunpack.c.l.b16 %v4050
    %v4088 = vunpack.c.h.b16 %v4050
    %v4089 = vunpack.c.l.b16 %v4051
    %v4090 = vunpack.c.h.b16 %v4051
    %v4091 = vunpack.c.l.b16 %v4052
    %v4092 = vunpack.c.h.b16 %v4052
    %v4093 = vunpack.c.l.b16 %v4053
    %v4094 = vunpack.c.h.b16 %v4053
    %v4095 = vunpack.c.l.b16 %v4054
    %v4096 = vunpack.c.h.b16 %v4054
    %v4097 = vunpack.c.l.b16 %v4055
    %v4098 = vunpack.c.h.b16 %v4055
    %v4099 = vunpack.c.l.b16 %v4056
    %v4100 = vunpack.c.h.b16 %v4056
    %v4101 = vunpack.c.l.b16 %v4057
    %v4102 = vunpack.c.h.b16 %v4057
    %v4103 = vunpack.c.l.b16 %v4058
    %v4104 = vunpack.c.h.b16 %v4058
    %v4105 = vunpack.c.l.b16 %v4059
    %v4106 = vunpack.c.h.b16 %v4059
    %v4107 = vunpack.c.l.b16 %v4060
    %v4108 = vunpack.c.h.b16 %v4060
    %v4109 = vpack.c.b16 %v4079, %v4077
    %v4110 = vpack.c.b16 %v4080, %v4078
    %v4111 = vpack.c.b16 %v4083, %v4081
    %v4112 = vpack.c.b16 %v4084, %v4082
    %v4113 = vpack.c.b16 %v4087, %v4085
    %v4114 = vpack.c.b16 %v4088, %v4086
    %v4115 = vpack.c.b16 %v4091, %v4089
    %v4116 = vpack.c.b16 %v4092, %v4090
    %v4117 = vpack.c.b16 %v4095, %v4093
    %v4118 = vpack.c.b16 %v4096, %v4094
    %v4119 = vpack.c.b16 %v4099, %v4097
    %v4120 = vpack.c.b16 %v4100, %v4098
    %v4121 = vpack.c.b16 %v4103, %v4101
    %v4122 = vpack.c.b16 %v4104, %v4102
    %v4123 = vpack.c.b16 %v4107, %v4105
    %v4124 = vpack.c.b16 %v4108, %v4106
    %4141 = vmatprep.subr.bf16.mxu0 %v4110
    %4142 = vmatpush1.bf16.msra.mxu0 %v4109
    %4143 = vmatprep.subr.bf16.mxu0 %v4112
    %4144 = vmatpush1.bf16.msra.mxu0 %v4111
    %4145 = vmatprep.subr.bf16.mxu0 %v4114
    %4146 = vmatpush1.bf16.msra.mxu0 %v4113
    %4147 = vmatprep.subr.bf16.mxu0 %v4116
    %4148 = vmatpush1.bf16.msra.mxu0 %v4115
    %4149 = vmatprep.subr.bf16.mxu0 %v4118
    %4150 = vmatpush1.bf16.msra.mxu0 %v4117
    %4151 = vmatprep.subr.bf16.mxu0 %v4120
    %4152 = vmatpush1.bf16.msra.mxu0 %v4119
    %4153 = vmatprep.subr.bf16.mxu0 %v4122
    %4154 = vmatpush1.bf16.msra.mxu0 %v4121
    %4155 = vmatprep.subr.bf16.mxu0 %v4124
    %4156 = vmatpush1.bf16.msra.mxu0 %v4123
    %4157 = vmatprep.subr.bf16.mxu0 0
    %4158 = vmatpush1.bf16.msra.mxu0 0
    %4159 = vmatprep.subr.bf16.mxu0 0
    %4160 = vmatpush1.bf16.msra.mxu0 0
    %4161 = vmatprep.subr.bf16.mxu0 0
    %4162 = vmatpush1.bf16.msra.mxu0 0
    %4163 = vmatprep.subr.bf16.mxu0 0
    %4164 = vmatpush1.bf16.msra.mxu0 0
    %4165 = vmatprep.subr.bf16.mxu0 0
    %4166 = vmatpush1.bf16.msra.mxu0 0
    %4167 = vmatprep.subr.bf16.mxu0 0
    %4168 = vmatpush1.bf16.msra.mxu0 0
    %4169 = vmatprep.subr.bf16.mxu0 0
    %4170 = vmatpush1.bf16.msra.mxu0 0
    %4171 = vmatprep.subr.bf16.mxu0 0
    %4172 = vmatpush1.bf16.msra.mxu0 0
    %4173 = vmatprep.mubr.bf16.mxu0 0
    %4174 = vmatmul.mubr.bf16.gmra.mrb[0].mxu0 %v4043
    %v4175 = vpop.f32.mrb[0].mxu0
    %v4176 = vadd.f32 0.0, %v4175
    %v4177 = vpop.f32.mrb[0].mxu0
    %v4178 = vadd.f32 0.0, %v4177
    %v4179 = vpop.f32.mrb[0].mxu0
    %v4180 = vpop.f32.mrb[0].mxu0
    %4181 = vdwg.mxu0
    %v4182 = vadd.f32 %v3992, %v4176
    %v4183 = vadd.f32 %v3994, %v4178
    %s4184 = scalar_lea.vmem [#allocation11], 3
    %v4185 = vld [vmem:[%s4184] sm:$0x1]
    %v4187 = vsel %vm3628, %v4185, 0
    %4189 = vmatprep.subr.bf16.mxu0 0
    %4190 = vmatpush1.bf16.msra.mxu0 %v3634
    %4191 = vmatprep.subr.bf16.mxu0 0
    %4192 = vmatpush1.bf16.msra.mxu0 0
    %4193 = vmatprep.subr.bf16.mxu0 0
    %4194 = vmatpush1.bf16.msra.mxu0 0
    %4195 = vmatprep.subr.bf16.mxu0 0
    %4196 = vmatpush1.bf16.msra.mxu0 0
    %4197 = vmatprep.subr.bf16.mxu0 0
    %4198 = vmatpush1.bf16.msra.mxu0 0
    %4199 = vmatprep.subr.bf16.mxu0 0
    %4200 = vmatpush1.bf16.msra.mxu0 0
    %4201 = vmatprep.subr.bf16.mxu0 0
    %4202 = vmatpush1.bf16.msra.mxu0 0
    %4203 = vmatprep.subr.bf16.mxu0 0
    %4204 = vmatpush1.bf16.msra.mxu0 0
    %4205 = vmatprep.subr.bf16.mxu0 0
    %4206 = vmatpush1.bf16.msra.mxu0 0
    %4207 = vmatprep.subr.bf16.mxu0 0
    %4208 = vmatpush1.bf16.msra.mxu0 0
    %4209 = vmatprep.subr.bf16.mxu0 0
    %4210 = vmatpush1.bf16.msra.mxu0 0
    %4211 = vmatprep.subr.bf16.mxu0 0
    %4212 = vmatpush1.bf16.msra.mxu0 0
    %4213 = vmatprep.subr.bf16.mxu0 0
    %4214 = vmatpush1.bf16.msra.mxu0 0
    %4215 = vmatprep.subr.bf16.mxu0 0
    %4216 = vmatpush1.bf16.msra.mxu0 0
    %4217 = vmatprep.subr.bf16.mxu0 0
    %4218 = vmatpush1.bf16.msra.mxu0 0
    %4219 = vmatprep.subr.bf16.mxu0 0
    %4220 = vmatpush1.bf16.msra.mxu0 0
    %4221 = vmatprep.mubr.bf16.mxu0 0
    %4222 = vmatmul.mubr.bf16.gmra.mrb[0].mxu0 %v4187
    %v4223 = vpop.f32.mrb[0].mxu0
    %v4224 = vadd.f32 0.0, %v4223
    %v4225 = vpop.f32.mrb[0].mxu0
    %v4226 = vpop.f32.mrb[0].mxu0
    %v4227 = vpop.f32.mrb[0].mxu0
    %4228 = vdwg.mxu0
    %v4229 = vpack.c.bf16 %v4224, %v4224
    %s4230 = scalar_lea.vmem [#allocation13], 384
    %v4231 = vld [vmem:[%s4230] sm:$0xff]
    %v4232 = vld [vmem:[%s4230 + $0x8] sm:$0xff]
    %v4233 = vld [vmem:[%s4230 + $0x10] sm:$0xff]
    %v4234 = vld [vmem:[%s4230 + $0x18] sm:$0xff]
    %v4235 = vld [vmem:[%s4230 + $0x20] sm:$0xff]
    %v4236 = vld [vmem:[%s4230 + $0x28] sm:$0xff]
    %v4237 = vld [vmem:[%s4230 + $0x30] sm:$0xff]
    %v4238 = vld [vmem:[%s4230 + $0x38] sm:$0xff]
    %v4239 = vld [vmem:[%s4230 + $0x40] sm:$0xff]
    %v4240 = vld [vmem:[%s4230 + $0x48] sm:$0xff]
    %v4241 = vld [vmem:[%s4230 + $0x50] sm:$0xff]
    %v4242 = vld [vmem:[%s4230 + $0x58] sm:$0xff]
    %v4243 = vld [vmem:[%s4230 + $0x60] sm:$0xff]
    %v4244 = vld [vmem:[%s4230 + $0x68] sm:$0xff]
    %v4245 = vld [vmem:[%s4230 + $0x70] sm:$0xff]
    %v4246 = vld [vmem:[%s4230 + $0x78] sm:$0xff]
    %v4263 = vunpack.c.l.b16 %v4231
    %v4264 = vunpack.c.h.b16 %v4231
    %v4265 = vunpack.c.l.b16 %v4232
    %v4266 = vunpack.c.h.b16 %v4232
    %v4267 = vunpack.c.l.b16 %v4233
    %v4268 = vunpack.c.h.b16 %v4233
    %v4269 = vunpack.c.l.b16 %v4234
    %v4270 = vunpack.c.h.b16 %v4234
    %v4271 = vunpack.c.l.b16 %v4235
    %v4272 = vunpack.c.h.b16 %v4235
    %v4273 = vunpack.c.l.b16 %v4236
    %v4274 = vunpack.c.h.b16 %v4236
    %v4275 = vunpack.c.l.b16 %v4237
    %v4276 = vunpack.c.h.b16 %v4237
    %v4277 = vunpack.c.l.b16 %v4238
    %v4278 = vunpack.c.h.b16 %v4238
    %v4279 = vunpack.c.l.b16 %v4239
    %v4280 = vunpack.c.h.b16 %v4239
    %v4281 = vunpack.c.l.b16 %v4240
    %v4282 = vunpack.c.h.b16 %v4240
    %v4283 = vunpack.c.l.b16 %v4241
    %v4284 = vunpack.c.h.b16 %v4241
    %v4285 = vunpack.c.l.b16 %v4242
    %v4286 = vunpack.c.h.b16 %v4242
    %v4287 = vunpack.c.l.b16 %v4243
    %v4288 = vunpack.c.h.b16 %v4243
    %v4289 = vunpack.c.l.b16 %v4244
    %v4290 = vunpack.c.h.b16 %v4244
    %v4291 = vunpack.c.l.b16 %v4245
    %v4292 = vunpack.c.h.b16 %v4245
    %v4293 = vunpack.c.l.b16 %v4246
    %v4294 = vunpack.c.h.b16 %v4246
    %v4295 = vpack.c.b16 %v4265, %v4263
    %v4296 = vpack.c.b16 %v4266, %v4264
    %v4297 = vpack.c.b16 %v4269, %v4267
    %v4298 = vpack.c.b16 %v4270, %v4268
    %v4299 = vpack.c.b16 %v4273, %v4271
    %v4300 = vpack.c.b16 %v4274, %v4272
    %v4301 = vpack.c.b16 %v4277, %v4275
    %v4302 = vpack.c.b16 %v4278, %v4276
    %v4303 = vpack.c.b16 %v4281, %v4279
    %v4304 = vpack.c.b16 %v4282, %v4280
    %v4305 = vpack.c.b16 %v4285, %v4283
    %v4306 = vpack.c.b16 %v4286, %v4284
    %v4307 = vpack.c.b16 %v4289, %v4287
    %v4308 = vpack.c.b16 %v4290, %v4288
    %v4309 = vpack.c.b16 %v4293, %v4291
    %v4310 = vpack.c.b16 %v4294, %v4292
    %4327 = vmatprep.subr.bf16.mxu0 %v4296
    %4328 = vmatpush1.bf16.msra.mxu0 %v4295
    %4329 = vmatprep.subr.bf16.mxu0 %v4298
    %4330 = vmatpush1.bf16.msra.mxu0 %v4297
    %4331 = vmatprep.subr.bf16.mxu0 %v4300
    %4332 = vmatpush1.bf16.msra.mxu0 %v4299
    %4333 = vmatprep.subr.bf16.mxu0 %v4302
    %4334 = vmatpush1.bf16.msra.mxu0 %v4301
    %4335 = vmatprep.subr.bf16.mxu0 %v4304
    %4336 = vmatpush1.bf16.msra.mxu0 %v4303
    %4337 = vmatprep.subr.bf16.mxu0 %v4306
    %4338 = vmatpush1.bf16.msra.mxu0 %v4305
    %4339 = vmatprep.subr.bf16.mxu0 %v4308
    %4340 = vmatpush1.bf16.msra.mxu0 %v4307
    %4341 = vmatprep.subr.bf16.mxu0 %v4310
    %4342 = vmatpush1.bf16.msra.mxu0 %v4309
    %4343 = vmatprep.subr.bf16.mxu0 0
    %4344 = vmatpush1.bf16.msra.mxu0 0
    %4345 = vmatprep.subr.bf16.mxu0 0
    %4346 = vmatpush1.bf16.msra.mxu0 0
    %4347 = vmatprep.subr.bf16.mxu0 0
    %4348 = vmatpush1.bf16.msra.mxu0 0
    %4349 = vmatprep.subr.bf16.mxu0 0
    %4350 = vmatpush1.bf16.msra.mxu0 0
    %4351 = vmatprep.subr.bf16.mxu0 0
    %4352 = vmatpush1.bf16.msra.mxu0 0
    %4353 = vmatprep.subr.bf16.mxu0 0
    %4354 = vmatpush1.bf16.msra.mxu0 0
    %4355 = vmatprep.subr.bf16.mxu0 0
    %4356 = vmatpush1.bf16.msra.mxu0 0
    %4357 = vmatprep.subr.bf16.mxu0 0
    %4358 = vmatpush1.bf16.msra.mxu0 0
    %4359 = vmatprep.mubr.bf16.mxu0 0
    %4360 = vmatmul.mubr.bf16.gmra.mrb[0].mxu0 %v4229
    %v4361 = vpop.f32.mrb[0].mxu0
    %v4362 = vadd.f32 0.0, %v4361
    %v4363 = vpop.f32.mrb[0].mxu0
    %v4364 = vadd.f32 0.0, %v4363
    %v4365 = vpop.f32.mrb[0].mxu0
    %v4366 = vpop.f32.mrb[0].mxu0
    %4367 = vdwg.mxu0
    %v4368 = vadd.f32 %v4182, %v4362
    %v4369 = vadd.f32 %v4183, %v4364
    %v4370 = vld [vmem:[#allocation14] sm:$0x3]
    %v4372 = vlaneseq
    %v4373 = vshrl.u32 %v4372, 7
    %v4374 = vsub.s32 0, %v4373
    %v4375 = vrot.slane %v4370, %v4374
    %v4376 = vlaneseq
    %v4377 = vshrl.u32 %v4376, 7
    %v4378 = vsub.s32 1, %v4377
    %v4379 = vrot.slane %v4370, %v4378
    %v4382 = vadd.f32 %v4368, %v4375
    %v4383 = vadd.f32 %v4369, %v4379
    %v4384 = vmax.f32 %v4382, 0.0
    %v4385 = vmax.f32 %v4383, 0.0
    %v4386 = vpack.c.bf16 %v4384, %v4384
    %v4387 = vpack.c.bf16 %v4385, %v4385
    %v4388 = vld [vmem:[%s13] sm:$0xf]
    %v4389 = vld [vmem:[%s13 + $0x4] sm:$0xf]
    %v4390 = vld [vmem:[%s13 + $0x8] sm:$0xf]
    %v4391 = vld [vmem:[%s13 + $0xc] sm:$0xf]
    %v4392 = vld [vmem:[%s13 + $0x10] sm:$0xf]
    %v4393 = vld [vmem:[%s13 + $0x14] sm:$0xf]
    %v4394 = vld [vmem:[%s13 + $0x18] sm:$0xf]
    %v4395 = vld [vmem:[%s13 + $0x1c] sm:$0xf]
    %v4396 = vld [vmem:[%s13 + $0x20] sm:$0xf]
    %v4397 = vld [vmem:[%s13 + $0x24] sm:$0xf]
    %v4398 = vld [vmem:[%s13 + $0x28] sm:$0xf]
    %v4399 = vld [vmem:[%s13 + $0x2c] sm:$0xf]
    %v4400 = vld [vmem:[%s13 + $0x30] sm:$0xf]
    %v4401 = vld [vmem:[%s13 + $0x34] sm:$0xf]
    %v4402 = vld [vmem:[%s13 + $0x38] sm:$0xf]
    %v4403 = vld [vmem:[%s13 + $0x3c] sm:$0xf]
    %v4404 = vld [vmem:[%s13 + $0x40] sm:$0xf]
    %v4405 = vld [vmem:[%s13 + $0x44] sm:$0xf]
    %v4406 = vld [vmem:[%s13 + $0x48] sm:$0xf]
    %v4407 = vld [vmem:[%s13 + $0x4c] sm:$0xf]
    %v4408 = vld [vmem:[%s13 + $0x50] sm:$0xf]
    %v4409 = vld [vmem:[%s13 + $0x54] sm:$0xf]
    %v4410 = vld [vmem:[%s13 + $0x58] sm:$0xf]
    %v4411 = vld [vmem:[%s13 + $0x5c] sm:$0xf]
    %v4412 = vld [vmem:[%s13 + $0x60] sm:$0xf]
    %v4413 = vld [vmem:[%s13 + $0x64] sm:$0xf]
    %v4414 = vld [vmem:[%s13 + $0x68] sm:$0xf]
    %v4415 = vld [vmem:[%s13 + $0x6c] sm:$0xf]
    %v4416 = vld [vmem:[%s13 + $0x70] sm:$0xf]
    %v4417 = vld [vmem:[%s13 + $0x74] sm:$0xf]
    %v4418 = vld [vmem:[%s13 + $0x78] sm:$0xf]
    %v4419 = vld [vmem:[%s13 + $0x7c] sm:$0xf]
    %v4420 = vld [vmem:[#allocation16] sm:$0x1]
    %v4422 = vlaneseq
    %v4423 = vshrl.u32 %v4422, 7
    %v4424 = vsub.s32 0, %v4423
    %v4425 = vrot.slane %v4420, %v4424
    %v4459 = vunpack.c.l.b16 %v4388
    %v4460 = vunpack.c.l.b16 %v4389
    %v4461 = vunpack.c.l.b16 %v4390
    %v4462 = vunpack.c.l.b16 %v4391
    %v4463 = vunpack.c.l.b16 %v4392
    %v4464 = vunpack.c.l.b16 %v4393
    %v4465 = vunpack.c.l.b16 %v4394
    %v4466 = vunpack.c.l.b16 %v4395
    %v4467 = vunpack.c.l.b16 %v4396
    %v4468 = vunpack.c.l.b16 %v4397
    %v4469 = vunpack.c.l.b16 %v4398
    %v4470 = vunpack.c.l.b16 %v4399
    %v4471 = vunpack.c.l.b16 %v4400
    %v4472 = vunpack.c.l.b16 %v4401
    %v4473 = vunpack.c.l.b16 %v4402
    %v4474 = vunpack.c.l.b16 %v4403
    %v4475 = vunpack.c.l.b16 %v4404
    %v4476 = vunpack.c.l.b16 %v4405
    %v4477 = vunpack.c.l.b16 %v4406
    %v4478 = vunpack.c.l.b16 %v4407
    %v4479 = vunpack.c.l.b16 %v4408
    %v4480 = vunpack.c.l.b16 %v4409
    %v4481 = vunpack.c.l.b16 %v4410
    %v4482 = vunpack.c.l.b16 %v4411
    %v4483 = vunpack.c.l.b16 %v4412
    %v4484 = vunpack.c.l.b16 %v4413
    %v4485 = vunpack.c.l.b16 %v4414
    %v4486 = vunpack.c.l.b16 %v4415
    %v4487 = vunpack.c.l.b16 %v4416
    %v4488 = vunpack.c.l.b16 %v4417
    %v4489 = vunpack.c.l.b16 %v4418
    %v4490 = vunpack.c.l.b16 %v4419
    %v4491 = vpack.c.b16 %v4460, %v4459
    %v4492 = vpack.c.b16 %v4462, %v4461
    %v4493 = vpack.c.b16 %v4464, %v4463
    %v4494 = vpack.c.b16 %v4466, %v4465
    %v4495 = vpack.c.b16 %v4468, %v4467
    %v4496 = vpack.c.b16 %v4470, %v4469
    %v4497 = vpack.c.b16 %v4472, %v4471
    %v4498 = vpack.c.b16 %v4474, %v4473
    %v4499 = vpack.c.b16 %v4476, %v4475
    %v4500 = vpack.c.b16 %v4478, %v4477
    %v4501 = vpack.c.b16 %v4480, %v4479
    %v4502 = vpack.c.b16 %v4482, %v4481
    %v4503 = vpack.c.b16 %v4484, %v4483
    %v4504 = vpack.c.b16 %v4486, %v4485
    %v4505 = vpack.c.b16 %v4488, %v4487
    %v4506 = vpack.c.b16 %v4490, %v4489
    %4523 = vmatprep.subr.bf16.mxu0 0
    %4524 = vmatpush1.bf16.msra.mxu0 %v4491
    %4525 = vmatprep.subr.bf16.mxu0 0
    %4526 = vmatpush1.bf16.msra.mxu0 %v4492
    %4527 = vmatprep.subr.bf16.mxu0 0
    %4528 = vmatpush1.bf16.msra.mxu0 %v4493
    %4529 = vmatprep.subr.bf16.mxu0 0
    %4530 = vmatpush1.bf16.msra.mxu0 %v4494
    %4531 = vmatprep.subr.bf16.mxu0 0
    %4532 = vmatpush1.bf16.msra.mxu0 %v4495
    %4533 = vmatprep.subr.bf16.mxu0 0
    %4534 = vmatpush1.bf16.msra.mxu0 %v4496
    %4535 = vmatprep.subr.bf16.mxu0 0
    %4536 = vmatpush1.bf16.msra.mxu0 %v4497
    %4537 = vmatprep.subr.bf16.mxu0 0
    %4538 = vmatpush1.bf16.msra.mxu0 %v4498
    %4539 = vmatprep.subr.bf16.mxu0 0
    %4540 = vmatpush1.bf16.msra.mxu0 %v4499
    %4541 = vmatprep.subr.bf16.mxu0 0
    %4542 = vmatpush1.bf16.msra.mxu0 %v4500
    %4543 = vmatprep.subr.bf16.mxu0 0
    %4544 = vmatpush1.bf16.msra.mxu0 %v4501
    %4545 = vmatprep.subr.bf16.mxu0 0
    %4546 = vmatpush1.bf16.msra.mxu0 %v4502
    %4547 = vmatprep.subr.bf16.mxu0 0
    %4548 = vmatpush1.bf16.msra.mxu0 %v4503
    %4549 = vmatprep.subr.bf16.mxu0 0
    %4550 = vmatpush1.bf16.msra.mxu0 %v4504
    %4551 = vmatprep.subr.bf16.mxu0 0
    %4552 = vmatpush1.bf16.msra.mxu0 %v4505
    %4553 = vmatprep.subr.bf16.mxu0 0
    %4554 = vmatpush1.bf16.msra.mxu0 %v4506
    %4555 = vmatprep.mubr.bf16.mxu0 %v4387
    %4556 = vmatmul.mubr.bf16.gmra.mrb[0].mxu0 %v4386
    %v4557 = vpop.f32.mrb[0].mxu0
    %v4558 = vadd.f32 %v4425, %v4557
    %v4559 = vpop.f32.mrb[0].mxu0
    %v4560 = vpop.f32.mrb[0].mxu0
    %v4561 = vpop.f32.mrb[0].mxu0
    %4562 = vdwg.mxu0
    %v4563 = vld [vmem:[%s15] sm:$0xf]
    %v4564 = vld [vmem:[%s15 + $0x4] sm:$0xf]
    %v4565 = vld [vmem:[%s15 + $0x8] sm:$0xf]
    %v4566 = vld [vmem:[%s15 + $0xc] sm:$0xf]
    %v4567 = vld [vmem:[%s15 + $0x10] sm:$0xf]
    %v4568 = vld [vmem:[%s15 + $0x14] sm:$0xf]
    %v4569 = vld [vmem:[%s15 + $0x18] sm:$0xf]
    %v4570 = vld [vmem:[%s15 + $0x1c] sm:$0xf]
    %v4571 = vld [vmem:[%s15 + $0x20] sm:$0xf]
    %v4572 = vld [vmem:[%s15 + $0x24] sm:$0xf]
    %v4573 = vld [vmem:[%s15 + $0x28] sm:$0xf]
    %v4574 = vld [vmem:[%s15 + $0x2c] sm:$0xf]
    %v4575 = vld [vmem:[%s15 + $0x30] sm:$0xf]
    %v4576 = vld [vmem:[%s15 + $0x34] sm:$0xf]
    %v4577 = vld [vmem:[%s15 + $0x38] sm:$0xf]
    %v4578 = vld [vmem:[%s15 + $0x3c] sm:$0xf]
    %v4579 = vld [vmem:[%s15 + $0x40] sm:$0xf]
    %v4580 = vld [vmem:[%s15 + $0x44] sm:$0xf]
    %v4581 = vld [vmem:[%s15 + $0x48] sm:$0xf]
    %v4582 = vld [vmem:[%s15 + $0x4c] sm:$0xf]
    %v4583 = vld [vmem:[%s15 + $0x50] sm:$0xf]
    %v4584 = vld [vmem:[%s15 + $0x54] sm:$0xf]
    %v4585 = vld [vmem:[%s15 + $0x58] sm:$0xf]
    %v4586 = vld [vmem:[%s15 + $0x5c] sm:$0xf]
    %v4587 = vld [vmem:[%s15 + $0x60] sm:$0xf]
    %v4588 = vld [vmem:[%s15 + $0x64] sm:$0xf]
    %v4589 = vld [vmem:[%s15 + $0x68] sm:$0xf]
    %v4590 = vld [vmem:[%s15 + $0x6c] sm:$0xf]
    %v4591 = vld [vmem:[%s15 + $0x70] sm:$0xf]
    %v4592 = vld [vmem:[%s15 + $0x74] sm:$0xf]
    %v4593 = vld [vmem:[%s15 + $0x78] sm:$0xf]
    %v4594 = vld [vmem:[%s15 + $0x7c] sm:$0xf]
    %v4595 = vld [vmem:[#allocation17] sm:$0x1]
    %v4597 = vlaneseq
    %v4598 = vshrl.u32 %v4597, 7
    %v4599 = vsub.s32 0, %v4598
    %v4600 = vrot.slane %v4595, %v4599
    %v4634 = vunpack.c.l.b16 %v4563
    %v4635 = vunpack.c.l.b16 %v4564
    %v4636 = vunpack.c.l.b16 %v4565
    %v4637 = vunpack.c.l.b16 %v4566
    %v4638 = vunpack.c.l.b16 %v4567
    %v4639 = vunpack.c.l.b16 %v4568
    %v4640 = vunpack.c.l.b16 %v4569
    %v4641 = vunpack.c.l.b16 %v4570
    %v4642 = vunpack.c.l.b16 %v4571
    %v4643 = vunpack.c.l.b16 %v4572
    %v4644 = vunpack.c.l.b16 %v4573
    %v4645 = vunpack.c.l.b16 %v4574
    %v4646 = vunpack.c.l.b16 %v4575
    %v4647 = vunpack.c.l.b16 %v4576
    %v4648 = vunpack.c.l.b16 %v4577
    %v4649 = vunpack.c.l.b16 %v4578
    %v4650 = vunpack.c.l.b16 %v4579
    %v4651 = vunpack.c.l.b16 %v4580
    %v4652 = vunpack.c.l.b16 %v4581
    %v4653 = vunpack.c.l.b16 %v4582
    %v4654 = vunpack.c.l.b16 %v4583
    %v4655 = vunpack.c.l.b16 %v4584
    %v4656 = vunpack.c.l.b16 %v4585
    %v4657 = vunpack.c.l.b16 %v4586
    %v4658 = vunpack.c.l.b16 %v4587
    %v4659 = vunpack.c.l.b16 %v4588
    %v4660 = vunpack.c.l.b16 %v4589
    %v4661 = vunpack.c.l.b16 %v4590
    %v4662 = vunpack.c.l.b16 %v4591
    %v4663 = vunpack.c.l.b16 %v4592
    %v4664 = vunpack.c.l.b16 %v4593
    %v4665 = vunpack.c.l.b16 %v4594
    %v4666 = vpack.c.b16 %v4635, %v4634
    %v4667 = vpack.c.b16 %v4637, %v4636
    %v4668 = vpack.c.b16 %v4639, %v4638
    %v4669 = vpack.c.b16 %v4641, %v4640
    %v4670 = vpack.c.b16 %v4643, %v4642
    %v4671 = vpack.c.b16 %v4645, %v4644
    %v4672 = vpack.c.b16 %v4647, %v4646
    %v4673 = vpack.c.b16 %v4649, %v4648
    %v4674 = vpack.c.b16 %v4651, %v4650
    %v4675 = vpack.c.b16 %v4653, %v4652
    %v4676 = vpack.c.b16 %v4655, %v4654
    %v4677 = vpack.c.b16 %v4657, %v4656
    %v4678 = vpack.c.b16 %v4659, %v4658
    %v4679 = vpack.c.b16 %v4661, %v4660
    %v4680 = vpack.c.b16 %v4663, %v4662
    %v4681 = vpack.c.b16 %v4665, %v4664
    %4698 = vmatprep.subr.bf16.mxu0 0
    %4699 = vmatpush1.bf16.msra.mxu0 %v4666
    %4700 = vmatprep.subr.bf16.mxu0 0
    %4701 = vmatpush1.bf16.msra.mxu0 %v4667
    %4702 = vmatprep.subr.bf16.mxu0 0
    %4703 = vmatpush1.bf16.msra.mxu0 %v4668
    %4704 = vmatprep.subr.bf16.mxu0 0
    %4705 = vmatpush1.bf16.msra.mxu0 %v4669
    %4706 = vmatprep.subr.bf16.mxu0 0
    %4707 = vmatpush1.bf16.msra.mxu0 %v4670
    %4708 = vmatprep.subr.bf16.mxu0 0
    %4709 = vmatpush1.bf16.msra.mxu0 %v4671
    %4710 = vmatprep.subr.bf16.mxu0 0
    %4711 = vmatpush1.bf16.msra.mxu0 %v4672
    %4712 = vmatprep.subr.bf16.mxu0 0
    %4713 = vmatpush1.bf16.msra.mxu0 %v4673
    %4714 = vmatprep.subr.bf16.mxu0 0
    %4715 = vmatpush1.bf16.msra.mxu0 %v4674
    %4716 = vmatprep.subr.bf16.mxu0 0
    %4717 = vmatpush1.bf16.msra.mxu0 %v4675
    %4718 = vmatprep.subr.bf16.mxu0 0
    %4719 = vmatpush1.bf16.msra.mxu0 %v4676
    %4720 = vmatprep.subr.bf16.mxu0 0
    %4721 = vmatpush1.bf16.msra.mxu0 %v4677
    %4722 = vmatprep.subr.bf16.mxu0 0
    %4723 = vmatpush1.bf16.msra.mxu0 %v4678
    %4724 = vmatprep.subr.bf16.mxu0 0
    %4725 = vmatpush1.bf16.msra.mxu0 %v4679
    %4726 = vmatprep.subr.bf16.mxu0 0
    %4727 = vmatpush1.bf16.msra.mxu0 %v4680
    %4728 = vmatprep.subr.bf16.mxu0 0
    %4729 = vmatpush1.bf16.msra.mxu0 %v4681
    %4730 = vmatprep.mubr.bf16.mxu0 %v4387
    %4731 = vmatmul.mubr.bf16.gmra.mrb[0].mxu0 %v4386
    %v4732 = vpop.f32.mrb[0].mxu0
    %v4733 = vadd.f32 %v4600, %v4732
    %v4734 = vpop.f32.mrb[0].mxu0
    %v4735 = vpop.f32.mrb[0].mxu0
    %v4736 = vpop.f32.mrb[0].mxu0
    %4737 = vdwg.mxu0
    %v4738 = vmul.f32 %v4733, 0.5
    %v4739 = vmul.f32 %v4738, 1.442695
    %v4740 = vpow.pop %v4739
    %vm4741 = vcmask 58368
    %4742 = vst.msk [vmem:[%s18] sm:$0x3] %vm4741, %v4558
    %4743 = vst.msk [vmem:[#allocation19] sm:$0x3] %vm4741, %v4733
    %4744 = vst.msk [vmem:[#allocation20] sm:$0x3] %vm4741, %v4740
    %v4745 = vld [vmem:[%s17] sm:$0x3]
    %v4746 = vld [vmem:[%s17 + $0x2] sm:$0x3]
    %v4747 = vld [vmem:[%s17 + $0x4] sm:$0x3]
    %v4748 = vld [vmem:[%s17 + $0x6] sm:$0x3]
    %v4749 = vld [vmem:[%s17 + $0x8] sm:$0x3]
    %v4750 = vld [vmem:[%s17 + $0xa] sm:$0x3]
    %v4751 = vld [vmem:[%s17 + $0xc] sm:$0x3]
    %v4752 = vld [vmem:[%s17 + $0xe] sm:$0x3]
    %v4753 = vld [vmem:[%s17 + $0x10] sm:$0x3]
    %v4754 = vld [vmem:[%s17 + $0x12] sm:$0x3]
    %v4755 = vld [vmem:[%s17 + $0x14] sm:$0x3]
    %v4756 = vld [vmem:[%s17 + $0x16] sm:$0x3]
    %v4757 = vld [vmem:[%s17 + $0x18] sm:$0x3]
    %v4758 = vld [vmem:[%s17 + $0x1a] sm:$0x3]
    %v4759 = vld [vmem:[%s17 + $0x1c] sm:$0x3]
    %v4760 = vld [vmem:[%s17 + $0x1e] sm:$0x3]
    %v4761 = vld [vmem:[%s17 + $0x20] sm:$0x3]
    %v4762 = vld [vmem:[%s17 + $0x22] sm:$0x3]
    %v4763 = vld [vmem:[%s17 + $0x24] sm:$0x3]
    %v4764 = vld [vmem:[%s17 + $0x26] sm:$0x3]
    %v4765 = vmul.f32 %v4740, %v4745
    %v4766 = vmul.f32 %v4740, %v4746
    %v4767 = vmul.f32 %v4740, %v4747
    %v4768 = vmul.f32 %v4740, %v4748
    %v4769 = vmul.f32 %v4740, %v4749
    %v4770 = vmul.f32 %v4740, %v4750
    %v4771 = vmul.f32 %v4740, %v4751
    %v4772 = vmul.f32 %v4740, %v4752
    %v4773 = vmul.f32 %v4740, %v4753
    %v4774 = vmul.f32 %v4740, %v4754
    %v4775 = vmul.f32 %v4740, %v4755
    %v4776 = vmul.f32 %v4740, %v4756
    %v4777 = vmul.f32 %v4740, %v4757
    %v4778 = vmul.f32 %v4740, %v4758
    %v4779 = vmul.f32 %v4740, %v4759
    %v4780 = vmul.f32 %v4740, %v4760
    %v4781 = vmul.f32 %v4740, %v4761
    %v4782 = vmul.f32 %v4740, %v4762
    %v4783 = vmul.f32 %v4740, %v4763
    %v4784 = vmul.f32 %v4740, %v4764
    %v4785 = vadd.f32 %v4558, %v4765
    %v4786 = vadd.f32 %v4558, %v4766
    %v4787 = vadd.f32 %v4558, %v4767
    %v4788 = vadd.f32 %v4558, %v4768
    %v4789 = vadd.f32 %v4558, %v4769
    %v4790 = vadd.f32 %v4558, %v4770
    %v4791 = vadd.f32 %v4558, %v4771
    %v4792 = vadd.f32 %v4558, %v4772
    %v4793 = vadd.f32 %v4558, %v4773
    %v4794 = vadd.f32 %v4558, %v4774
    %v4795 = vadd.f32 %v4558, %v4775
    %v4796 = vadd.f32 %v4558, %v4776
    %v4797 = vadd.f32 %v4558, %v4777
    %v4798 = vadd.f32 %v4558, %v4778
    %v4799 = vadd.f32 %v4558, %v4779
    %v4800 = vadd.f32 %v4558, %v4780
    %v4801 = vadd.f32 %v4558, %v4781
    %v4802 = vadd.f32 %v4558, %v4782
    %v4803 = vadd.f32 %v4558, %v4783
    %v4804 = vadd.f32 %v4558, %v4784
    %4805 = vst.msk [vmem:[%s20] sm:$0x3] %vm4741, %v4785
    %4806 = vst.msk [vmem:[%s20 + $0x2] sm:$0x3] %vm4741, %v4786
    %4807 = vst.msk [vmem:[%s20 + $0x4] sm:$0x3] %vm4741, %v4787
    %4808 = vst.msk [vmem:[%s20 + $0x6] sm:$0x3] %vm4741, %v4788
    %4809 = vst.msk [vmem:[%s20 + $0x8] sm:$0x3] %vm4741, %v4789
    %4810 = vst.msk [vmem:[%s20 + $0xa] sm:$0x3] %vm4741, %v4790
    %4811 = vst.msk [vmem:[%s20 + $0xc] sm:$0x3] %vm4741, %v4791
    %4812 = vst.msk [vmem:[%s20 + $0xe] sm:$0x3] %vm4741, %v4792
    %4813 = vst.msk [vmem:[%s20 + $0x10] sm:$0x3] %vm4741, %v4793
    %4814 = vst.msk [vmem:[%s20 + $0x12] sm:$0x3] %vm4741, %v4794
    %4815 = vst.msk [vmem:[%s20 + $0x14] sm:$0x3] %vm4741, %v4795
    %4816 = vst.msk [vmem:[%s20 + $0x16] sm:$0x3] %vm4741, %v4796
    %4817 = vst.msk [vmem:[%s20 + $0x18] sm:$0x3] %vm4741, %v4797
    %4818 = vst.msk [vmem:[%s20 + $0x1a] sm:$0x3] %vm4741, %v4798
    %4819 = vst.msk [vmem:[%s20 + $0x1c] sm:$0x3] %vm4741, %v4799
    %4820 = vst.msk [vmem:[%s20 + $0x1e] sm:$0x3] %vm4741, %v4800
    %4821 = vst.msk [vmem:[%s20 + $0x20] sm:$0x3] %vm4741, %v4801
    %4822 = vst.msk [vmem:[%s20 + $0x22] sm:$0x3] %vm4741, %v4802
    %4823 = vst.msk [vmem:[%s20 + $0x24] sm:$0x3] %vm4741, %v4803
    %4824 = vst.msk [vmem:[%s20 + $0x26] sm:$0x3] %vm4741, %v4804
    // Predicated region
    $region114: #{encoder_forward.1} parent=1 // pred_check
      _
    $region115: #{encoder_forward.1} parent=1 // pred_check_branch
      %4826 = sbr.rel (0) target = $region117
    $region116: #{encoder_forward.1} parent=1 // pred_region
      _
    $region117: #{encoder_forward.1} parent=1 // pred_fallthru
      _
    // Predicated region
    $region118: #{encoder_forward.1} parent=1 // pred_check
      _
    $region119: #{encoder_forward.1} parent=1 // pred_check_branch
      %4828 = sbr.rel (0) target = $region121
    $region120: #{encoder_forward.1} parent=1 // pred_region
      %s4830 = ssub.s32 32, 32
      %4831 = vsyncadd [#allocation4], %s4830
      %s4833 = sshll.u32 [#allocation19], 4
      %s4834 = int_to_ptr.vmem [resolvable:$true] %s4833
      %4836 = dma.vmem_to_hbm [thread:$0]  %s4834, 32, %s19, [#allocation4]
    $region121: #{encoder_forward.1} parent=1 // pred_fallthru
      _
    // Predicated region
    $region122: #{encoder_forward.1} parent=1 // pred_check
      _
    $region123: #{encoder_forward.1} parent=1 // pred_check_branch
      %4838 = sbr.rel (0) target = $region125
    $region124: #{encoder_forward.1} parent=1 // pred_region
      _
    $region125: #{encoder_forward.1} parent=1 // pred_fallthru
      _
    // Predicated region
    $region126: #{encoder_forward.1} parent=1 // pred_check
      _
    $region127: #{encoder_forward.1} parent=1 // pred_check_branch
      %4840 = sbr.rel (0) target = $region129
    $region128: #{encoder_forward.1} parent=1 // pred_region
      %s4842 = ssub.s32 32, 32
      %4843 = vsyncadd [#allocation21], %s4842
      %s4845 = sshll.u32 [#allocation20], 4
      %s4846 = int_to_ptr.vmem [resolvable:$true] %s4845
      %4848 = dma.vmem_to_hbm [thread:$0]  %s4846, 32, %s21, [#allocation21]
    $region129: #{encoder_forward.1} parent=1 // pred_fallthru
      _
    // Predicated region
    $region130: #{encoder_forward.1} parent=1 // pred_check
      _
    $region131: #{encoder_forward.1} parent=1 // pred_check_branch
      %4850 = sbr.rel (0) target = $region133
    $region132: #{encoder_forward.1} parent=1 // pred_region
      _
    $region133: #{encoder_forward.1} parent=1 // pred_fallthru
      _
    // Predicated region
    $region134: #{encoder_forward.1} parent=1 // pred_check
      _
    $region135: #{encoder_forward.1} parent=1 // pred_check_branch
      %4852 = sbr.rel (0) target = $region137
    $region136: #{encoder_forward.1} parent=1 // pred_region
      %4853 = dma.done [#allocation4], 32
    $region137: #{encoder_forward.1} parent=1 // pred_fallthru
      _
    // Predicated region
    $region138: #{encoder_forward.1} parent=1 // pred_check
      _
    $region139: #{encoder_forward.1} parent=1 // pred_check_branch
      %4855 = sbr.rel (0) target = $region141
    $region140: #{encoder_forward.1} parent=1 // pred_region
      _
    $region141: #{encoder_forward.1} parent=1 // pred_fallthru
      _
    // Predicated region
    $region142: #{encoder_forward.1} parent=1 // pred_check
      _
    $region143: #{encoder_forward.1} parent=1 // pred_check_branch
      %4857 = sbr.rel (0) target = $region145
    $region144: #{encoder_forward.1} parent=1 // pred_region
      %4858 = dma.done [#allocation21], 32
    $region145: #{encoder_forward.1} parent=1 // pred_fallthru
      _
    %4859 = vsyncpa [#allocation3], 1
    %4860 = vsyncpa [#allocation6], 1
    %4861 = vsyncpa [#allocation9], 1
    %4862 = vsyncpa [#allocation12], 1
    %4863 = vsyncpa [#allocation15], 1
    %4864 = vsyncpa [#allocation18], 1
    %4865 = vsyncpa [#allocation4], 1
    %4866 = vsyncpa [#allocation21], 1

</llo_original>
